<compile_context>
chip_gen: v7x
topology: tpu7x:2x2x1
jax: 0.10.0
libtpu: 0.0.40
codegen_flags: <defaults>
</compile_context>

<pallas_src>
import jax
import jax.numpy as jnp
from jax import lax
from jax.experimental import pallas as pl
from jax.experimental.pallas import tpu as pltpu

EPS = 1e-5          # PyTorch BatchNorm1d default eps
NEG_SLOPE = 0.01    # F.leaky_relu default negative_slope
IN_FEAT = 2 * 16    # 32
FC1_OUT = 1000
CONV_K = 101
CONV_OUT = FC1_OUT - CONV_K + 1   # 900 (valid conv)
OUT_FEAT = 16

HID_PAD = 1024      # lane-dense padding of the 1000-wide hidden dim
CONV_PAD = 1024     # lane-dense padding of the 900-wide conv-output dim


def _leaky_relu(x):
    return jnp.where(x > 0, x, NEG_SLOPE * x)


def _round_up(n, m):
    return ((n + m - 1) // m) * m


# ---------------------------------------------------------------------------
# Kernel: three MXU matmuls + two leaky_relus per batch tile.
# ---------------------------------------------------------------------------
def rppg_kernel(x_ref, w1_ref, b1_ref, t_ref, cb_ref, w2_ref, b2_ref, o_ref):
    # fc1 with BN1 folded in: (TB, 32) @ (32, 1024)
    h = jnp.dot(x_ref[...], w1_ref[...],
                preferred_element_type=jnp.float32) + b1_ref[...]
    h = _leaky_relu(h)                                  # (TB, 1024)

    # Conv1d(1,1,101) with BN2 folded in, as a banded-Toeplitz MXU matmul:
    # (TB, 1024) @ (1024, 1024)
    c = jnp.dot(h, t_ref[...],
                preferred_element_type=jnp.float32) + cb_ref[...]
    c = _leaky_relu(c)                                  # (TB, 1024)

    # fc2: (TB, 1024) @ (1024, 16)  (padded rows of w2 are zero)
    o_ref[...] = jnp.dot(c, w2_ref[...],
                         preferred_element_type=jnp.float32) + b2_ref[...]


# ---------------------------------------------------------------------------
# Host-side constant folding of BN1 / BN2 and Toeplitz construction.
# (In production this would be done once and cached.)
# ---------------------------------------------------------------------------
def fold_params(p):
    hp = jax.lax.Precision.HIGHEST

    # BN1 folded into fc1:  (x*s1 + shift1) @ W1 + b = x @ (s1*W1) + (shift1@W1 + b)
    s1 = p["bn1_g"][0] * lax.rsqrt(p["bn1_v"][0] + EPS)          # (32,)
    shift1 = p["bn1_b"][0] - p["bn1_m"][0] * s1                  # (32,)
    w1 = s1[:, None] * p["fc1_w"]                                # (32, 1000)
    b1 = jnp.dot(shift1, p["fc1_w"], precision=hp) + p["fc1_b"][0]   # (1000,)

    # BN2 folded into the conv Toeplitz matrix.
    s2 = p["bn2_g"][0] * lax.rsqrt(p["bn2_v"][0] + EPS)          # (1000,)
    shift2 = p["bn2_b"][0] - p["bn2_m"][0] * s2                  # (1000,)
    w = p["conv_w"][0]                                           # (101,)
    i = jnp.arange(FC1_OUT)[:, None]                             # (1000, 1)
    j = jnp.arange(CONV_OUT)[None, :]                            # (1, 900)
    d = i - j
    valid = (d >= 0) & (d < CONV_K)
    t_raw = jnp.where(valid, w[jnp.clip(d, 0, CONV_K - 1)], 0.0)  # (1000, 900)
    t = t_raw * s2[:, None]                                       # BN2 scale folded
    cb = jnp.dot(shift2, t_raw, precision=hp) + p["conv_b"][0, 0]  # (900,)

    def pad2(a, rows, cols):
        out = jnp.zeros((rows, cols), jnp.float32)
        return out.at[:a.shape[0], :a.shape[1]].set(a.astype(jnp.float32))

    return {
        "w1": pad2(w1, IN_FEAT, HID_PAD),          # (32, 1024)
        "b1": pad2(b1[None, :], 1, HID_PAD),       # (1, 1024)
        "t":  pad2(t, HID_PAD, CONV_PAD),          # (1024, 1024)
        "cb": pad2(cb[None, :], 1, CONV_PAD),      # (1, 1024)
        "w2": pad2(p["fc2_w"], CONV_PAD, OUT_FEAT),  # (1024, 16)
        "b2": p["fc2_b"].astype(jnp.float32),      # (1, 16)
    }


# ---------------------------------------------------------------------------
# Wrapper: batch-tiled pallas_call.
# ---------------------------------------------------------------------------
def rppg_psd_mlp(x, p, *, block_b=512):
    """x: (..., 2, 16) float32  ->  (B, 16) where B = prod(leading dims)."""
    # drop1: nn.Dropout(0.1) -> identity in eval mode
    # TODO(synk): training-mode dropout / batch-statistics BN not implemented
    #             (inference semantics only).
    xf = x.reshape(-1, IN_FEAT).astype(jnp.float32)
    B = xf.shape[0]
    fp = fold_params(p)

    # Batch tile: multiple of 8 sublanes, capped so per-tile activations stay
    # well inside scoped VMEM on all generations (incl. v7x's 64 MiB physical).
    tb = min(block_b, _round_up(B, 8))
    bp = _round_up(B, tb)
    if bp != B:
        xf = jnp.zeros((bp, IN_FEAT), jnp.float32).at[:B].set(xf)

    def resident(shape):
        return pl.BlockSpec(shape, lambda i: (0, 0))

    out = pl.pallas_call(
        rppg_kernel,
        out_shape=jax.ShapeDtypeStruct((bp, OUT_FEAT), jnp.float32),
        grid=(bp // tb,),
        in_specs=[
            pl.BlockSpec((tb, IN_FEAT), lambda i: (i, 0)),   # x tile
            resident((IN_FEAT, HID_PAD)),                    # fc1 (BN1 folded)
            resident((1, HID_PAD)),                          # fc1 bias
            resident((HID_PAD, CONV_PAD)),                   # Toeplitz (BN2 folded)
            resident((1, CONV_PAD)),                         # conv bias (folded)
            resident((CONV_PAD, OUT_FEAT)),                  # fc2
            resident((1, OUT_FEAT)),                         # fc2 bias
        ],
        out_specs=pl.BlockSpec((tb, OUT_FEAT), lambda i: (i, 0)),
        compiler_params=pltpu.CompilerParams(
            dimension_semantics=("parallel",),
            vmem_limit_bytes=48 * 1024 * 1024,
        ),
    )(xf, fp["w1"], fp["b1"], fp["t"], fp["cb"], fp["w2"], fp["b2"])
    return out[:B]


# ---------------------------------------------------------------------------
# Parameter construction + pure-JAX reference (unfolded, eval-mode semantics).
# ---------------------------------------------------------------------------
def make_params(key):
    ks = jax.random.split(key, 16)
    f32 = jnp.float32

    def u(k, shape, lo, hi):
        return jax.random.uniform(k, shape, f32, lo, hi)

    def n(k, shape, scale):
        return (jax.random.normal(k, shape) * scale).astype(f32)

    return {
        # BatchNorm1d(32): gamma, beta, running_mean, running_var
        "bn1_g": u(ks[0], (1, IN_FEAT), 0.5, 1.5),
        "bn1_b": n(ks[1], (1, IN_FEAT), 0.1),
        "bn1_m": n(ks[2], (1, IN_FEAT), 0.1),
        "bn1_v": u(ks[3], (1, IN_FEAT), 0.5, 1.5),
        # Linear(32, 1000): stored transposed (in, out)
        "fc1_w": n(ks[4], (IN_FEAT, FC1_OUT), 1.0 / jnp.sqrt(IN_FEAT)),
        "fc1_b": n(ks[5], (1, FC1_OUT), 0.05),
        # BatchNorm1d(1000)
        "bn2_g": u(ks[6], (1, FC1_OUT), 0.5, 1.5),
        "bn2_b": n(ks[7], (1, FC1_OUT), 0.1),
        "bn2_m": n(ks[8], (1, FC1_OUT), 0.1),
        "bn2_v": u(ks[9], (1, FC1_OUT), 0.5, 1.5),
        # Conv1d(1, 1, 101): weight (out_c*in_c, k) = (1, 101), bias (1, 1)
        "conv_w": n(ks[10], (1, CONV_K), 1.0 / jnp.sqrt(CONV_K)),
        "conv_b": n(ks[11], (1, 1), 0.05),
        # Linear(900, 16): stored transposed (in, out)
        "fc2_w": n(ks[12], (CONV_OUT, OUT_FEAT), 1.0 / jnp.sqrt(CONV_OUT)),
        "fc2_b": n(ks[13], (1, OUT_FEAT), 0.05),
    }


def reference(x, p):
    """Pure-JAX reference of the same (eval-mode) forward pass, no folding."""
    xf = x.reshape(-1, IN_FEAT).astype(jnp.float32)
    s1 = p["bn1_g"][0] * lax.rsqrt(p["bn1_v"][0] + EPS)
    h = (xf - p["bn1_m"][0]) * s1 + p["bn1_b"][0]
    h = h @ p["fc1_w"] + p["fc1_b"][0]
    h = jnp.where(h > 0, h, NEG_SLOPE * h)
    s2 = p["bn2_g"][0] * lax.rsqrt(p["bn2_v"][0] + EPS)
    h = (h - p["bn2_m"][0]) * s2 + p["bn2_b"][0]
    # NCW conv, OIW weights, valid padding (cross-correlation, like PyTorch)
    hc = lax.conv_general_dilated(h[:, None, :], p["conv_w"][None, :, :],
                                  window_strides=(1,), padding="VALID")[:, 0, :]
    hc = hc + p["conv_b"][0, 0]
    hc = jnp.where(hc > 0, hc, NEG_SLOPE * hc)
    return hc @ p["fc2_w"] + p["fc2_b"][0]


if __name__ == "__main__":
    key = jax.random.PRNGKey(0)
    k_x, k_p = jax.random.split(key)

    # Input consistent with x.view(-1, 2*16): (batch=2, 2, 16)
    x = jax.random.normal(k_x, (2, 2, 16), dtype=jnp.float32)
    params = make_params(k_p)

    out = rppg_psd_mlp(x, params)
    out = jax.block_until_ready(out)

    ref = reference(x, params)
    assert out.shape == (2, OUT_FEAT), out.shape
    max_err = float(jnp.max(jnp.abs(out - ref)))
    assert jnp.allclose(out, ref, rtol=1e-4, atol=1e-4), max_err

    print("KERNEL_OK")
</pallas_src>

<mosaic_0001>
module attributes {stable_mosaic.version = 11 : i64} {
  func.func @rppg_kernel(%arg0: i32, %arg1: memref<8x32xf32, #tpu.memory_space<vmem>>, %arg2: memref<32x1024xf32, #tpu.memory_space<vmem>>, %arg3: memref<1x1024xf32, #tpu.memory_space<vmem>>, %arg4: memref<1024x1024xf32, #tpu.memory_space<vmem>>, %arg5: memref<1x1024xf32, #tpu.memory_space<vmem>>, %arg6: memref<1024x16xf32, #tpu.memory_space<vmem>>, %arg7: memref<1x16xf32, #tpu.memory_space<vmem>>, %arg8: memref<8x16xf32, #tpu.memory_space<vmem>>) attributes {dimension_semantics = [#tpu.dimension_semantics<parallel>], iteration_bounds = array<i64: 1>, scalar_prefetch = 0 : i64, scratch_operands = 0 : i64, tpu.core_type = #tpu.core_type<tc>, window_params = [{transform_indices = @transform_0, window_bounds = array<i64: 8, 32>}, {pipeline_mode = #tpu.pipeline_mode<synchronous>, transform_indices = @transform_1, window_bounds = array<i64: 32, 1024>}, {pipeline_mode = #tpu.pipeline_mode<synchronous>, transform_indices = @transform_2, window_bounds = array<i64: 1, 1024>}, {pipeline_mode = #tpu.pipeline_mode<synchronous>, transform_indices = @transform_3, window_bounds = array<i64: 1024, 1024>}, {pipeline_mode = #tpu.pipeline_mode<synchronous>, transform_indices = @transform_4, window_bounds = array<i64: 1, 1024>}, {pipeline_mode = #tpu.pipeline_mode<synchronous>, transform_indices = @transform_5, window_bounds = array<i64: 1024, 16>}, {pipeline_mode = #tpu.pipeline_mode<synchronous>, transform_indices = @transform_6, window_bounds = array<i64: 1, 16>}, {transform_indices = @transform_7, window_bounds = array<i64: 8, 16>}]} {
    %c0 = arith.constant 0 : index
    %c0_0 = arith.constant 0 : index
    %0 = vector.load %arg1[%c0, %c0_0] : memref<8x32xf32, #tpu.memory_space<vmem>>, vector<8x32xf32>
    %c0_1 = arith.constant 0 : index
    %c0_2 = arith.constant 0 : index
    %1 = vector.load %arg2[%c0_1, %c0_2] : memref<32x1024xf32, #tpu.memory_space<vmem>>, vector<32x1024xf32>
    %cst = arith.constant dense<0.000000e+00> : vector<8x1024xf32>
    %2 = tpu.matmul %0, %1, %cst {dimension_numbers = #tpu.dot_dimension_numbers<[1], [0], [0], [1], [0, 0, 1, 1], [], []>} : vector<8x32xf32>, vector<32x1024xf32>, vector<8x1024xf32> -> vector<8x1024xf32>
    %c0_3 = arith.constant 0 : index
    %c0_4 = arith.constant 0 : index
    %3 = vector.load %arg3[%c0_3, %c0_4] : memref<1x1024xf32, #tpu.memory_space<vmem>>, vector<1x1024xf32>
    %4 = vector.broadcast %3 : vector<1x1024xf32> to vector<8x1024xf32>
    %5 = arith.addf %2, %4 : vector<8x1024xf32>
    %cst_5 = arith.constant 0.000000e+00 : f32
    %6 = vector.broadcast %cst_5 : f32 to vector<8x1024xf32>
    %7 = arith.cmpf ogt, %5, %6 : vector<8x1024xf32>
    %cst_6 = arith.constant 0.00999999977 : f32
    %8 = vector.broadcast %cst_6 : f32 to vector<8x1024xf32>
    %9 = arith.mulf %8, %5 : vector<8x1024xf32>
    %10 = arith.select %7, %5, %9 : vector<8x1024xi1>, vector<8x1024xf32>
    %c0_7 = arith.constant 0 : index
    %c0_8 = arith.constant 0 : index
    %11 = vector.load %arg4[%c0_7, %c0_8] : memref<1024x1024xf32, #tpu.memory_space<vmem>>, vector<1024x1024xf32>
    %cst_9 = arith.constant dense<0.000000e+00> : vector<8x1024xf32>
    %12 = tpu.matmul %10, %11, %cst_9 {dimension_numbers = #tpu.dot_dimension_numbers<[1], [0], [0], [1], [0, 0, 1, 1], [], []>} : vector<8x1024xf32>, vector<1024x1024xf32>, vector<8x1024xf32> -> vector<8x1024xf32>
    %c0_10 = arith.constant 0 : index
    %c0_11 = arith.constant 0 : index
    %13 = vector.load %arg5[%c0_10, %c0_11] : memref<1x1024xf32, #tpu.memory_space<vmem>>, vector<1x1024xf32>
    %14 = vector.broadcast %13 : vector<1x1024xf32> to vector<8x1024xf32>
    %15 = arith.addf %12, %14 : vector<8x1024xf32>
    %cst_12 = arith.constant 0.000000e+00 : f32
    %16 = vector.broadcast %cst_12 : f32 to vector<8x1024xf32>
    %17 = arith.cmpf ogt, %15, %16 : vector<8x1024xf32>
    %cst_13 = arith.constant 0.00999999977 : f32
    %18 = vector.broadcast %cst_13 : f32 to vector<8x1024xf32>
    %19 = arith.mulf %18, %15 : vector<8x1024xf32>
    %20 = arith.select %17, %15, %19 : vector<8x1024xi1>, vector<8x1024xf32>
    %c0_14 = arith.constant 0 : index
    %c0_15 = arith.constant 0 : index
    %21 = vector.load %arg6[%c0_14, %c0_15] : memref<1024x16xf32, #tpu.memory_space<vmem>>, vector<1024x16xf32>
    %cst_16 = arith.constant dense<0.000000e+00> : vector<8x16xf32>
    %22 = tpu.matmul %20, %21, %cst_16 {dimension_numbers = #tpu.dot_dimension_numbers<[1], [0], [0], [1], [0, 0, 1, 1], [], []>} : vector<8x1024xf32>, vector<1024x16xf32>, vector<8x16xf32> -> vector<8x16xf32>
    %c0_17 = arith.constant 0 : index
    %c0_18 = arith.constant 0 : index
    %23 = vector.load %arg7[%c0_17, %c0_18] : memref<1x16xf32, #tpu.memory_space<vmem>>, vector<1x16xf32>
    %24 = vector.broadcast %23 : vector<1x16xf32> to vector<8x16xf32>
    %25 = arith.addf %22, %24 : vector<8x16xf32>
    %c0_19 = arith.constant 0 : index
    %c0_20 = arith.constant 0 : index
    %26 = vector.load %arg8[%c0_19, %c0_20] : memref<8x16xf32, #tpu.memory_space<vmem>>, vector<8x16xf32>
    tpu.vector_store %arg8[%c0_19, %c0_20], %25 {strides = array<i32>} : memref<8x16xf32, #tpu.memory_space<vmem>>, vector<8x16xf32>,
    return
  }
  func.func @transform_0(%arg0: i32) -> (i32, i32) {
    %c0_i32 = arith.constant 0 : i32
    %c0_i32_0 = arith.constant 0 : i32
    return %arg0, %c0_i32 : i32, i32
  }
  func.func @transform_1(%arg0: i32) -> (i32, i32) {
    %c0_i32 = arith.constant 0 : i32
    %c0_i32_0 = arith.constant 0 : i32
    %c0_i32_1 = arith.constant 0 : i32
    return %c0_i32, %c0_i32_0 : i32, i32
  }
  func.func @transform_2(%arg0: i32) -> (i32, i32) {
    %c0_i32 = arith.constant 0 : i32
    %c0_i32_0 = arith.constant 0 : i32
    %c0_i32_1 = arith.constant 0 : i32
    return %c0_i32, %c0_i32_0 : i32, i32
  }
  func.func @transform_3(%arg0: i32) -> (i32, i32) {
    %c0_i32 = arith.constant 0 : i32
    %c0_i32_0 = arith.constant 0 : i32
    %c0_i32_1 = arith.constant 0 : i32
    return %c0_i32, %c0_i32_0 : i32, i32
  }
  func.func @transform_4(%arg0: i32) -> (i32, i32) {
    %c0_i32 = arith.constant 0 : i32
    %c0_i32_0 = arith.constant 0 : i32
    %c0_i32_1 = arith.constant 0 : i32
    return %c0_i32, %c0_i32_0 : i32, i32
  }
  func.func @transform_5(%arg0: i32) -> (i32, i32) {
    %c0_i32 = arith.constant 0 : i32
    %c0_i32_0 = arith.constant 0 : i32
    %c0_i32_1 = arith.constant 0 : i32
    return %c0_i32, %c0_i32_0 : i32, i32
  }
  func.func @transform_6(%arg0: i32) -> (i32, i32) {
    %c0_i32 = arith.constant 0 : i32
    %c0_i32_0 = arith.constant 0 : i32
    %c0_i32_1 = arith.constant 0 : i32
    return %c0_i32, %c0_i32_0 : i32, i32
  }
  func.func @transform_7(%arg0: i32) -> (i32, i32) {
    %c0_i32 = arith.constant 0 : i32
    %c0_i32_0 = arith.constant 0 : i32
    return %arg0, %c0_i32 : i32, i32
  }
}

</mosaic_0001>

<llo_original>
// kernel: tpu_custom_call.1
$region0: #{tpu_custom_call.1}
  #allocation0 [shape = 'u32[]', space=smem, size = 0x4, offset = 0x4, fixed_abs, tag = 'smem constant byte address 0x4 - core index']
  #allocation1 [shape = 'u32[144,128]{1,0:T(1,128)}', space=vmem, size = 0x12000, scoped, tag = 'internal scratch']
  %s0 = inlined_call_operand.hbm [shape: f32[8,32], index: 0, kind: input, shape index: {}]
  %s1 = inlined_call_operand.hbm [shape: f32[32,1024], index: 1, kind: input, shape index: {}]
  %s2 = inlined_call_operand.hbm [shape: f32[1,1024], index: 2, kind: input, shape index: {}]
  %s3 = inlined_call_operand.hbm [shape: f32[1024,1024], index: 3, kind: input, shape index: {}]
  %s4 = inlined_call_operand.hbm [shape: f32[1,1024], index: 4, kind: input, shape index: {}]
  %s5 = inlined_call_operand.vmem [shape: f32[1024,16], index: 5, kind: input, shape index: {}]
  %s6 = inlined_call_operand.hbm [shape: f32[1,16], index: 6, kind: input, shape index: {}]
  %s7 = inlined_call_operand.hbm [shape: f32[8,16], index: 7, kind: output, shape index: {}]
  %s8 = sld [smem:[#allocation0]]
  $region62: #{tpu_custom_call.1} parent=0
    _
  %s10 = ssub.s32 1, %s8
  %s11 = scalar_select 0, %s10, %s8
  $region1: #{tpu_custom_call.1} parent=0
    #allocation2 [shape = 'u8[4096]{0}', space=vmem, size = 0x1000, scoped, tag = 'input window, operand 0, single buffered']
    #allocation3 [shape = 's32[1]{0}', space=sflag, size = 0x4, scoped, tag = 'scoped memory for tpu_custom_call.1']
    #allocation4 [shape = 's32[1]{0}', space=sflag, size = 0x4, scoped, tag = 'scoped memory for tpu_custom_call.1']
    #allocation5 [shape = 'u8[131072]{0}', space=vmem, size = 0x20000, scoped, tag = 'input window, operand 1, single buffered']
    #allocation6 [shape = 's32[1]{0}', space=sflag, size = 0x4, scoped, tag = 'scoped memory for tpu_custom_call.1']
    #allocation7 [shape = 'u8[4096]{0}', space=vmem, size = 0x1000, scoped, tag = 'input window, operand 2, single buffered']
    #allocation8 [shape = 'u8[4194304]{0}', space=vmem, size = 0x400000, scoped, tag = 'input window, operand 3, single buffered']
    #allocation9 [shape = 's32[1]{0}', space=sflag, size = 0x4, scoped, tag = 'scoped memory for tpu_custom_call.1']
    #allocation10 [shape = 'u8[4096]{0}', space=vmem, size = 0x1000, scoped, tag = 'input window, operand 4, single buffered']
    #allocation11 [shape = 'u8[512]{0}', space=vmem, size = 0x400, scoped, tag = 'input window, operand 6, single buffered']
    #allocation12 [shape = 's32[1]{0}', space=sflag, size = 0x4, scoped, tag = 'scoped memory for tpu_custom_call.1']
    #allocation13 [shape = 'u8[4096]{0}', space=vmem, size = 0x1000, scoped, tag = 'output window, operand 0, single buffered']
    %12 = vsyncpa [#allocation3], 0
    %13 = vsyncpa [#allocation6], 0
    %14 = vsyncpa [#allocation9], 0
    %15 = vsyncpa [#allocation12], 0
    %16 = vsyncpa [#allocation4], 0
    // Predicated region
    $region2: #{tpu_custom_call.1} parent=1 // pred_check
      _
    $region3: #{tpu_custom_call.1} parent=1 // pred_check_branch
      %18 = sbr.rel (0) target = $region5
    $region4: #{tpu_custom_call.1} parent=1 // pred_region
      %s20 = ssub.s32 128, 128
      %21 = vsyncadd [#allocation3], %s20
      %s23 = sshll.u32 [#allocation2], 4
      %s24 = int_to_ptr.vmem [resolvable:$true] %s23
      %26 = dma.hbm_to_vmem [thread:$0]  %s0, 128, %s24, [#allocation3]
    $region5: #{tpu_custom_call.1} parent=1 // pred_fallthru
      _
    // Predicated region
    $region6: #{tpu_custom_call.1} parent=1 // pred_check
      _
    $region7: #{tpu_custom_call.1} parent=1 // pred_check_branch
      %28 = sbr.rel (0) target = $region9
    $region8: #{tpu_custom_call.1} parent=1 // pred_region
      %s30 = ssub.s32 4096, 4096
      %31 = vsyncadd [#allocation6], %s30
      %s32 = sshll.u32 [#allocation5], 4
      %s33 = int_to_ptr.vmem [resolvable:$true] %s32
      %38 = dma.hbm_to_vmem [thread:$0]  %s1, 4096, %s33, [#allocation6], 1024, 1024, 64
    $region9: #{tpu_custom_call.1} parent=1 // pred_fallthru
      _
    // Predicated region
    $region10: #{tpu_custom_call.1} parent=1 // pred_check
      _
    $region11: #{tpu_custom_call.1} parent=1 // pred_check_branch
      %40 = sbr.rel (0) target = $region13
    $region12: #{tpu_custom_call.1} parent=1 // pred_region
      %s42 = ssub.s32 128, 128
      %43 = vsyncadd [#allocation6], %s42
      %s45 = sshll.u32 [#allocation7], 4
      %s46 = int_to_ptr.vmem [resolvable:$true] %s45
      %48 = dma.hbm_to_vmem [thread:$0]  %s2, 128, %s46, [#allocation6]
    $region13: #{tpu_custom_call.1} parent=1 // pred_fallthru
      _
    // Predicated region
    $region14: #{tpu_custom_call.1} parent=1 // pred_check
      _
    $region15: #{tpu_custom_call.1} parent=1 // pred_check_branch
      %50 = sbr.rel (0) target = $region17
    $region16: #{tpu_custom_call.1} parent=1 // pred_region
      %s52 = ssub.s32 131072, 131072
      %53 = vsyncadd [#allocation9], %s52
      %s54 = sshll.u32 [#allocation8], 4
      %s55 = int_to_ptr.vmem [resolvable:$true] %s54
      %60 = dma.hbm_to_vmem [thread:$0]  %s3, 131072, %s55, [#allocation9], 1024, 1024, 64
    $region17: #{tpu_custom_call.1} parent=1 // pred_fallthru
      _
    // Predicated region
    $region18: #{tpu_custom_call.1} parent=1 // pred_check
      _
    $region19: #{tpu_custom_call.1} parent=1 // pred_check_branch
      %62 = sbr.rel (0) target = $region21
    $region20: #{tpu_custom_call.1} parent=1 // pred_region
      %s64 = ssub.s32 128, 128
      %65 = vsyncadd [#allocation9], %s64
      %s67 = sshll.u32 [#allocation10], 4
      %s68 = int_to_ptr.vmem [resolvable:$true] %s67
      %70 = dma.hbm_to_vmem [thread:$0]  %s4, 128, %s68, [#allocation9]
    $region21: #{tpu_custom_call.1} parent=1 // pred_fallthru
      _
    // Predicated region
    $region22: #{tpu_custom_call.1} parent=1 // pred_check
      _
    $region23: #{tpu_custom_call.1} parent=1 // pred_check_branch
      %72 = sbr.rel (0) target = $region25
    $region24: #{tpu_custom_call.1} parent=1 // pred_region
      _
    $region25: #{tpu_custom_call.1} parent=1 // pred_fallthru
      _
    // Predicated region
    $region26: #{tpu_custom_call.1} parent=1 // pred_check
      _
    $region27: #{tpu_custom_call.1} parent=1 // pred_check_branch
      %74 = sbr.rel (0) target = $region29
    $region28: #{tpu_custom_call.1} parent=1 // pred_region
      %s76 = ssub.s32 16, 16
      %77 = vsyncadd [#allocation12], %s76
      %s79 = sshll.u32 [#allocation11], 4
      %s80 = int_to_ptr.vmem [resolvable:$true] %s79
      %82 = dma.hbm_to_vmem [thread:$0]  %s6, 16, %s80, [#allocation12]
    $region29: #{tpu_custom_call.1} parent=1 // pred_fallthru
      _
    // Predicated region
    $region30: #{tpu_custom_call.1} parent=1 // pred_check
      _
    $region31: #{tpu_custom_call.1} parent=1 // pred_check_branch
      %84 = sbr.rel (0) target = $region33
    $region32: #{tpu_custom_call.1} parent=1 // pred_region
      %85 = dma.done [#allocation3], 128
    $region33: #{tpu_custom_call.1} parent=1 // pred_fallthru
      _
    // Predicated region
    $region34: #{tpu_custom_call.1} parent=1 // pred_check
      _
    $region35: #{tpu_custom_call.1} parent=1 // pred_check_branch
      %87 = sbr.rel (0) target = $region37
    $region36: #{tpu_custom_call.1} parent=1 // pred_region
      %88 = dma.done [#allocation6], 4096
    $region37: #{tpu_custom_call.1} parent=1 // pred_fallthru
      _
    // Predicated region
    $region38: #{tpu_custom_call.1} parent=1 // pred_check
      _
    $region39: #{tpu_custom_call.1} parent=1 // pred_check_branch
      %90 = sbr.rel (0) target = $region41
    $region40: #{tpu_custom_call.1} parent=1 // pred_region
      %91 = dma.done [#allocation6], 128
    $region41: #{tpu_custom_call.1} parent=1 // pred_fallthru
      _
    // Predicated region
    $region42: #{tpu_custom_call.1} parent=1 // pred_check
      _
    $region43: #{tpu_custom_call.1} parent=1 // pred_check_branch
      %93 = sbr.rel (0) target = $region45
    $region44: #{tpu_custom_call.1} parent=1 // pred_region
      %94 = dma.done [#allocation9], 131072
    $region45: #{tpu_custom_call.1} parent=1 // pred_fallthru
      _
    // Predicated region
    $region46: #{tpu_custom_call.1} parent=1 // pred_check
      _
    $region47: #{tpu_custom_call.1} parent=1 // pred_check_branch
      %96 = sbr.rel (0) target = $region49
    $region48: #{tpu_custom_call.1} parent=1 // pred_region
      %97 = dma.done [#allocation9], 128
    $region49: #{tpu_custom_call.1} parent=1 // pred_fallthru
      _
    // Predicated region
    $region50: #{tpu_custom_call.1} parent=1 // pred_check
      _
    $region51: #{tpu_custom_call.1} parent=1 // pred_check_branch
      %99 = sbr.rel (0) target = $region53
    $region52: #{tpu_custom_call.1} parent=1 // pred_region
      %100 = dma.done [#allocation12], 16
    $region53: #{tpu_custom_call.1} parent=1 // pred_fallthru
      _
    %v101 = vld [vmem:[#allocation2] sm:$0xff]
    %v102 = vld [vmem:[#allocation5] sm:$0xff]
    %v103 = vld [vmem:[#allocation5 + $0x8] sm:$0xff]
    %v104 = vld [vmem:[#allocation5 + $0x10] sm:$0xff]
    %v105 = vld [vmem:[#allocation5 + $0x18] sm:$0xff]
    %v106 = vld [vmem:[#allocation5 + $0x20] sm:$0xff]
    %v107 = vld [vmem:[#allocation5 + $0x28] sm:$0xff]
    %v108 = vld [vmem:[#allocation5 + $0x30] sm:$0xff]
    %v109 = vld [vmem:[#allocation5 + $0x38] sm:$0xff]
    %v110 = vld [vmem:[#allocation5 + $0x40] sm:$0xff]
    %v111 = vld [vmem:[#allocation5 + $0x48] sm:$0xff]
    %v112 = vld [vmem:[#allocation5 + $0x50] sm:$0xff]
    %v113 = vld [vmem:[#allocation5 + $0x58] sm:$0xff]
    %v114 = vld [vmem:[#allocation5 + $0x60] sm:$0xff]
    %v115 = vld [vmem:[#allocation5 + $0x68] sm:$0xff]
    %v116 = vld [vmem:[#allocation5 + $0x70] sm:$0xff]
    %v117 = vld [vmem:[#allocation5 + $0x78] sm:$0xff]
    %v118 = vld [vmem:[#allocation5 + $0x80] sm:$0xff]
    %v119 = vld [vmem:[#allocation5 + $0x88] sm:$0xff]
    %v120 = vld [vmem:[#allocation5 + $0x90] sm:$0xff]
    %v121 = vld [vmem:[#allocation5 + $0x98] sm:$0xff]
    %v122 = vld [vmem:[#allocation5 + $0xa0] sm:$0xff]
    %v123 = vld [vmem:[#allocation5 + $0xa8] sm:$0xff]
    %v124 = vld [vmem:[#allocation5 + $0xb0] sm:$0xff]
    %v125 = vld [vmem:[#allocation5 + $0xb8] sm:$0xff]
    %v126 = vld [vmem:[#allocation5 + $0xc0] sm:$0xff]
    %v127 = vld [vmem:[#allocation5 + $0xc8] sm:$0xff]
    %v128 = vld [vmem:[#allocation5 + $0xd0] sm:$0xff]
    %v129 = vld [vmem:[#allocation5 + $0xd8] sm:$0xff]
    %v130 = vld [vmem:[#allocation5 + $0xe0] sm:$0xff]
    %v131 = vld [vmem:[#allocation5 + $0xe8] sm:$0xff]
    %v132 = vld [vmem:[#allocation5 + $0xf0] sm:$0xff]
    %v133 = vld [vmem:[#allocation5 + $0xf8] sm:$0xff]
    %v134 = vld [vmem:[#allocation7] sm:$0xff]
    %v136 = vlaneseq
    %v137 = vshrl.u32 %v136, 7
    %v138 = vsub.s32 0, %v137
    %v139 = vrot.slane %v134, %v138
    %v140 = vlaneseq
    %v141 = vshrl.u32 %v140, 7
    %v142 = vsub.s32 1, %v141
    %v143 = vrot.slane %v134, %v142
    %v144 = vlaneseq
    %v145 = vshrl.u32 %v144, 7
    %v146 = vsub.s32 2, %v145
    %v147 = vrot.slane %v134, %v146
    %v148 = vlaneseq
    %v149 = vshrl.u32 %v148, 7
    %v150 = vsub.s32 3, %v149
    %v151 = vrot.slane %v134, %v150
    %v152 = vlaneseq
    %v153 = vshrl.u32 %v152, 7
    %v154 = vsub.s32 4, %v153
    %v155 = vrot.slane %v134, %v154
    %v156 = vlaneseq
    %v157 = vshrl.u32 %v156, 7
    %v158 = vsub.s32 5, %v157
    %v159 = vrot.slane %v134, %v158
    %v160 = vlaneseq
    %v161 = vshrl.u32 %v160, 7
    %v162 = vsub.s32 6, %v161
    %v163 = vrot.slane %v134, %v162
    %v164 = vlaneseq
    %v165 = vshrl.u32 %v164, 7
    %v166 = vsub.s32 7, %v165
    %v167 = vrot.slane %v134, %v166
    %vm176 = vcmask 261120
    %v178 = vsel %vm176, %v101, 0
    %180 = vmatprep.subr.mxu0 %v103
    %181 = vmatpush1.msra.mxu0 %v102
    %182 = vmatprep.subr.mxu0 %v111
    %183 = vmatpush1.msra.mxu0 %v110
    %184 = vmatprep.subr.mxu0 %v119
    %185 = vmatpush1.msra.mxu0 %v118
    %186 = vmatprep.subr.mxu0 %v127
    %187 = vmatpush1.msra.mxu0 %v126
    %188 = vmatprep.subr.mxu0 0.0
    %189 = vmatpush1.msra.mxu0 0.0
    %190 = vmatprep.subr.mxu0 0.0
    %191 = vmatpush1.msra.mxu0 0.0
    %192 = vmatprep.subr.mxu0 0.0
    %193 = vmatpush1.msra.mxu0 0.0
    %194 = vmatprep.subr.mxu0 0.0
    %195 = vmatpush1.msra.mxu0 0.0
    %196 = vmatprep.subr.mxu0 0.0
    %197 = vmatpush1.msra.mxu0 0.0
    %198 = vmatprep.subr.mxu0 0.0
    %199 = vmatpush1.msra.mxu0 0.0
    %200 = vmatprep.subr.mxu0 0.0
    %201 = vmatpush1.msra.mxu0 0.0
    %202 = vmatprep.subr.mxu0 0.0
    %203 = vmatpush1.msra.mxu0 0.0
    %204 = vmatprep.subr.mxu0 0.0
    %205 = vmatpush1.msra.mxu0 0.0
    %206 = vmatprep.subr.mxu0 0.0
    %207 = vmatpush1.msra.mxu0 0.0
    %208 = vmatprep.subr.mxu0 0.0
    %209 = vmatpush1.msra.mxu0 0.0
    %210 = vmatprep.subr.mxu0 0.0
    %211 = vmatpush1.msra.mxu0 0.0
    %212 = vmatprep.subr.mxu0 0.0
    %213 = vmatpush1.msra.mxu0 0.0
    %214 = vmatprep.subr.mxu0 0.0
    %215 = vmatpush1.msra.mxu0 0.0
    %216 = vmatprep.subr.mxu0 0.0
    %217 = vmatpush1.msra.mxu0 0.0
    %218 = vmatprep.subr.mxu0 0.0
    %219 = vmatpush1.msra.mxu0 0.0
    %220 = vmatprep.subr.mxu0 0.0
    %221 = vmatpush1.msra.mxu0 0.0
    %222 = vmatprep.subr.mxu0 0.0
    %223 = vmatpush1.msra.mxu0 0.0
    %224 = vmatprep.subr.mxu0 0.0
    %225 = vmatpush1.msra.mxu0 0.0
    %226 = vmatprep.subr.mxu0 0.0
    %227 = vmatpush1.msra.mxu0 0.0
    %228 = vmatprep.subr.mxu0 0.0
    %229 = vmatpush1.msra.mxu0 0.0
    %230 = vmatprep.subr.mxu0 0.0
    %231 = vmatpush1.msra.mxu0 0.0
    %232 = vmatprep.subr.mxu0 0.0
    %233 = vmatpush1.msra.mxu0 0.0
    %234 = vmatprep.subr.mxu0 0.0
    %235 = vmatpush1.msra.mxu0 0.0
    %236 = vmatprep.subr.mxu0 0.0
    %237 = vmatpush1.msra.mxu0 0.0
    %238 = vmatprep.subr.mxu0 0.0
    %239 = vmatpush1.msra.mxu0 0.0
    %240 = vmatprep.subr.mxu0 0.0
    %241 = vmatpush1.msra.mxu0 0.0
    %242 = vmatprep.subr.mxu0 0.0
    %243 = vmatpush1.msra.mxu0 0.0
    %244 = vmatprep.mubr.f32.mxu0 0.0
    %245 = vmatmul.mubr.f32.gmra.mrb[0].mxu0 %v178
    %v246 = vpop.f32.mrb[0].mxu0
    %v247 = vadd.f32 %v139, %v246
    %v248 = vpop.f32.mrb[0].mxu0
    %v249 = vadd.f32 %v143, %v248
    %250 = vdwg.mxu0
    %251 = vmatprep.subr.mxu0 %v105
    %252 = vmatpush1.msra.mxu0 %v104
    %253 = vmatprep.subr.mxu0 %v113
    %254 = vmatpush1.msra.mxu0 %v112
    %255 = vmatprep.subr.mxu0 %v121
    %256 = vmatpush1.msra.mxu0 %v120
    %257 = vmatprep.subr.mxu0 %v129
    %258 = vmatpush1.msra.mxu0 %v128
    %259 = vmatprep.subr.mxu0 0.0
    %260 = vmatpush1.msra.mxu0 0.0
    %261 = vmatprep.subr.mxu0 0.0
    %262 = vmatpush1.msra.mxu0 0.0
    %263 = vmatprep.subr.mxu0 0.0
    %264 = vmatpush1.msra.mxu0 0.0
    %265 = vmatprep.subr.mxu0 0.0
    %266 = vmatpush1.msra.mxu0 0.0
    %267 = vmatprep.subr.mxu0 0.0
    %268 = vmatpush1.msra.mxu0 0.0
    %269 = vmatprep.subr.mxu0 0.0
    %270 = vmatpush1.msra.mxu0 0.0
    %271 = vmatprep.subr.mxu0 0.0
    %272 = vmatpush1.msra.mxu0 0.0
    %273 = vmatprep.subr.mxu0 0.0
    %274 = vmatpush1.msra.mxu0 0.0
    %275 = vmatprep.subr.mxu0 0.0
    %276 = vmatpush1.msra.mxu0 0.0
    %277 = vmatprep.subr.mxu0 0.0
    %278 = vmatpush1.msra.mxu0 0.0
    %279 = vmatprep.subr.mxu0 0.0
    %280 = vmatpush1.msra.mxu0 0.0
    %281 = vmatprep.subr.mxu0 0.0
    %282 = vmatpush1.msra.mxu0 0.0
    %283 = vmatprep.subr.mxu0 0.0
    %284 = vmatpush1.msra.mxu0 0.0
    %285 = vmatprep.subr.mxu0 0.0
    %286 = vmatpush1.msra.mxu0 0.0
    %287 = vmatprep.subr.mxu0 0.0
    %288 = vmatpush1.msra.mxu0 0.0
    %289 = vmatprep.subr.mxu0 0.0
    %290 = vmatpush1.msra.mxu0 0.0
    %291 = vmatprep.subr.mxu0 0.0
    %292 = vmatpush1.msra.mxu0 0.0
    %293 = vmatprep.subr.mxu0 0.0
    %294 = vmatpush1.msra.mxu0 0.0
    %295 = vmatprep.subr.mxu0 0.0
    %296 = vmatpush1.msra.mxu0 0.0
    %297 = vmatprep.subr.mxu0 0.0
    %298 = vmatpush1.msra.mxu0 0.0
    %299 = vmatprep.subr.mxu0 0.0
    %300 = vmatpush1.msra.mxu0 0.0
    %301 = vmatprep.subr.mxu0 0.0
    %302 = vmatpush1.msra.mxu0 0.0
    %303 = vmatprep.subr.mxu0 0.0
    %304 = vmatpush1.msra.mxu0 0.0
    %305 = vmatprep.subr.mxu0 0.0
    %306 = vmatpush1.msra.mxu0 0.0
    %307 = vmatprep.subr.mxu0 0.0
    %308 = vmatpush1.msra.mxu0 0.0
    %309 = vmatprep.subr.mxu0 0.0
    %310 = vmatpush1.msra.mxu0 0.0
    %311 = vmatprep.subr.mxu0 0.0
    %312 = vmatpush1.msra.mxu0 0.0
    %313 = vmatprep.subr.mxu0 0.0
    %314 = vmatpush1.msra.mxu0 0.0
    %315 = vmatprep.mubr.f32.mxu0 0.0
    %316 = vmatmul.mubr.f32.gmra.mrb[0].mxu0 %v178
    %v317 = vpop.f32.mrb[0].mxu0
    %v318 = vadd.f32 %v147, %v317
    %v319 = vpop.f32.mrb[0].mxu0
    %v320 = vadd.f32 %v151, %v319
    %321 = vdwg.mxu0
    %322 = vmatprep.subr.mxu0 %v107
    %323 = vmatpush1.msra.mxu0 %v106
    %324 = vmatprep.subr.mxu0 %v115
    %325 = vmatpush1.msra.mxu0 %v114
    %326 = vmatprep.subr.mxu0 %v123
    %327 = vmatpush1.msra.mxu0 %v122
    %328 = vmatprep.subr.mxu0 %v131
    %329 = vmatpush1.msra.mxu0 %v130
    %330 = vmatprep.subr.mxu0 0.0
    %331 = vmatpush1.msra.mxu0 0.0
    %332 = vmatprep.subr.mxu0 0.0
    %333 = vmatpush1.msra.mxu0 0.0
    %334 = vmatprep.subr.mxu0 0.0
    %335 = vmatpush1.msra.mxu0 0.0
    %336 = vmatprep.subr.mxu0 0.0
    %337 = vmatpush1.msra.mxu0 0.0
    %338 = vmatprep.subr.mxu0 0.0
    %339 = vmatpush1.msra.mxu0 0.0
    %340 = vmatprep.subr.mxu0 0.0
    %341 = vmatpush1.msra.mxu0 0.0
    %342 = vmatprep.subr.mxu0 0.0
    %343 = vmatpush1.msra.mxu0 0.0
    %344 = vmatprep.subr.mxu0 0.0
    %345 = vmatpush1.msra.mxu0 0.0
    %346 = vmatprep.subr.mxu0 0.0
    %347 = vmatpush1.msra.mxu0 0.0
    %348 = vmatprep.subr.mxu0 0.0
    %349 = vmatpush1.msra.mxu0 0.0
    %350 = vmatprep.subr.mxu0 0.0
    %351 = vmatpush1.msra.mxu0 0.0
    %352 = vmatprep.subr.mxu0 0.0
    %353 = vmatpush1.msra.mxu0 0.0
    %354 = vmatprep.subr.mxu0 0.0
    %355 = vmatpush1.msra.mxu0 0.0
    %356 = vmatprep.subr.mxu0 0.0
    %357 = vmatpush1.msra.mxu0 0.0
    %358 = vmatprep.subr.mxu0 0.0
    %359 = vmatpush1.msra.mxu0 0.0
    %360 = vmatprep.subr.mxu0 0.0
    %361 = vmatpush1.msra.mxu0 0.0
    %362 = vmatprep.subr.mxu0 0.0
    %363 = vmatpush1.msra.mxu0 0.0
    %364 = vmatprep.subr.mxu0 0.0
    %365 = vmatpush1.msra.mxu0 0.0
    %366 = vmatprep.subr.mxu0 0.0
    %367 = vmatpush1.msra.mxu0 0.0
    %368 = vmatprep.subr.mxu0 0.0
    %369 = vmatpush1.msra.mxu0 0.0
    %370 = vmatprep.subr.mxu0 0.0
    %371 = vmatpush1.msra.mxu0 0.0
    %372 = vmatprep.subr.mxu0 0.0
    %373 = vmatpush1.msra.mxu0 0.0
    %374 = vmatprep.subr.mxu0 0.0
    %375 = vmatpush1.msra.mxu0 0.0
    %376 = vmatprep.subr.mxu0 0.0
    %377 = vmatpush1.msra.mxu0 0.0
    %378 = vmatprep.subr.mxu0 0.0
    %379 = vmatpush1.msra.mxu0 0.0
    %380 = vmatprep.subr.mxu0 0.0
    %381 = vmatpush1.msra.mxu0 0.0
    %382 = vmatprep.subr.mxu0 0.0
    %383 = vmatpush1.msra.mxu0 0.0
    %384 = vmatprep.subr.mxu0 0.0
    %385 = vmatpush1.msra.mxu0 0.0
    %386 = vmatprep.mubr.f32.mxu0 0.0
    %387 = vmatmul.mubr.f32.gmra.mrb[0].mxu0 %v178
    %v388 = vpop.f32.mrb[0].mxu0
    %v389 = vadd.f32 %v155, %v388
    %v390 = vpop.f32.mrb[0].mxu0
    %v391 = vadd.f32 %v159, %v390
    %392 = vdwg.mxu0
    %393 = vmatprep.subr.mxu0 %v109
    %394 = vmatpush1.msra.mxu0 %v108
    %395 = vmatprep.subr.mxu0 %v117
    %396 = vmatpush1.msra.mxu0 %v116
    %397 = vmatprep.subr.mxu0 %v125
    %398 = vmatpush1.msra.mxu0 %v124
    %399 = vmatprep.subr.mxu0 %v133
    %400 = vmatpush1.msra.mxu0 %v132
    %401 = vmatprep.subr.mxu0 0.0
    %402 = vmatpush1.msra.mxu0 0.0
    %403 = vmatprep.subr.mxu0 0.0
    %404 = vmatpush1.msra.mxu0 0.0
    %405 = vmatprep.subr.mxu0 0.0
    %406 = vmatpush1.msra.mxu0 0.0
    %407 = vmatprep.subr.mxu0 0.0
    %408 = vmatpush1.msra.mxu0 0.0
    %409 = vmatprep.subr.mxu0 0.0
    %410 = vmatpush1.msra.mxu0 0.0
    %411 = vmatprep.subr.mxu0 0.0
    %412 = vmatpush1.msra.mxu0 0.0
    %413 = vmatprep.subr.mxu0 0.0
    %414 = vmatpush1.msra.mxu0 0.0
    %415 = vmatprep.subr.mxu0 0.0
    %416 = vmatpush1.msra.mxu0 0.0
    %417 = vmatprep.subr.mxu0 0.0
    %418 = vmatpush1.msra.mxu0 0.0
    %419 = vmatprep.subr.mxu0 0.0
    %420 = vmatpush1.msra.mxu0 0.0
    %421 = vmatprep.subr.mxu0 0.0
    %422 = vmatpush1.msra.mxu0 0.0
    %423 = vmatprep.subr.mxu0 0.0
    %424 = vmatpush1.msra.mxu0 0.0
    %425 = vmatprep.subr.mxu0 0.0
    %426 = vmatpush1.msra.mxu0 0.0
    %427 = vmatprep.subr.mxu0 0.0
    %428 = vmatpush1.msra.mxu0 0.0
    %429 = vmatprep.subr.mxu0 0.0
    %430 = vmatpush1.msra.mxu0 0.0
    %431 = vmatprep.subr.mxu0 0.0
    %432 = vmatpush1.msra.mxu0 0.0
    %433 = vmatprep.subr.mxu0 0.0
    %434 = vmatpush1.msra.mxu0 0.0
    %435 = vmatprep.subr.mxu0 0.0
    %436 = vmatpush1.msra.mxu0 0.0
    %437 = vmatprep.subr.mxu0 0.0
    %438 = vmatpush1.msra.mxu0 0.0
    %439 = vmatprep.subr.mxu0 0.0
    %440 = vmatpush1.msra.mxu0 0.0
    %441 = vmatprep.subr.mxu0 0.0
    %442 = vmatpush1.msra.mxu0 0.0
    %443 = vmatprep.subr.mxu0 0.0
    %444 = vmatpush1.msra.mxu0 0.0
    %445 = vmatprep.subr.mxu0 0.0
    %446 = vmatpush1.msra.mxu0 0.0
    %447 = vmatprep.subr.mxu0 0.0
    %448 = vmatpush1.msra.mxu0 0.0
    %449 = vmatprep.subr.mxu0 0.0
    %450 = vmatpush1.msra.mxu0 0.0
    %451 = vmatprep.subr.mxu0 0.0
    %452 = vmatpush1.msra.mxu0 0.0
    %453 = vmatprep.subr.mxu0 0.0
    %454 = vmatpush1.msra.mxu0 0.0
    %455 = vmatprep.subr.mxu0 0.0
    %456 = vmatpush1.msra.mxu0 0.0
    %457 = vmatprep.mubr.f32.mxu0 0.0
    %458 = vmatmul.mubr.f32.gmra.mrb[0].mxu0 %v178
    %v459 = vpop.f32.mrb[0].mxu0
    %v460 = vadd.f32 %v163, %v459
    %v461 = vpop.f32.mrb[0].mxu0
    %v462 = vadd.f32 %v167, %v461
    %463 = vdwg.mxu0
    %vm464 = vcmp.gt.f32.partialorder %v247, 0.0
    %vm465 = vcmp.gt.f32.partialorder %v249, 0.0
    %vm466 = vcmp.gt.f32.partialorder %v318, 0.0
    %vm467 = vcmp.gt.f32.partialorder %v320, 0.0
    %vm468 = vcmp.gt.f32.partialorder %v389, 0.0
    %vm469 = vcmp.gt.f32.partialorder %v391, 0.0
    %vm470 = vcmp.gt.f32.partialorder %v460, 0.0
    %vm471 = vcmp.gt.f32.partialorder %v462, 0.0
    %v472 = vmul.f32 %v247, 0.01
    %v473 = vmul.f32 %v249, 0.01
    %v474 = vmul.f32 %v318, 0.01
    %v475 = vmul.f32 %v320, 0.01
    %v476 = vmul.f32 %v389, 0.01
    %v477 = vmul.f32 %v391, 0.01
    %v478 = vmul.f32 %v460, 0.01
    %v479 = vmul.f32 %v462, 0.01
    %v480 = vsel %vm464, %v247, %v472
    %v481 = vsel %vm465, %v249, %v473
    %v482 = vsel %vm466, %v318, %v474
    %v483 = vsel %vm467, %v320, %v475
    %v484 = vsel %vm468, %v389, %v476
    %v485 = vsel %vm469, %v391, %v477
    %v486 = vsel %vm470, %v460, %v478
    %v487 = vsel %vm471, %v462, %v479
    %v488 = vld [vmem:[#allocation8] sm:$0xff]
    %v489 = vld [vmem:[#allocation8 + $0x8] sm:$0xff]
    %v490 = vld [vmem:[#allocation8 + $0x10] sm:$0xff]
    %v491 = vld [vmem:[#allocation8 + $0x18] sm:$0xff]
    %v492 = vld [vmem:[#allocation8 + $0x20] sm:$0xff]
    %v493 = vld [vmem:[#allocation8 + $0x28] sm:$0xff]
    %v494 = vld [vmem:[#allocation8 + $0x30] sm:$0xff]
    %v495 = vld [vmem:[#allocation8 + $0x38] sm:$0xff]
    %v496 = vld [vmem:[#allocation8 + $0x40] sm:$0xff]
    %v497 = vld [vmem:[#allocation8 + $0x48] sm:$0xff]
    %v498 = vld [vmem:[#allocation8 + $0x50] sm:$0xff]
    %v499 = vld [vmem:[#allocation8 + $0x58] sm:$0xff]
    %v500 = vld [vmem:[#allocation8 + $0x60] sm:$0xff]
    %v501 = vld [vmem:[#allocation8 + $0x68] sm:$0xff]
    %v502 = vld [vmem:[#allocation8 + $0x70] sm:$0xff]
    %v503 = vld [vmem:[#allocation8 + $0x78] sm:$0xff]
    %v504 = vld [vmem:[#allocation8 + $0x80] sm:$0xff]
    %v505 = vld [vmem:[#allocation8 + $0x88] sm:$0xff]
    %v506 = vld [vmem:[#allocation8 + $0x90] sm:$0xff]
    %v507 = vld [vmem:[#allocation8 + $0x98] sm:$0xff]
    %v508 = vld [vmem:[#allocation8 + $0xa0] sm:$0xff]
    %v509 = vld [vmem:[#allocation8 + $0xa8] sm:$0xff]
    %v510 = vld [vmem:[#allocation8 + $0xb0] sm:$0xff]
    %v511 = vld [vmem:[#allocation8 + $0xb8] sm:$0xff]
    %v512 = vld [vmem:[#allocation8 + $0xc0] sm:$0xff]
    %v513 = vld [vmem:[#allocation8 + $0xc8] sm:$0xff]
    %v514 = vld [vmem:[#allocation8 + $0xd0] sm:$0xff]
    %v515 = vld [vmem:[#allocation8 + $0xd8] sm:$0xff]
    %v516 = vld [vmem:[#allocation8 + $0xe0] sm:$0xff]
    %v517 = vld [vmem:[#allocation8 + $0xe8] sm:$0xff]
    %v518 = vld [vmem:[#allocation8 + $0xf0] sm:$0xff]
    %v519 = vld [vmem:[#allocation8 + $0xf8] sm:$0xff]
    %v520 = vld [vmem:[#allocation8 + $0x100] sm:$0xff]
    %v521 = vld [vmem:[#allocation8 + $0x108] sm:$0xff]
    %v522 = vld [vmem:[#allocation8 + $0x110] sm:$0xff]
    %v523 = vld [vmem:[#allocation8 + $0x118] sm:$0xff]
    %v524 = vld [vmem:[#allocation8 + $0x120] sm:$0xff]
    %v525 = vld [vmem:[#allocation8 + $0x128] sm:$0xff]
    %v526 = vld [vmem:[#allocation8 + $0x130] sm:$0xff]
    %v527 = vld [vmem:[#allocation8 + $0x138] sm:$0xff]
    %v528 = vld [vmem:[#allocation8 + $0x140] sm:$0xff]
    %v529 = vld [vmem:[#allocation8 + $0x148] sm:$0xff]
    %v530 = vld [vmem:[#allocation8 + $0x150] sm:$0xff]
    %v531 = vld [vmem:[#allocation8 + $0x158] sm:$0xff]
    %v532 = vld [vmem:[#allocation8 + $0x160] sm:$0xff]
    %v533 = vld [vmem:[#allocation8 + $0x168] sm:$0xff]
    %v534 = vld [vmem:[#allocation8 + $0x170] sm:$0xff]
    %v535 = vld [vmem:[#allocation8 + $0x178] sm:$0xff]
    %v536 = vld [vmem:[#allocation8 + $0x180] sm:$0xff]
    %v537 = vld [vmem:[#allocation8 + $0x188] sm:$0xff]
    %v538 = vld [vmem:[#allocation8 + $0x190] sm:$0xff]
    %v539 = vld [vmem:[#allocation8 + $0x198] sm:$0xff]
    %v540 = vld [vmem:[#allocation8 + $0x1a0] sm:$0xff]
    %v541 = vld [vmem:[#allocation8 + $0x1a8] sm:$0xff]
    %v542 = vld [vmem:[#allocation8 + $0x1b0] sm:$0xff]
    %v543 = vld [vmem:[#allocation8 + $0x1b8] sm:$0xff]
    %v544 = vld [vmem:[#allocation8 + $0x1c0] sm:$0xff]
    %v545 = vld [vmem:[#allocation8 + $0x1c8] sm:$0xff]
    %v546 = vld [vmem:[#allocation8 + $0x1d0] sm:$0xff]
    %v547 = vld [vmem:[#allocation8 + $0x1d8] sm:$0xff]
    %v548 = vld [vmem:[#allocation8 + $0x1e0] sm:$0xff]
    %v549 = vld [vmem:[#allocation8 + $0x1e8] sm:$0xff]
    %v550 = vld [vmem:[#allocation8 + $0x1f0] sm:$0xff]
    %v551 = vld [vmem:[#allocation8 + $0x1f8] sm:$0xff]
    %v552 = vld [vmem:[#allocation8 + $0x200] sm:$0xff]
    %v553 = vld [vmem:[#allocation8 + $0x208] sm:$0xff]
    %v554 = vld [vmem:[#allocation8 + $0x210] sm:$0xff]
    %v555 = vld [vmem:[#allocation8 + $0x218] sm:$0xff]
    %v556 = vld [vmem:[#allocation8 + $0x220] sm:$0xff]
    %v557 = vld [vmem:[#allocation8 + $0x228] sm:$0xff]
    %v558 = vld [vmem:[#allocation8 + $0x230] sm:$0xff]
    %v559 = vld [vmem:[#allocation8 + $0x238] sm:$0xff]
    %v560 = vld [vmem:[#allocation8 + $0x240] sm:$0xff]
    %v561 = vld [vmem:[#allocation8 + $0x248] sm:$0xff]
    %v562 = vld [vmem:[#allocation8 + $0x250] sm:$0xff]
    %v563 = vld [vmem:[#allocation8 + $0x258] sm:$0xff]
    %v564 = vld [vmem:[#allocation8 + $0x260] sm:$0xff]
    %v565 = vld [vmem:[#allocation8 + $0x268] sm:$0xff]
    %v566 = vld [vmem:[#allocation8 + $0x270] sm:$0xff]
    %v567 = vld [vmem:[#allocation8 + $0x278] sm:$0xff]
    %v568 = vld [vmem:[#allocation8 + $0x280] sm:$0xff]
    %v569 = vld [vmem:[#allocation8 + $0x288] sm:$0xff]
    %v570 = vld [vmem:[#allocation8 + $0x290] sm:$0xff]
    %v571 = vld [vmem:[#allocation8 + $0x298] sm:$0xff]
    %v572 = vld [vmem:[#allocation8 + $0x2a0] sm:$0xff]
    %v573 = vld [vmem:[#allocation8 + $0x2a8] sm:$0xff]
    %v574 = vld [vmem:[#allocation8 + $0x2b0] sm:$0xff]
    %v575 = vld [vmem:[#allocation8 + $0x2b8] sm:$0xff]
    %v576 = vld [vmem:[#allocation8 + $0x2c0] sm:$0xff]
    %v577 = vld [vmem:[#allocation8 + $0x2c8] sm:$0xff]
    %v578 = vld [vmem:[#allocation8 + $0x2d0] sm:$0xff]
    %v579 = vld [vmem:[#allocation8 + $0x2d8] sm:$0xff]
    %v580 = vld [vmem:[#allocation8 + $0x2e0] sm:$0xff]
    %v581 = vld [vmem:[#allocation8 + $0x2e8] sm:$0xff]
    %v582 = vld [vmem:[#allocation8 + $0x2f0] sm:$0xff]
    %v583 = vld [vmem:[#allocation8 + $0x2f8] sm:$0xff]
    %v584 = vld [vmem:[#allocation8 + $0x300] sm:$0xff]
    %v585 = vld [vmem:[#allocation8 + $0x308] sm:$0xff]
    %v586 = vld [vmem:[#allocation8 + $0x310] sm:$0xff]
    %v587 = vld [vmem:[#allocation8 + $0x318] sm:$0xff]
    %v588 = vld [vmem:[#allocation8 + $0x320] sm:$0xff]
    %v589 = vld [vmem:[#allocation8 + $0x328] sm:$0xff]
    %v590 = vld [vmem:[#allocation8 + $0x330] sm:$0xff]
    %v591 = vld [vmem:[#allocation8 + $0x338] sm:$0xff]
    %v592 = vld [vmem:[#allocation8 + $0x340] sm:$0xff]
    %v593 = vld [vmem:[#allocation8 + $0x348] sm:$0xff]
    %v594 = vld [vmem:[#allocation8 + $0x350] sm:$0xff]
    %v595 = vld [vmem:[#allocation8 + $0x358] sm:$0xff]
    %v596 = vld [vmem:[#allocation8 + $0x360] sm:$0xff]
    %v597 = vld [vmem:[#allocation8 + $0x368] sm:$0xff]
    %v598 = vld [vmem:[#allocation8 + $0x370] sm:$0xff]
    %v599 = vld [vmem:[#allocation8 + $0x378] sm:$0xff]
    %v600 = vld [vmem:[#allocation8 + $0x380] sm:$0xff]
    %v601 = vld [vmem:[#allocation8 + $0x388] sm:$0xff]
    %v602 = vld [vmem:[#allocation8 + $0x390] sm:$0xff]
    %v603 = vld [vmem:[#allocation8 + $0x398] sm:$0xff]
    %v604 = vld [vmem:[#allocation8 + $0x3a0] sm:$0xff]
    %v605 = vld [vmem:[#allocation8 + $0x3a8] sm:$0xff]
    %v606 = vld [vmem:[#allocation8 + $0x3b0] sm:$0xff]
    %v607 = vld [vmem:[#allocation8 + $0x3b8] sm:$0xff]
    %v608 = vld [vmem:[#allocation8 + $0x3c0] sm:$0xff]
    %v609 = vld [vmem:[#allocation8 + $0x3c8] sm:$0xff]
    %v610 = vld [vmem:[#allocation8 + $0x3d0] sm:$0xff]
    %v611 = vld [vmem:[#allocation8 + $0x3d8] sm:$0xff]
    %v612 = vld [vmem:[#allocation8 + $0x3e0] sm:$0xff]
    %v613 = vld [vmem:[#allocation8 + $0x3e8] sm:$0xff]
    %v614 = vld [vmem:[#allocation8 + $0x3f0] sm:$0xff]
    %v615 = vld [vmem:[#allocation8 + $0x3f8] sm:$0xff]
    %v616 = vld [vmem:[#allocation8 + $0x400] sm:$0xff]
    %v617 = vld [vmem:[#allocation8 + $0x408] sm:$0xff]
    %v618 = vld [vmem:[#allocation8 + $0x410] sm:$0xff]
    %v619 = vld [vmem:[#allocation8 + $0x418] sm:$0xff]
    %v620 = vld [vmem:[#allocation8 + $0x420] sm:$0xff]
    %v621 = vld [vmem:[#allocation8 + $0x428] sm:$0xff]
    %v622 = vld [vmem:[#allocation8 + $0x430] sm:$0xff]
    %v623 = vld [vmem:[#allocation8 + $0x438] sm:$0xff]
    %v624 = vld [vmem:[#allocation8 + $0x440] sm:$0xff]
    %v625 = vld [vmem:[#allocation8 + $0x448] sm:$0xff]
    %v626 = vld [vmem:[#allocation8 + $0x450] sm:$0xff]
    %v627 = vld [vmem:[#allocation8 + $0x458] sm:$0xff]
    %v628 = vld [vmem:[#allocation8 + $0x460] sm:$0xff]
    %v629 = vld [vmem:[#allocation8 + $0x468] sm:$0xff]
    %v630 = vld [vmem:[#allocation8 + $0x470] sm:$0xff]
    %v631 = vld [vmem:[#allocation8 + $0x478] sm:$0xff]
    %v632 = vld [vmem:[#allocation8 + $0x480] sm:$0xff]
    %v633 = vld [vmem:[#allocation8 + $0x488] sm:$0xff]
    %v634 = vld [vmem:[#allocation8 + $0x490] sm:$0xff]
    %v635 = vld [vmem:[#allocation8 + $0x498] sm:$0xff]
    %v636 = vld [vmem:[#allocation8 + $0x4a0] sm:$0xff]
    %v637 = vld [vmem:[#allocation8 + $0x4a8] sm:$0xff]
    %v638 = vld [vmem:[#allocation8 + $0x4b0] sm:$0xff]
    %v639 = vld [vmem:[#allocation8 + $0x4b8] sm:$0xff]
    %v640 = vld [vmem:[#allocation8 + $0x4c0] sm:$0xff]
    %v641 = vld [vmem:[#allocation8 + $0x4c8] sm:$0xff]
    %v642 = vld [vmem:[#allocation8 + $0x4d0] sm:$0xff]
    %v643 = vld [vmem:[#allocation8 + $0x4d8] sm:$0xff]
    %v644 = vld [vmem:[#allocation8 + $0x4e0] sm:$0xff]
    %v645 = vld [vmem:[#allocation8 + $0x4e8] sm:$0xff]
    %v646 = vld [vmem:[#allocation8 + $0x4f0] sm:$0xff]
    %v647 = vld [vmem:[#allocation8 + $0x4f8] sm:$0xff]
    %v648 = vld [vmem:[#allocation8 + $0x500] sm:$0xff]
    %v649 = vld [vmem:[#allocation8 + $0x508] sm:$0xff]
    %v650 = vld [vmem:[#allocation8 + $0x510] sm:$0xff]
    %v651 = vld [vmem:[#allocation8 + $0x518] sm:$0xff]
    %v652 = vld [vmem:[#allocation8 + $0x520] sm:$0xff]
    %v653 = vld [vmem:[#allocation8 + $0x528] sm:$0xff]
    %v654 = vld [vmem:[#allocation8 + $0x530] sm:$0xff]
    %v655 = vld [vmem:[#allocation8 + $0x538] sm:$0xff]
    %v656 = vld [vmem:[#allocation8 + $0x540] sm:$0xff]
    %v657 = vld [vmem:[#allocation8 + $0x548] sm:$0xff]
    %v658 = vld [vmem:[#allocation8 + $0x550] sm:$0xff]
    %v659 = vld [vmem:[#allocation8 + $0x558] sm:$0xff]
    %v660 = vld [vmem:[#allocation8 + $0x560] sm:$0xff]
    %v661 = vld [vmem:[#allocation8 + $0x568] sm:$0xff]
    %v662 = vld [vmem:[#allocation8 + $0x570] sm:$0xff]
    %v663 = vld [vmem:[#allocation8 + $0x578] sm:$0xff]
    %v664 = vld [vmem:[#allocation8 + $0x580] sm:$0xff]
    %v665 = vld [vmem:[#allocation8 + $0x588] sm:$0xff]
    %v666 = vld [vmem:[#allocation8 + $0x590] sm:$0xff]
    %v667 = vld [vmem:[#allocation8 + $0x598] sm:$0xff]
    %v668 = vld [vmem:[#allocation8 + $0x5a0] sm:$0xff]
    %v669 = vld [vmem:[#allocation8 + $0x5a8] sm:$0xff]
    %v670 = vld [vmem:[#allocation8 + $0x5b0] sm:$0xff]
    %v671 = vld [vmem:[#allocation8 + $0x5b8] sm:$0xff]
    %v672 = vld [vmem:[#allocation8 + $0x5c0] sm:$0xff]
    %v673 = vld [vmem:[#allocation8 + $0x5c8] sm:$0xff]
    %v674 = vld [vmem:[#allocation8 + $0x5d0] sm:$0xff]
    %v675 = vld [vmem:[#allocation8 + $0x5d8] sm:$0xff]
    %v676 = vld [vmem:[#allocation8 + $0x5e0] sm:$0xff]
    %v677 = vld [vmem:[#allocation8 + $0x5e8] sm:$0xff]
    %v678 = vld [vmem:[#allocation8 + $0x5f0] sm:$0xff]
    %v679 = vld [vmem:[#allocation8 + $0x5f8] sm:$0xff]
    %v680 = vld [vmem:[#allocation8 + $0x600] sm:$0xff]
    %v681 = vld [vmem:[#allocation8 + $0x608] sm:$0xff]
    %v682 = vld [vmem:[#allocation8 + $0x610] sm:$0xff]
    %v683 = vld [vmem:[#allocation8 + $0x618] sm:$0xff]
    %v684 = vld [vmem:[#allocation8 + $0x620] sm:$0xff]
    %v685 = vld [vmem:[#allocation8 + $0x628] sm:$0xff]
    %v686 = vld [vmem:[#allocation8 + $0x630] sm:$0xff]
    %v687 = vld [vmem:[#allocation8 + $0x638] sm:$0xff]
    %v688 = vld [vmem:[#allocation8 + $0x640] sm:$0xff]
    %v689 = vld [vmem:[#allocation8 + $0x648] sm:$0xff]
    %v690 = vld [vmem:[#allocation8 + $0x650] sm:$0xff]
    %v691 = vld [vmem:[#allocation8 + $0x658] sm:$0xff]
    %v692 = vld [vmem:[#allocation8 + $0x660] sm:$0xff]
    %v693 = vld [vmem:[#allocation8 + $0x668] sm:$0xff]
    %v694 = vld [vmem:[#allocation8 + $0x670] sm:$0xff]
    %v695 = vld [vmem:[#allocation8 + $0x678] sm:$0xff]
    %v696 = vld [vmem:[#allocation8 + $0x680] sm:$0xff]
    %v697 = vld [vmem:[#allocation8 + $0x688] sm:$0xff]
    %v698 = vld [vmem:[#allocation8 + $0x690] sm:$0xff]
    %v699 = vld [vmem:[#allocation8 + $0x698] sm:$0xff]
    %v700 = vld [vmem:[#allocation8 + $0x6a0] sm:$0xff]
    %v701 = vld [vmem:[#allocation8 + $0x6a8] sm:$0xff]
    %v702 = vld [vmem:[#allocation8 + $0x6b0] sm:$0xff]
    %v703 = vld [vmem:[#allocation8 + $0x6b8] sm:$0xff]
    %v704 = vld [vmem:[#allocation8 + $0x6c0] sm:$0xff]
    %v705 = vld [vmem:[#allocation8 + $0x6c8] sm:$0xff]
    %v706 = vld [vmem:[#allocation8 + $0x6d0] sm:$0xff]
    %v707 = vld [vmem:[#allocation8 + $0x6d8] sm:$0xff]
    %v708 = vld [vmem:[#allocation8 + $0x6e0] sm:$0xff]
    %v709 = vld [vmem:[#allocation8 + $0x6e8] sm:$0xff]
    %v710 = vld [vmem:[#allocation8 + $0x6f0] sm:$0xff]
    %v711 = vld [vmem:[#allocation8 + $0x6f8] sm:$0xff]
    %v712 = vld [vmem:[#allocation8 + $0x700] sm:$0xff]
    %v713 = vld [vmem:[#allocation8 + $0x708] sm:$0xff]
    %v714 = vld [vmem:[#allocation8 + $0x710] sm:$0xff]
    %v715 = vld [vmem:[#allocation8 + $0x718] sm:$0xff]
    %v716 = vld [vmem:[#allocation8 + $0x720] sm:$0xff]
    %v717 = vld [vmem:[#allocation8 + $0x728] sm:$0xff]
    %v718 = vld [vmem:[#allocation8 + $0x730] sm:$0xff]
    %v719 = vld [vmem:[#allocation8 + $0x738] sm:$0xff]
    %v720 = vld [vmem:[#allocation8 + $0x740] sm:$0xff]
    %v721 = vld [vmem:[#allocation8 + $0x748] sm:$0xff]
    %v722 = vld [vmem:[#allocation8 + $0x750] sm:$0xff]
    %v723 = vld [vmem:[#allocation8 + $0x758] sm:$0xff]
    %v724 = vld [vmem:[#allocation8 + $0x760] sm:$0xff]
    %v725 = vld [vmem:[#allocation8 + $0x768] sm:$0xff]
    %v726 = vld [vmem:[#allocation8 + $0x770] sm:$0xff]
    %v727 = vld [vmem:[#allocation8 + $0x778] sm:$0xff]
    %v728 = vld [vmem:[#allocation8 + $0x780] sm:$0xff]
    %v729 = vld [vmem:[#allocation8 + $0x788] sm:$0xff]
    %v730 = vld [vmem:[#allocation8 + $0x790] sm:$0xff]
    %v731 = vld [vmem:[#allocation8 + $0x798] sm:$0xff]
    %v732 = vld [vmem:[#allocation8 + $0x7a0] sm:$0xff]
    %v733 = vld [vmem:[#allocation8 + $0x7a8] sm:$0xff]
    %v734 = vld [vmem:[#allocation8 + $0x7b0] sm:$0xff]
    %v735 = vld [vmem:[#allocation8 + $0x7b8] sm:$0xff]
    %v736 = vld [vmem:[#allocation8 + $0x7c0] sm:$0xff]
    %v737 = vld [vmem:[#allocation8 + $0x7c8] sm:$0xff]
    %v738 = vld [vmem:[#allocation8 + $0x7d0] sm:$0xff]
    %v739 = vld [vmem:[#allocation8 + $0x7d8] sm:$0xff]
    %v740 = vld [vmem:[#allocation8 + $0x7e0] sm:$0xff]
    %v741 = vld [vmem:[#allocation8 + $0x7e8] sm:$0xff]
    %v742 = vld [vmem:[#allocation8 + $0x7f0] sm:$0xff]
    %v743 = vld [vmem:[#allocation8 + $0x7f8] sm:$0xff]
    %v744 = vld [vmem:[#allocation8 + $0x800] sm:$0xff]
    %v745 = vld [vmem:[#allocation8 + $0x808] sm:$0xff]
    %v746 = vld [vmem:[#allocation8 + $0x810] sm:$0xff]
    %v747 = vld [vmem:[#allocation8 + $0x818] sm:$0xff]
    %v748 = vld [vmem:[#allocation8 + $0x820] sm:$0xff]
    %v749 = vld [vmem:[#allocation8 + $0x828] sm:$0xff]
    %v750 = vld [vmem:[#allocation8 + $0x830] sm:$0xff]
    %v751 = vld [vmem:[#allocation8 + $0x838] sm:$0xff]
    %v752 = vld [vmem:[#allocation8 + $0x840] sm:$0xff]
    %v753 = vld [vmem:[#allocation8 + $0x848] sm:$0xff]
    %v754 = vld [vmem:[#allocation8 + $0x850] sm:$0xff]
    %v755 = vld [vmem:[#allocation8 + $0x858] sm:$0xff]
    %v756 = vld [vmem:[#allocation8 + $0x860] sm:$0xff]
    %v757 = vld [vmem:[#allocation8 + $0x868] sm:$0xff]
    %v758 = vld [vmem:[#allocation8 + $0x870] sm:$0xff]
    %v759 = vld [vmem:[#allocation8 + $0x878] sm:$0xff]
    %v760 = vld [vmem:[#allocation8 + $0x880] sm:$0xff]
    %v761 = vld [vmem:[#allocation8 + $0x888] sm:$0xff]
    %v762 = vld [vmem:[#allocation8 + $0x890] sm:$0xff]
    %v763 = vld [vmem:[#allocation8 + $0x898] sm:$0xff]
    %v764 = vld [vmem:[#allocation8 + $0x8a0] sm:$0xff]
    %v765 = vld [vmem:[#allocation8 + $0x8a8] sm:$0xff]
    %v766 = vld [vmem:[#allocation8 + $0x8b0] sm:$0xff]
    %v767 = vld [vmem:[#allocation8 + $0x8b8] sm:$0xff]
    %v768 = vld [vmem:[#allocation8 + $0x8c0] sm:$0xff]
    %v769 = vld [vmem:[#allocation8 + $0x8c8] sm:$0xff]
    %v770 = vld [vmem:[#allocation8 + $0x8d0] sm:$0xff]
    %v771 = vld [vmem:[#allocation8 + $0x8d8] sm:$0xff]
    %v772 = vld [vmem:[#allocation8 + $0x8e0] sm:$0xff]
    %v773 = vld [vmem:[#allocation8 + $0x8e8] sm:$0xff]
    %v774 = vld [vmem:[#allocation8 + $0x8f0] sm:$0xff]
    %v775 = vld [vmem:[#allocation8 + $0x8f8] sm:$0xff]
    %v776 = vld [vmem:[#allocation8 + $0x900] sm:$0xff]
    %v777 = vld [vmem:[#allocation8 + $0x908] sm:$0xff]
    %v778 = vld [vmem:[#allocation8 + $0x910] sm:$0xff]
    %v779 = vld [vmem:[#allocation8 + $0x918] sm:$0xff]
    %v780 = vld [vmem:[#allocation8 + $0x920] sm:$0xff]
    %v781 = vld [vmem:[#allocation8 + $0x928] sm:$0xff]
    %v782 = vld [vmem:[#allocation8 + $0x930] sm:$0xff]
    %v783 = vld [vmem:[#allocation8 + $0x938] sm:$0xff]
    %v784 = vld [vmem:[#allocation8 + $0x940] sm:$0xff]
    %v785 = vld [vmem:[#allocation8 + $0x948] sm:$0xff]
    %v786 = vld [vmem:[#allocation8 + $0x950] sm:$0xff]
    %v787 = vld [vmem:[#allocation8 + $0x958] sm:$0xff]
    %v788 = vld [vmem:[#allocation8 + $0x960] sm:$0xff]
    %v789 = vld [vmem:[#allocation8 + $0x968] sm:$0xff]
    %v790 = vld [vmem:[#allocation8 + $0x970] sm:$0xff]
    %v791 = vld [vmem:[#allocation8 + $0x978] sm:$0xff]
    %v792 = vld [vmem:[#allocation8 + $0x980] sm:$0xff]
    %v793 = vld [vmem:[#allocation8 + $0x988] sm:$0xff]
    %v794 = vld [vmem:[#allocation8 + $0x990] sm:$0xff]
    %v795 = vld [vmem:[#allocation8 + $0x998] sm:$0xff]
    %v796 = vld [vmem:[#allocation8 + $0x9a0] sm:$0xff]
    %v797 = vld [vmem:[#allocation8 + $0x9a8] sm:$0xff]
    %v798 = vld [vmem:[#allocation8 + $0x9b0] sm:$0xff]
    %v799 = vld [vmem:[#allocation8 + $0x9b8] sm:$0xff]
    %v800 = vld [vmem:[#allocation8 + $0x9c0] sm:$0xff]
    %v801 = vld [vmem:[#allocation8 + $0x9c8] sm:$0xff]
    %v802 = vld [vmem:[#allocation8 + $0x9d0] sm:$0xff]
    %v803 = vld [vmem:[#allocation8 + $0x9d8] sm:$0xff]
    %v804 = vld [vmem:[#allocation8 + $0x9e0] sm:$0xff]
    %v805 = vld [vmem:[#allocation8 + $0x9e8] sm:$0xff]
    %v806 = vld [vmem:[#allocation8 + $0x9f0] sm:$0xff]
    %v807 = vld [vmem:[#allocation8 + $0x9f8] sm:$0xff]
    %v808 = vld [vmem:[#allocation8 + $0xa00] sm:$0xff]
    %v809 = vld [vmem:[#allocation8 + $0xa08] sm:$0xff]
    %v810 = vld [vmem:[#allocation8 + $0xa10] sm:$0xff]
    %v811 = vld [vmem:[#allocation8 + $0xa18] sm:$0xff]
    %v812 = vld [vmem:[#allocation8 + $0xa20] sm:$0xff]
    %v813 = vld [vmem:[#allocation8 + $0xa28] sm:$0xff]
    %v814 = vld [vmem:[#allocation8 + $0xa30] sm:$0xff]
    %v815 = vld [vmem:[#allocation8 + $0xa38] sm:$0xff]
    %v816 = vld [vmem:[#allocation8 + $0xa40] sm:$0xff]
    %v817 = vld [vmem:[#allocation8 + $0xa48] sm:$0xff]
    %v818 = vld [vmem:[#allocation8 + $0xa50] sm:$0xff]
    %v819 = vld [vmem:[#allocation8 + $0xa58] sm:$0xff]
    %v820 = vld [vmem:[#allocation8 + $0xa60] sm:$0xff]
    %v821 = vld [vmem:[#allocation8 + $0xa68] sm:$0xff]
    %v822 = vld [vmem:[#allocation8 + $0xa70] sm:$0xff]
    %v823 = vld [vmem:[#allocation8 + $0xa78] sm:$0xff]
    %v824 = vld [vmem:[#allocation8 + $0xa80] sm:$0xff]
    %v825 = vld [vmem:[#allocation8 + $0xa88] sm:$0xff]
    %v826 = vld [vmem:[#allocation8 + $0xa90] sm:$0xff]
    %v827 = vld [vmem:[#allocation8 + $0xa98] sm:$0xff]
    %v828 = vld [vmem:[#allocation8 + $0xaa0] sm:$0xff]
    %v829 = vld [vmem:[#allocation8 + $0xaa8] sm:$0xff]
    %v830 = vld [vmem:[#allocation8 + $0xab0] sm:$0xff]
    %v831 = vld [vmem:[#allocation8 + $0xab8] sm:$0xff]
    %v832 = vld [vmem:[#allocation8 + $0xac0] sm:$0xff]
    %v833 = vld [vmem:[#allocation8 + $0xac8] sm:$0xff]
    %v834 = vld [vmem:[#allocation8 + $0xad0] sm:$0xff]
    %v835 = vld [vmem:[#allocation8 + $0xad8] sm:$0xff]
    %v836 = vld [vmem:[#allocation8 + $0xae0] sm:$0xff]
    %v837 = vld [vmem:[#allocation8 + $0xae8] sm:$0xff]
    %v838 = vld [vmem:[#allocation8 + $0xaf0] sm:$0xff]
    %v839 = vld [vmem:[#allocation8 + $0xaf8] sm:$0xff]
    %v840 = vld [vmem:[#allocation8 + $0xb00] sm:$0xff]
    %v841 = vld [vmem:[#allocation8 + $0xb08] sm:$0xff]
    %v842 = vld [vmem:[#allocation8 + $0xb10] sm:$0xff]
    %v843 = vld [vmem:[#allocation8 + $0xb18] sm:$0xff]
    %v844 = vld [vmem:[#allocation8 + $0xb20] sm:$0xff]
    %v845 = vld [vmem:[#allocation8 + $0xb28] sm:$0xff]
    %v846 = vld [vmem:[#allocation8 + $0xb30] sm:$0xff]
    %v847 = vld [vmem:[#allocation8 + $0xb38] sm:$0xff]
    %v848 = vld [vmem:[#allocation8 + $0xb40] sm:$0xff]
    %v849 = vld [vmem:[#allocation8 + $0xb48] sm:$0xff]
    %v850 = vld [vmem:[#allocation8 + $0xb50] sm:$0xff]
    %v851 = vld [vmem:[#allocation8 + $0xb58] sm:$0xff]
    %v852 = vld [vmem:[#allocation8 + $0xb60] sm:$0xff]
    %v853 = vld [vmem:[#allocation8 + $0xb68] sm:$0xff]
    %v854 = vld [vmem:[#allocation8 + $0xb70] sm:$0xff]
    %v855 = vld [vmem:[#allocation8 + $0xb78] sm:$0xff]
    %v856 = vld [vmem:[#allocation8 + $0xb80] sm:$0xff]
    %v857 = vld [vmem:[#allocation8 + $0xb88] sm:$0xff]
    %v858 = vld [vmem:[#allocation8 + $0xb90] sm:$0xff]
    %v859 = vld [vmem:[#allocation8 + $0xb98] sm:$0xff]
    %v860 = vld [vmem:[#allocation8 + $0xba0] sm:$0xff]
    %v861 = vld [vmem:[#allocation8 + $0xba8] sm:$0xff]
    %v862 = vld [vmem:[#allocation8 + $0xbb0] sm:$0xff]
    %v863 = vld [vmem:[#allocation8 + $0xbb8] sm:$0xff]
    %v864 = vld [vmem:[#allocation8 + $0xbc0] sm:$0xff]
    %v865 = vld [vmem:[#allocation8 + $0xbc8] sm:$0xff]
    %v866 = vld [vmem:[#allocation8 + $0xbd0] sm:$0xff]
    %v867 = vld [vmem:[#allocation8 + $0xbd8] sm:$0xff]
    %v868 = vld [vmem:[#allocation8 + $0xbe0] sm:$0xff]
    %v869 = vld [vmem:[#allocation8 + $0xbe8] sm:$0xff]
    %v870 = vld [vmem:[#allocation8 + $0xbf0] sm:$0xff]
    %v871 = vld [vmem:[#allocation8 + $0xbf8] sm:$0xff]
    %v872 = vld [vmem:[#allocation8 + $0xc00] sm:$0xff]
    %v873 = vld [vmem:[#allocation8 + $0xc08] sm:$0xff]
    %v874 = vld [vmem:[#allocation8 + $0xc10] sm:$0xff]
    %v875 = vld [vmem:[#allocation8 + $0xc18] sm:$0xff]
    %v876 = vld [vmem:[#allocation8 + $0xc20] sm:$0xff]
    %v877 = vld [vmem:[#allocation8 + $0xc28] sm:$0xff]
    %v878 = vld [vmem:[#allocation8 + $0xc30] sm:$0xff]
    %v879 = vld [vmem:[#allocation8 + $0xc38] sm:$0xff]
    %v880 = vld [vmem:[#allocation8 + $0xc40] sm:$0xff]
    %v881 = vld [vmem:[#allocation8 + $0xc48] sm:$0xff]
    %v882 = vld [vmem:[#allocation8 + $0xc50] sm:$0xff]
    %v883 = vld [vmem:[#allocation8 + $0xc58] sm:$0xff]
    %v884 = vld [vmem:[#allocation8 + $0xc60] sm:$0xff]
    %v885 = vld [vmem:[#allocation8 + $0xc68] sm:$0xff]
    %v886 = vld [vmem:[#allocation8 + $0xc70] sm:$0xff]
    %v887 = vld [vmem:[#allocation8 + $0xc78] sm:$0xff]
    %v888 = vld [vmem:[#allocation8 + $0xc80] sm:$0xff]
    %v889 = vld [vmem:[#allocation8 + $0xc88] sm:$0xff]
    %v890 = vld [vmem:[#allocation8 + $0xc90] sm:$0xff]
    %v891 = vld [vmem:[#allocation8 + $0xc98] sm:$0xff]
    %v892 = vld [vmem:[#allocation8 + $0xca0] sm:$0xff]
    %v893 = vld [vmem:[#allocation8 + $0xca8] sm:$0xff]
    %v894 = vld [vmem:[#allocation8 + $0xcb0] sm:$0xff]
    %v895 = vld [vmem:[#allocation8 + $0xcb8] sm:$0xff]
    %v896 = vld [vmem:[#allocation8 + $0xcc0] sm:$0xff]
    %v897 = vld [vmem:[#allocation8 + $0xcc8] sm:$0xff]
    %v898 = vld [vmem:[#allocation8 + $0xcd0] sm:$0xff]
    %v899 = vld [vmem:[#allocation8 + $0xcd8] sm:$0xff]
    %v900 = vld [vmem:[#allocation8 + $0xce0] sm:$0xff]
    %v901 = vld [vmem:[#allocation8 + $0xce8] sm:$0xff]
    %v902 = vld [vmem:[#allocation8 + $0xcf0] sm:$0xff]
    %v903 = vld [vmem:[#allocation8 + $0xcf8] sm:$0xff]
    %v904 = vld [vmem:[#allocation8 + $0xd00] sm:$0xff]
    %v905 = vld [vmem:[#allocation8 + $0xd08] sm:$0xff]
    %v906 = vld [vmem:[#allocation8 + $0xd10] sm:$0xff]
    %v907 = vld [vmem:[#allocation8 + $0xd18] sm:$0xff]
    %v908 = vld [vmem:[#allocation8 + $0xd20] sm:$0xff]
    %v909 = vld [vmem:[#allocation8 + $0xd28] sm:$0xff]
    %v910 = vld [vmem:[#allocation8 + $0xd30] sm:$0xff]
    %v911 = vld [vmem:[#allocation8 + $0xd38] sm:$0xff]
    %v912 = vld [vmem:[#allocation8 + $0xd40] sm:$0xff]
    %v913 = vld [vmem:[#allocation8 + $0xd48] sm:$0xff]
    %v914 = vld [vmem:[#allocation8 + $0xd50] sm:$0xff]
    %v915 = vld [vmem:[#allocation8 + $0xd58] sm:$0xff]
    %v916 = vld [vmem:[#allocation8 + $0xd60] sm:$0xff]
    %v917 = vld [vmem:[#allocation8 + $0xd68] sm:$0xff]
    %v918 = vld [vmem:[#allocation8 + $0xd70] sm:$0xff]
    %v919 = vld [vmem:[#allocation8 + $0xd78] sm:$0xff]
    %v920 = vld [vmem:[#allocation8 + $0xd80] sm:$0xff]
    %v921 = vld [vmem:[#allocation8 + $0xd88] sm:$0xff]
    %v922 = vld [vmem:[#allocation8 + $0xd90] sm:$0xff]
    %v923 = vld [vmem:[#allocation8 + $0xd98] sm:$0xff]
    %v924 = vld [vmem:[#allocation8 + $0xda0] sm:$0xff]
    %v925 = vld [vmem:[#allocation8 + $0xda8] sm:$0xff]
    %v926 = vld [vmem:[#allocation8 + $0xdb0] sm:$0xff]
    %v927 = vld [vmem:[#allocation8 + $0xdb8] sm:$0xff]
    %v928 = vld [vmem:[#allocation8 + $0xdc0] sm:$0xff]
    %v929 = vld [vmem:[#allocation8 + $0xdc8] sm:$0xff]
    %v930 = vld [vmem:[#allocation8 + $0xdd0] sm:$0xff]
    %v931 = vld [vmem:[#allocation8 + $0xdd8] sm:$0xff]
    %v932 = vld [vmem:[#allocation8 + $0xde0] sm:$0xff]
    %v933 = vld [vmem:[#allocation8 + $0xde8] sm:$0xff]
    %v934 = vld [vmem:[#allocation8 + $0xdf0] sm:$0xff]
    %v935 = vld [vmem:[#allocation8 + $0xdf8] sm:$0xff]
    %v936 = vld [vmem:[#allocation8 + $0xe00] sm:$0xff]
    %v937 = vld [vmem:[#allocation8 + $0xe08] sm:$0xff]
    %v938 = vld [vmem:[#allocation8 + $0xe10] sm:$0xff]
    %v939 = vld [vmem:[#allocation8 + $0xe18] sm:$0xff]
    %v940 = vld [vmem:[#allocation8 + $0xe20] sm:$0xff]
    %v941 = vld [vmem:[#allocation8 + $0xe28] sm:$0xff]
    %v942 = vld [vmem:[#allocation8 + $0xe30] sm:$0xff]
    %v943 = vld [vmem:[#allocation8 + $0xe38] sm:$0xff]
    %v944 = vld [vmem:[#allocation8 + $0xe40] sm:$0xff]
    %v945 = vld [vmem:[#allocation8 + $0xe48] sm:$0xff]
    %v946 = vld [vmem:[#allocation8 + $0xe50] sm:$0xff]
    %v947 = vld [vmem:[#allocation8 + $0xe58] sm:$0xff]
    %v948 = vld [vmem:[#allocation8 + $0xe60] sm:$0xff]
    %v949 = vld [vmem:[#allocation8 + $0xe68] sm:$0xff]
    %v950 = vld [vmem:[#allocation8 + $0xe70] sm:$0xff]
    %v951 = vld [vmem:[#allocation8 + $0xe78] sm:$0xff]
    %v952 = vld [vmem:[#allocation8 + $0xe80] sm:$0xff]
    %v953 = vld [vmem:[#allocation8 + $0xe88] sm:$0xff]
    %v954 = vld [vmem:[#allocation8 + $0xe90] sm:$0xff]
    %v955 = vld [vmem:[#allocation8 + $0xe98] sm:$0xff]
    %v956 = vld [vmem:[#allocation8 + $0xea0] sm:$0xff]
    %v957 = vld [vmem:[#allocation8 + $0xea8] sm:$0xff]
    %v958 = vld [vmem:[#allocation8 + $0xeb0] sm:$0xff]
    %v959 = vld [vmem:[#allocation8 + $0xeb8] sm:$0xff]
    %v960 = vld [vmem:[#allocation8 + $0xec0] sm:$0xff]
    %v961 = vld [vmem:[#allocation8 + $0xec8] sm:$0xff]
    %v962 = vld [vmem:[#allocation8 + $0xed0] sm:$0xff]
    %v963 = vld [vmem:[#allocation8 + $0xed8] sm:$0xff]
    %v964 = vld [vmem:[#allocation8 + $0xee0] sm:$0xff]
    %v965 = vld [vmem:[#allocation8 + $0xee8] sm:$0xff]
    %v966 = vld [vmem:[#allocation8 + $0xef0] sm:$0xff]
    %v967 = vld [vmem:[#allocation8 + $0xef8] sm:$0xff]
    %v968 = vld [vmem:[#allocation8 + $0xf00] sm:$0xff]
    %v969 = vld [vmem:[#allocation8 + $0xf08] sm:$0xff]
    %v970 = vld [vmem:[#allocation8 + $0xf10] sm:$0xff]
    %v971 = vld [vmem:[#allocation8 + $0xf18] sm:$0xff]
    %v972 = vld [vmem:[#allocation8 + $0xf20] sm:$0xff]
    %v973 = vld [vmem:[#allocation8 + $0xf28] sm:$0xff]
    %v974 = vld [vmem:[#allocation8 + $0xf30] sm:$0xff]
    %v975 = vld [vmem:[#allocation8 + $0xf38] sm:$0xff]
    %v976 = vld [vmem:[#allocation8 + $0xf40] sm:$0xff]
    %v977 = vld [vmem:[#allocation8 + $0xf48] sm:$0xff]
    %v978 = vld [vmem:[#allocation8 + $0xf50] sm:$0xff]
    %v979 = vld [vmem:[#allocation8 + $0xf58] sm:$0xff]
    %v980 = vld [vmem:[#allocation8 + $0xf60] sm:$0xff]
    %v981 = vld [vmem:[#allocation8 + $0xf68] sm:$0xff]
    %v982 = vld [vmem:[#allocation8 + $0xf70] sm:$0xff]
    %v983 = vld [vmem:[#allocation8 + $0xf78] sm:$0xff]
    %v984 = vld [vmem:[#allocation8 + $0xf80] sm:$0xff]
    %v985 = vld [vmem:[#allocation8 + $0xf88] sm:$0xff]
    %v986 = vld [vmem:[#allocation8 + $0xf90] sm:$0xff]
    %v987 = vld [vmem:[#allocation8 + $0xf98] sm:$0xff]
    %v988 = vld [vmem:[#allocation8 + $0xfa0] sm:$0xff]
    %v989 = vld [vmem:[#allocation8 + $0xfa8] sm:$0xff]
    %v990 = vld [vmem:[#allocation8 + $0xfb0] sm:$0xff]
    %v991 = vld [vmem:[#allocation8 + $0xfb8] sm:$0xff]
    %v992 = vld [vmem:[#allocation8 + $0xfc0] sm:$0xff]
    %v993 = vld [vmem:[#allocation8 + $0xfc8] sm:$0xff]
    %v994 = vld [vmem:[#allocation8 + $0xfd0] sm:$0xff]
    %v995 = vld [vmem:[#allocation8 + $0xfd8] sm:$0xff]
    %v996 = vld [vmem:[#allocation8 + $0xfe0] sm:$0xff]
    %v997 = vld [vmem:[#allocation8 + $0xfe8] sm:$0xff]
    %v998 = vld [vmem:[#allocation8 + $0xff0] sm:$0xff]
    %v999 = vld [vmem:[#allocation8 + $0xff8] sm:$0xff]
    %v1000 = vld [vmem:[#allocation8 + $0x1000] sm:$0xff]
    %v1001 = vld [vmem:[#allocation8 + $0x1008] sm:$0xff]
    %v1002 = vld [vmem:[#allocation8 + $0x1010] sm:$0xff]
    %v1003 = vld [vmem:[#allocation8 + $0x1018] sm:$0xff]
    %v1004 = vld [vmem:[#allocation8 + $0x1020] sm:$0xff]
    %v1005 = vld [vmem:[#allocation8 + $0x1028] sm:$0xff]
    %v1006 = vld [vmem:[#allocation8 + $0x1030] sm:$0xff]
    %v1007 = vld [vmem:[#allocation8 + $0x1038] sm:$0xff]
    %v1008 = vld [vmem:[#allocation8 + $0x1040] sm:$0xff]
    %v1009 = vld [vmem:[#allocation8 + $0x1048] sm:$0xff]
    %v1010 = vld [vmem:[#allocation8 + $0x1050] sm:$0xff]
    %v1011 = vld [vmem:[#allocation8 + $0x1058] sm:$0xff]
    %v1012 = vld [vmem:[#allocation8 + $0x1060] sm:$0xff]
    %v1013 = vld [vmem:[#allocation8 + $0x1068] sm:$0xff]
    %v1014 = vld [vmem:[#allocation8 + $0x1070] sm:$0xff]
    %v1015 = vld [vmem:[#allocation8 + $0x1078] sm:$0xff]
    %v1016 = vld [vmem:[#allocation8 + $0x1080] sm:$0xff]
    %v1017 = vld [vmem:[#allocation8 + $0x1088] sm:$0xff]
    %v1018 = vld [vmem:[#allocation8 + $0x1090] sm:$0xff]
    %v1019 = vld [vmem:[#allocation8 + $0x1098] sm:$0xff]
    %v1020 = vld [vmem:[#allocation8 + $0x10a0] sm:$0xff]
    %v1021 = vld [vmem:[#allocation8 + $0x10a8] sm:$0xff]
    %v1022 = vld [vmem:[#allocation8 + $0x10b0] sm:$0xff]
    %v1023 = vld [vmem:[#allocation8 + $0x10b8] sm:$0xff]
    %v1024 = vld [vmem:[#allocation8 + $0x10c0] sm:$0xff]
    %v1025 = vld [vmem:[#allocation8 + $0x10c8] sm:$0xff]
    %v1026 = vld [vmem:[#allocation8 + $0x10d0] sm:$0xff]
    %v1027 = vld [vmem:[#allocation8 + $0x10d8] sm:$0xff]
    %v1028 = vld [vmem:[#allocation8 + $0x10e0] sm:$0xff]
    %v1029 = vld [vmem:[#allocation8 + $0x10e8] sm:$0xff]
    %v1030 = vld [vmem:[#allocation8 + $0x10f0] sm:$0xff]
    %v1031 = vld [vmem:[#allocation8 + $0x10f8] sm:$0xff]
    %v1032 = vld [vmem:[#allocation8 + $0x1100] sm:$0xff]
    %v1033 = vld [vmem:[#allocation8 + $0x1108] sm:$0xff]
    %v1034 = vld [vmem:[#allocation8 + $0x1110] sm:$0xff]
    %v1035 = vld [vmem:[#allocation8 + $0x1118] sm:$0xff]
    %v1036 = vld [vmem:[#allocation8 + $0x1120] sm:$0xff]
    %v1037 = vld [vmem:[#allocation8 + $0x1128] sm:$0xff]
    %v1038 = vld [vmem:[#allocation8 + $0x1130] sm:$0xff]
    %v1039 = vld [vmem:[#allocation8 + $0x1138] sm:$0xff]
    %v1040 = vld [vmem:[#allocation8 + $0x1140] sm:$0xff]
    %v1041 = vld [vmem:[#allocation8 + $0x1148] sm:$0xff]
    %v1042 = vld [vmem:[#allocation8 + $0x1150] sm:$0xff]
    %v1043 = vld [vmem:[#allocation8 + $0x1158] sm:$0xff]
    %v1044 = vld [vmem:[#allocation8 + $0x1160] sm:$0xff]
    %v1045 = vld [vmem:[#allocation8 + $0x1168] sm:$0xff]
    %v1046 = vld [vmem:[#allocation8 + $0x1170] sm:$0xff]
    %v1047 = vld [vmem:[#allocation8 + $0x1178] sm:$0xff]
    %v1048 = vld [vmem:[#allocation8 + $0x1180] sm:$0xff]
    %v1049 = vld [vmem:[#allocation8 + $0x1188] sm:$0xff]
    %v1050 = vld [vmem:[#allocation8 + $0x1190] sm:$0xff]
    %v1051 = vld [vmem:[#allocation8 + $0x1198] sm:$0xff]
    %v1052 = vld [vmem:[#allocation8 + $0x11a0] sm:$0xff]
    %v1053 = vld [vmem:[#allocation8 + $0x11a8] sm:$0xff]
    %v1054 = vld [vmem:[#allocation8 + $0x11b0] sm:$0xff]
    %v1055 = vld [vmem:[#allocation8 + $0x11b8] sm:$0xff]
    %v1056 = vld [vmem:[#allocation8 + $0x11c0] sm:$0xff]
    %v1057 = vld [vmem:[#allocation8 + $0x11c8] sm:$0xff]
    %v1058 = vld [vmem:[#allocation8 + $0x11d0] sm:$0xff]
    %v1059 = vld [vmem:[#allocation8 + $0x11d8] sm:$0xff]
    %v1060 = vld [vmem:[#allocation8 + $0x11e0] sm:$0xff]
    %v1061 = vld [vmem:[#allocation8 + $0x11e8] sm:$0xff]
    %v1062 = vld [vmem:[#allocation8 + $0x11f0] sm:$0xff]
    %v1063 = vld [vmem:[#allocation8 + $0x11f8] sm:$0xff]
    %v1064 = vld [vmem:[#allocation8 + $0x1200] sm:$0xff]
    %v1065 = vld [vmem:[#allocation8 + $0x1208] sm:$0xff]
    %v1066 = vld [vmem:[#allocation8 + $0x1210] sm:$0xff]
    %v1067 = vld [vmem:[#allocation8 + $0x1218] sm:$0xff]
    %v1068 = vld [vmem:[#allocation8 + $0x1220] sm:$0xff]
    %v1069 = vld [vmem:[#allocation8 + $0x1228] sm:$0xff]
    %v1070 = vld [vmem:[#allocation8 + $0x1230] sm:$0xff]
    %v1071 = vld [vmem:[#allocation8 + $0x1238] sm:$0xff]
    %v1072 = vld [vmem:[#allocation8 + $0x1240] sm:$0xff]
    %v1073 = vld [vmem:[#allocation8 + $0x1248] sm:$0xff]
    %v1074 = vld [vmem:[#allocation8 + $0x1250] sm:$0xff]
    %v1075 = vld [vmem:[#allocation8 + $0x1258] sm:$0xff]
    %v1076 = vld [vmem:[#allocation8 + $0x1260] sm:$0xff]
    %v1077 = vld [vmem:[#allocation8 + $0x1268] sm:$0xff]
    %v1078 = vld [vmem:[#allocation8 + $0x1270] sm:$0xff]
    %v1079 = vld [vmem:[#allocation8 + $0x1278] sm:$0xff]
    %v1080 = vld [vmem:[#allocation8 + $0x1280] sm:$0xff]
    %v1081 = vld [vmem:[#allocation8 + $0x1288] sm:$0xff]
    %v1082 = vld [vmem:[#allocation8 + $0x1290] sm:$0xff]
    %v1083 = vld [vmem:[#allocation8 + $0x1298] sm:$0xff]
    %v1084 = vld [vmem:[#allocation8 + $0x12a0] sm:$0xff]
    %v1085 = vld [vmem:[#allocation8 + $0x12a8] sm:$0xff]
    %v1086 = vld [vmem:[#allocation8 + $0x12b0] sm:$0xff]
    %v1087 = vld [vmem:[#allocation8 + $0x12b8] sm:$0xff]
    %v1088 = vld [vmem:[#allocation8 + $0x12c0] sm:$0xff]
    %v1089 = vld [vmem:[#allocation8 + $0x12c8] sm:$0xff]
    %v1090 = vld [vmem:[#allocation8 + $0x12d0] sm:$0xff]
    %v1091 = vld [vmem:[#allocation8 + $0x12d8] sm:$0xff]
    %v1092 = vld [vmem:[#allocation8 + $0x12e0] sm:$0xff]
    %v1093 = vld [vmem:[#allocation8 + $0x12e8] sm:$0xff]
    %v1094 = vld [vmem:[#allocation8 + $0x12f0] sm:$0xff]
    %v1095 = vld [vmem:[#allocation8 + $0x12f8] sm:$0xff]
    %v1096 = vld [vmem:[#allocation8 + $0x1300] sm:$0xff]
    %v1097 = vld [vmem:[#allocation8 + $0x1308] sm:$0xff]
    %v1098 = vld [vmem:[#allocation8 + $0x1310] sm:$0xff]
    %v1099 = vld [vmem:[#allocation8 + $0x1318] sm:$0xff]
    %v1100 = vld [vmem:[#allocation8 + $0x1320] sm:$0xff]
    %v1101 = vld [vmem:[#allocation8 + $0x1328] sm:$0xff]
    %v1102 = vld [vmem:[#allocation8 + $0x1330] sm:$0xff]
    %v1103 = vld [vmem:[#allocation8 + $0x1338] sm:$0xff]
    %v1104 = vld [vmem:[#allocation8 + $0x1340] sm:$0xff]
    %v1105 = vld [vmem:[#allocation8 + $0x1348] sm:$0xff]
    %v1106 = vld [vmem:[#allocation8 + $0x1350] sm:$0xff]
    %v1107 = vld [vmem:[#allocation8 + $0x1358] sm:$0xff]
    %v1108 = vld [vmem:[#allocation8 + $0x1360] sm:$0xff]
    %v1109 = vld [vmem:[#allocation8 + $0x1368] sm:$0xff]
    %v1110 = vld [vmem:[#allocation8 + $0x1370] sm:$0xff]
    %v1111 = vld [vmem:[#allocation8 + $0x1378] sm:$0xff]
    %v1112 = vld [vmem:[#allocation8 + $0x1380] sm:$0xff]
    %v1113 = vld [vmem:[#allocation8 + $0x1388] sm:$0xff]
    %v1114 = vld [vmem:[#allocation8 + $0x1390] sm:$0xff]
    %v1115 = vld [vmem:[#allocation8 + $0x1398] sm:$0xff]
    %v1116 = vld [vmem:[#allocation8 + $0x13a0] sm:$0xff]
    %v1117 = vld [vmem:[#allocation8 + $0x13a8] sm:$0xff]
    %v1118 = vld [vmem:[#allocation8 + $0x13b0] sm:$0xff]
    %v1119 = vld [vmem:[#allocation8 + $0x13b8] sm:$0xff]
    %v1120 = vld [vmem:[#allocation8 + $0x13c0] sm:$0xff]
    %v1121 = vld [vmem:[#allocation8 + $0x13c8] sm:$0xff]
    %v1122 = vld [vmem:[#allocation8 + $0x13d0] sm:$0xff]
    %v1123 = vld [vmem:[#allocation8 + $0x13d8] sm:$0xff]
    %v1124 = vld [vmem:[#allocation8 + $0x13e0] sm:$0xff]
    %v1125 = vld [vmem:[#allocation8 + $0x13e8] sm:$0xff]
    %v1126 = vld [vmem:[#allocation8 + $0x13f0] sm:$0xff]
    %v1127 = vld [vmem:[#allocation8 + $0x13f8] sm:$0xff]
    %v1128 = vld [vmem:[#allocation8 + $0x1400] sm:$0xff]
    %v1129 = vld [vmem:[#allocation8 + $0x1408] sm:$0xff]
    %v1130 = vld [vmem:[#allocation8 + $0x1410] sm:$0xff]
    %v1131 = vld [vmem:[#allocation8 + $0x1418] sm:$0xff]
    %v1132 = vld [vmem:[#allocation8 + $0x1420] sm:$0xff]
    %v1133 = vld [vmem:[#allocation8 + $0x1428] sm:$0xff]
    %v1134 = vld [vmem:[#allocation8 + $0x1430] sm:$0xff]
    %v1135 = vld [vmem:[#allocation8 + $0x1438] sm:$0xff]
    %v1136 = vld [vmem:[#allocation8 + $0x1440] sm:$0xff]
    %v1137 = vld [vmem:[#allocation8 + $0x1448] sm:$0xff]
    %v1138 = vld [vmem:[#allocation8 + $0x1450] sm:$0xff]
    %v1139 = vld [vmem:[#allocation8 + $0x1458] sm:$0xff]
    %v1140 = vld [vmem:[#allocation8 + $0x1460] sm:$0xff]
    %v1141 = vld [vmem:[#allocation8 + $0x1468] sm:$0xff]
    %v1142 = vld [vmem:[#allocation8 + $0x1470] sm:$0xff]
    %v1143 = vld [vmem:[#allocation8 + $0x1478] sm:$0xff]
    %v1144 = vld [vmem:[#allocation8 + $0x1480] sm:$0xff]
    %v1145 = vld [vmem:[#allocation8 + $0x1488] sm:$0xff]
    %v1146 = vld [vmem:[#allocation8 + $0x1490] sm:$0xff]
    %v1147 = vld [vmem:[#allocation8 + $0x1498] sm:$0xff]
    %v1148 = vld [vmem:[#allocation8 + $0x14a0] sm:$0xff]
    %v1149 = vld [vmem:[#allocation8 + $0x14a8] sm:$0xff]
    %v1150 = vld [vmem:[#allocation8 + $0x14b0] sm:$0xff]
    %v1151 = vld [vmem:[#allocation8 + $0x14b8] sm:$0xff]
    %v1152 = vld [vmem:[#allocation8 + $0x14c0] sm:$0xff]
    %v1153 = vld [vmem:[#allocation8 + $0x14c8] sm:$0xff]
    %v1154 = vld [vmem:[#allocation8 + $0x14d0] sm:$0xff]
    %v1155 = vld [vmem:[#allocation8 + $0x14d8] sm:$0xff]
    %v1156 = vld [vmem:[#allocation8 + $0x14e0] sm:$0xff]
    %v1157 = vld [vmem:[#allocation8 + $0x14e8] sm:$0xff]
    %v1158 = vld [vmem:[#allocation8 + $0x14f0] sm:$0xff]
    %v1159 = vld [vmem:[#allocation8 + $0x14f8] sm:$0xff]
    %v1160 = vld [vmem:[#allocation8 + $0x1500] sm:$0xff]
    %v1161 = vld [vmem:[#allocation8 + $0x1508] sm:$0xff]
    %v1162 = vld [vmem:[#allocation8 + $0x1510] sm:$0xff]
    %v1163 = vld [vmem:[#allocation8 + $0x1518] sm:$0xff]
    %v1164 = vld [vmem:[#allocation8 + $0x1520] sm:$0xff]
    %v1165 = vld [vmem:[#allocation8 + $0x1528] sm:$0xff]
    %v1166 = vld [vmem:[#allocation8 + $0x1530] sm:$0xff]
    %v1167 = vld [vmem:[#allocation8 + $0x1538] sm:$0xff]
    %v1168 = vld [vmem:[#allocation8 + $0x1540] sm:$0xff]
    %v1169 = vld [vmem:[#allocation8 + $0x1548] sm:$0xff]
    %v1170 = vld [vmem:[#allocation8 + $0x1550] sm:$0xff]
    %v1171 = vld [vmem:[#allocation8 + $0x1558] sm:$0xff]
    %v1172 = vld [vmem:[#allocation8 + $0x1560] sm:$0xff]
    %v1173 = vld [vmem:[#allocation8 + $0x1568] sm:$0xff]
    %v1174 = vld [vmem:[#allocation8 + $0x1570] sm:$0xff]
    %v1175 = vld [vmem:[#allocation8 + $0x1578] sm:$0xff]
    %v1176 = vld [vmem:[#allocation8 + $0x1580] sm:$0xff]
    %v1177 = vld [vmem:[#allocation8 + $0x1588] sm:$0xff]
    %v1178 = vld [vmem:[#allocation8 + $0x1590] sm:$0xff]
    %v1179 = vld [vmem:[#allocation8 + $0x1598] sm:$0xff]
    %v1180 = vld [vmem:[#allocation8 + $0x15a0] sm:$0xff]
    %v1181 = vld [vmem:[#allocation8 + $0x15a8] sm:$0xff]
    %v1182 = vld [vmem:[#allocation8 + $0x15b0] sm:$0xff]
    %v1183 = vld [vmem:[#allocation8 + $0x15b8] sm:$0xff]
    %v1184 = vld [vmem:[#allocation8 + $0x15c0] sm:$0xff]
    %v1185 = vld [vmem:[#allocation8 + $0x15c8] sm:$0xff]
    %v1186 = vld [vmem:[#allocation8 + $0x15d0] sm:$0xff]
    %v1187 = vld [vmem:[#allocation8 + $0x15d8] sm:$0xff]
    %v1188 = vld [vmem:[#allocation8 + $0x15e0] sm:$0xff]
    %v1189 = vld [vmem:[#allocation8 + $0x15e8] sm:$0xff]
    %v1190 = vld [vmem:[#allocation8 + $0x15f0] sm:$0xff]
    %v1191 = vld [vmem:[#allocation8 + $0x15f8] sm:$0xff]
    %v1192 = vld [vmem:[#allocation8 + $0x1600] sm:$0xff]
    %v1193 = vld [vmem:[#allocation8 + $0x1608] sm:$0xff]
    %v1194 = vld [vmem:[#allocation8 + $0x1610] sm:$0xff]
    %v1195 = vld [vmem:[#allocation8 + $0x1618] sm:$0xff]
    %v1196 = vld [vmem:[#allocation8 + $0x1620] sm:$0xff]
    %v1197 = vld [vmem:[#allocation8 + $0x1628] sm:$0xff]
    %v1198 = vld [vmem:[#allocation8 + $0x1630] sm:$0xff]
    %v1199 = vld [vmem:[#allocation8 + $0x1638] sm:$0xff]
    %v1200 = vld [vmem:[#allocation8 + $0x1640] sm:$0xff]
    %v1201 = vld [vmem:[#allocation8 + $0x1648] sm:$0xff]
    %v1202 = vld [vmem:[#allocation8 + $0x1650] sm:$0xff]
    %v1203 = vld [vmem:[#allocation8 + $0x1658] sm:$0xff]
    %v1204 = vld [vmem:[#allocation8 + $0x1660] sm:$0xff]
    %v1205 = vld [vmem:[#allocation8 + $0x1668] sm:$0xff]
    %v1206 = vld [vmem:[#allocation8 + $0x1670] sm:$0xff]
    %v1207 = vld [vmem:[#allocation8 + $0x1678] sm:$0xff]
    %v1208 = vld [vmem:[#allocation8 + $0x1680] sm:$0xff]
    %v1209 = vld [vmem:[#allocation8 + $0x1688] sm:$0xff]
    %v1210 = vld [vmem:[#allocation8 + $0x1690] sm:$0xff]
    %v1211 = vld [vmem:[#allocation8 + $0x1698] sm:$0xff]
    %v1212 = vld [vmem:[#allocation8 + $0x16a0] sm:$0xff]
    %v1213 = vld [vmem:[#allocation8 + $0x16a8] sm:$0xff]
    %v1214 = vld [vmem:[#allocation8 + $0x16b0] sm:$0xff]
    %v1215 = vld [vmem:[#allocation8 + $0x16b8] sm:$0xff]
    %v1216 = vld [vmem:[#allocation8 + $0x16c0] sm:$0xff]
    %v1217 = vld [vmem:[#allocation8 + $0x16c8] sm:$0xff]
    %v1218 = vld [vmem:[#allocation8 + $0x16d0] sm:$0xff]
    %v1219 = vld [vmem:[#allocation8 + $0x16d8] sm:$0xff]
    %v1220 = vld [vmem:[#allocation8 + $0x16e0] sm:$0xff]
    %v1221 = vld [vmem:[#allocation8 + $0x16e8] sm:$0xff]
    %v1222 = vld [vmem:[#allocation8 + $0x16f0] sm:$0xff]
    %v1223 = vld [vmem:[#allocation8 + $0x16f8] sm:$0xff]
    %v1224 = vld [vmem:[#allocation8 + $0x1700] sm:$0xff]
    %v1225 = vld [vmem:[#allocation8 + $0x1708] sm:$0xff]
    %v1226 = vld [vmem:[#allocation8 + $0x1710] sm:$0xff]
    %v1227 = vld [vmem:[#allocation8 + $0x1718] sm:$0xff]
    %v1228 = vld [vmem:[#allocation8 + $0x1720] sm:$0xff]
    %v1229 = vld [vmem:[#allocation8 + $0x1728] sm:$0xff]
    %v1230 = vld [vmem:[#allocation8 + $0x1730] sm:$0xff]
    %v1231 = vld [vmem:[#allocation8 + $0x1738] sm:$0xff]
    %v1232 = vld [vmem:[#allocation8 + $0x1740] sm:$0xff]
    %v1233 = vld [vmem:[#allocation8 + $0x1748] sm:$0xff]
    %v1234 = vld [vmem:[#allocation8 + $0x1750] sm:$0xff]
    %v1235 = vld [vmem:[#allocation8 + $0x1758] sm:$0xff]
    %v1236 = vld [vmem:[#allocation8 + $0x1760] sm:$0xff]
    %v1237 = vld [vmem:[#allocation8 + $0x1768] sm:$0xff]
    %v1238 = vld [vmem:[#allocation8 + $0x1770] sm:$0xff]
    %v1239 = vld [vmem:[#allocation8 + $0x1778] sm:$0xff]
    %v1240 = vld [vmem:[#allocation8 + $0x1780] sm:$0xff]
    %v1241 = vld [vmem:[#allocation8 + $0x1788] sm:$0xff]
    %v1242 = vld [vmem:[#allocation8 + $0x1790] sm:$0xff]
    %v1243 = vld [vmem:[#allocation8 + $0x1798] sm:$0xff]
    %v1244 = vld [vmem:[#allocation8 + $0x17a0] sm:$0xff]
    %v1245 = vld [vmem:[#allocation8 + $0x17a8] sm:$0xff]
    %v1246 = vld [vmem:[#allocation8 + $0x17b0] sm:$0xff]
    %v1247 = vld [vmem:[#allocation8 + $0x17b8] sm:$0xff]
    %v1248 = vld [vmem:[#allocation8 + $0x17c0] sm:$0xff]
    %v1249 = vld [vmem:[#allocation8 + $0x17c8] sm:$0xff]
    %v1250 = vld [vmem:[#allocation8 + $0x17d0] sm:$0xff]
    %v1251 = vld [vmem:[#allocation8 + $0x17d8] sm:$0xff]
    %v1252 = vld [vmem:[#allocation8 + $0x17e0] sm:$0xff]
    %v1253 = vld [vmem:[#allocation8 + $0x17e8] sm:$0xff]
    %v1254 = vld [vmem:[#allocation8 + $0x17f0] sm:$0xff]
    %v1255 = vld [vmem:[#allocation8 + $0x17f8] sm:$0xff]
    %v1256 = vld [vmem:[#allocation8 + $0x1800] sm:$0xff]
    %v1257 = vld [vmem:[#allocation8 + $0x1808] sm:$0xff]
    %v1258 = vld [vmem:[#allocation8 + $0x1810] sm:$0xff]
    %v1259 = vld [vmem:[#allocation8 + $0x1818] sm:$0xff]
    %v1260 = vld [vmem:[#allocation8 + $0x1820] sm:$0xff]
    %v1261 = vld [vmem:[#allocation8 + $0x1828] sm:$0xff]
    %v1262 = vld [vmem:[#allocation8 + $0x1830] sm:$0xff]
    %v1263 = vld [vmem:[#allocation8 + $0x1838] sm:$0xff]
    %v1264 = vld [vmem:[#allocation8 + $0x1840] sm:$0xff]
    %v1265 = vld [vmem:[#allocation8 + $0x1848] sm:$0xff]
    %v1266 = vld [vmem:[#allocation8 + $0x1850] sm:$0xff]
    %v1267 = vld [vmem:[#allocation8 + $0x1858] sm:$0xff]
    %v1268 = vld [vmem:[#allocation8 + $0x1860] sm:$0xff]
    %v1269 = vld [vmem:[#allocation8 + $0x1868] sm:$0xff]
    %v1270 = vld [vmem:[#allocation8 + $0x1870] sm:$0xff]
    %v1271 = vld [vmem:[#allocation8 + $0x1878] sm:$0xff]
    %v1272 = vld [vmem:[#allocation8 + $0x1880] sm:$0xff]
    %v1273 = vld [vmem:[#allocation8 + $0x1888] sm:$0xff]
    %v1274 = vld [vmem:[#allocation8 + $0x1890] sm:$0xff]
    %v1275 = vld [vmem:[#allocation8 + $0x1898] sm:$0xff]
    %v1276 = vld [vmem:[#allocation8 + $0x18a0] sm:$0xff]
    %v1277 = vld [vmem:[#allocation8 + $0x18a8] sm:$0xff]
    %v1278 = vld [vmem:[#allocation8 + $0x18b0] sm:$0xff]
    %v1279 = vld [vmem:[#allocation8 + $0x18b8] sm:$0xff]
    %v1280 = vld [vmem:[#allocation8 + $0x18c0] sm:$0xff]
    %v1281 = vld [vmem:[#allocation8 + $0x18c8] sm:$0xff]
    %v1282 = vld [vmem:[#allocation8 + $0x18d0] sm:$0xff]
    %v1283 = vld [vmem:[#allocation8 + $0x18d8] sm:$0xff]
    %v1284 = vld [vmem:[#allocation8 + $0x18e0] sm:$0xff]
    %v1285 = vld [vmem:[#allocation8 + $0x18e8] sm:$0xff]
    %v1286 = vld [vmem:[#allocation8 + $0x18f0] sm:$0xff]
    %v1287 = vld [vmem:[#allocation8 + $0x18f8] sm:$0xff]
    %v1288 = vld [vmem:[#allocation8 + $0x1900] sm:$0xff]
    %v1289 = vld [vmem:[#allocation8 + $0x1908] sm:$0xff]
    %v1290 = vld [vmem:[#allocation8 + $0x1910] sm:$0xff]
    %v1291 = vld [vmem:[#allocation8 + $0x1918] sm:$0xff]
    %v1292 = vld [vmem:[#allocation8 + $0x1920] sm:$0xff]
    %v1293 = vld [vmem:[#allocation8 + $0x1928] sm:$0xff]
    %v1294 = vld [vmem:[#allocation8 + $0x1930] sm:$0xff]
    %v1295 = vld [vmem:[#allocation8 + $0x1938] sm:$0xff]
    %v1296 = vld [vmem:[#allocation8 + $0x1940] sm:$0xff]
    %v1297 = vld [vmem:[#allocation8 + $0x1948] sm:$0xff]
    %v1298 = vld [vmem:[#allocation8 + $0x1950] sm:$0xff]
    %v1299 = vld [vmem:[#allocation8 + $0x1958] sm:$0xff]
    %v1300 = vld [vmem:[#allocation8 + $0x1960] sm:$0xff]
    %v1301 = vld [vmem:[#allocation8 + $0x1968] sm:$0xff]
    %v1302 = vld [vmem:[#allocation8 + $0x1970] sm:$0xff]
    %v1303 = vld [vmem:[#allocation8 + $0x1978] sm:$0xff]
    %v1304 = vld [vmem:[#allocation8 + $0x1980] sm:$0xff]
    %v1305 = vld [vmem:[#allocation8 + $0x1988] sm:$0xff]
    %v1306 = vld [vmem:[#allocation8 + $0x1990] sm:$0xff]
    %v1307 = vld [vmem:[#allocation8 + $0x1998] sm:$0xff]
    %v1308 = vld [vmem:[#allocation8 + $0x19a0] sm:$0xff]
    %v1309 = vld [vmem:[#allocation8 + $0x19a8] sm:$0xff]
    %v1310 = vld [vmem:[#allocation8 + $0x19b0] sm:$0xff]
    %v1311 = vld [vmem:[#allocation8 + $0x19b8] sm:$0xff]
    %v1312 = vld [vmem:[#allocation8 + $0x19c0] sm:$0xff]
    %v1313 = vld [vmem:[#allocation8 + $0x19c8] sm:$0xff]
    %v1314 = vld [vmem:[#allocation8 + $0x19d0] sm:$0xff]
    %v1315 = vld [vmem:[#allocation8 + $0x19d8] sm:$0xff]
    %v1316 = vld [vmem:[#allocation8 + $0x19e0] sm:$0xff]
    %v1317 = vld [vmem:[#allocation8 + $0x19e8] sm:$0xff]
    %v1318 = vld [vmem:[#allocation8 + $0x19f0] sm:$0xff]
    %v1319 = vld [vmem:[#allocation8 + $0x19f8] sm:$0xff]
    %v1320 = vld [vmem:[#allocation8 + $0x1a00] sm:$0xff]
    %v1321 = vld [vmem:[#allocation8 + $0x1a08] sm:$0xff]
    %v1322 = vld [vmem:[#allocation8 + $0x1a10] sm:$0xff]
    %v1323 = vld [vmem:[#allocation8 + $0x1a18] sm:$0xff]
    %v1324 = vld [vmem:[#allocation8 + $0x1a20] sm:$0xff]
    %v1325 = vld [vmem:[#allocation8 + $0x1a28] sm:$0xff]
    %v1326 = vld [vmem:[#allocation8 + $0x1a30] sm:$0xff]
    %v1327 = vld [vmem:[#allocation8 + $0x1a38] sm:$0xff]
    %v1328 = vld [vmem:[#allocation8 + $0x1a40] sm:$0xff]
    %v1329 = vld [vmem:[#allocation8 + $0x1a48] sm:$0xff]
    %v1330 = vld [vmem:[#allocation8 + $0x1a50] sm:$0xff]
    %v1331 = vld [vmem:[#allocation8 + $0x1a58] sm:$0xff]
    %v1332 = vld [vmem:[#allocation8 + $0x1a60] sm:$0xff]
    %v1333 = vld [vmem:[#allocation8 + $0x1a68] sm:$0xff]
    %v1334 = vld [vmem:[#allocation8 + $0x1a70] sm:$0xff]
    %v1335 = vld [vmem:[#allocation8 + $0x1a78] sm:$0xff]
    %v1336 = vld [vmem:[#allocation8 + $0x1a80] sm:$0xff]
    %v1337 = vld [vmem:[#allocation8 + $0x1a88] sm:$0xff]
    %v1338 = vld [vmem:[#allocation8 + $0x1a90] sm:$0xff]
    %v1339 = vld [vmem:[#allocation8 + $0x1a98] sm:$0xff]
    %v1340 = vld [vmem:[#allocation8 + $0x1aa0] sm:$0xff]
    %v1341 = vld [vmem:[#allocation8 + $0x1aa8] sm:$0xff]
    %v1342 = vld [vmem:[#allocation8 + $0x1ab0] sm:$0xff]
    %v1343 = vld [vmem:[#allocation8 + $0x1ab8] sm:$0xff]
    %v1344 = vld [vmem:[#allocation8 + $0x1ac0] sm:$0xff]
    %v1345 = vld [vmem:[#allocation8 + $0x1ac8] sm:$0xff]
    %v1346 = vld [vmem:[#allocation8 + $0x1ad0] sm:$0xff]
    %v1347 = vld [vmem:[#allocation8 + $0x1ad8] sm:$0xff]
    %v1348 = vld [vmem:[#allocation8 + $0x1ae0] sm:$0xff]
    %v1349 = vld [vmem:[#allocation8 + $0x1ae8] sm:$0xff]
    %v1350 = vld [vmem:[#allocation8 + $0x1af0] sm:$0xff]
    %v1351 = vld [vmem:[#allocation8 + $0x1af8] sm:$0xff]
    %v1352 = vld [vmem:[#allocation8 + $0x1b00] sm:$0xff]
    %v1353 = vld [vmem:[#allocation8 + $0x1b08] sm:$0xff]
    %v1354 = vld [vmem:[#allocation8 + $0x1b10] sm:$0xff]
    %v1355 = vld [vmem:[#allocation8 + $0x1b18] sm:$0xff]
    %v1356 = vld [vmem:[#allocation8 + $0x1b20] sm:$0xff]
    %v1357 = vld [vmem:[#allocation8 + $0x1b28] sm:$0xff]
    %v1358 = vld [vmem:[#allocation8 + $0x1b30] sm:$0xff]
    %v1359 = vld [vmem:[#allocation8 + $0x1b38] sm:$0xff]
    %v1360 = vld [vmem:[#allocation8 + $0x1b40] sm:$0xff]
    %v1361 = vld [vmem:[#allocation8 + $0x1b48] sm:$0xff]
    %v1362 = vld [vmem:[#allocation8 + $0x1b50] sm:$0xff]
    %v1363 = vld [vmem:[#allocation8 + $0x1b58] sm:$0xff]
    %v1364 = vld [vmem:[#allocation8 + $0x1b60] sm:$0xff]
    %v1365 = vld [vmem:[#allocation8 + $0x1b68] sm:$0xff]
    %v1366 = vld [vmem:[#allocation8 + $0x1b70] sm:$0xff]
    %v1367 = vld [vmem:[#allocation8 + $0x1b78] sm:$0xff]
    %v1368 = vld [vmem:[#allocation8 + $0x1b80] sm:$0xff]
    %v1369 = vld [vmem:[#allocation8 + $0x1b88] sm:$0xff]
    %v1370 = vld [vmem:[#allocation8 + $0x1b90] sm:$0xff]
    %v1371 = vld [vmem:[#allocation8 + $0x1b98] sm:$0xff]
    %v1372 = vld [vmem:[#allocation8 + $0x1ba0] sm:$0xff]
    %v1373 = vld [vmem:[#allocation8 + $0x1ba8] sm:$0xff]
    %v1374 = vld [vmem:[#allocation8 + $0x1bb0] sm:$0xff]
    %v1375 = vld [vmem:[#allocation8 + $0x1bb8] sm:$0xff]
    %v1376 = vld [vmem:[#allocation8 + $0x1bc0] sm:$0xff]
    %v1377 = vld [vmem:[#allocation8 + $0x1bc8] sm:$0xff]
    %v1378 = vld [vmem:[#allocation8 + $0x1bd0] sm:$0xff]
    %v1379 = vld [vmem:[#allocation8 + $0x1bd8] sm:$0xff]
    %v1380 = vld [vmem:[#allocation8 + $0x1be0] sm:$0xff]
    %v1381 = vld [vmem:[#allocation8 + $0x1be8] sm:$0xff]
    %v1382 = vld [vmem:[#allocation8 + $0x1bf0] sm:$0xff]
    %v1383 = vld [vmem:[#allocation8 + $0x1bf8] sm:$0xff]
    %v1384 = vld [vmem:[#allocation8 + $0x1c00] sm:$0xff]
    %v1385 = vld [vmem:[#allocation8 + $0x1c08] sm:$0xff]
    %v1386 = vld [vmem:[#allocation8 + $0x1c10] sm:$0xff]
    %v1387 = vld [vmem:[#allocation8 + $0x1c18] sm:$0xff]
    %v1388 = vld [vmem:[#allocation8 + $0x1c20] sm:$0xff]
    %v1389 = vld [vmem:[#allocation8 + $0x1c28] sm:$0xff]
    %v1390 = vld [vmem:[#allocation8 + $0x1c30] sm:$0xff]
    %v1391 = vld [vmem:[#allocation8 + $0x1c38] sm:$0xff]
    %v1392 = vld [vmem:[#allocation8 + $0x1c40] sm:$0xff]
    %v1393 = vld [vmem:[#allocation8 + $0x1c48] sm:$0xff]
    %v1394 = vld [vmem:[#allocation8 + $0x1c50] sm:$0xff]
    %v1395 = vld [vmem:[#allocation8 + $0x1c58] sm:$0xff]
    %v1396 = vld [vmem:[#allocation8 + $0x1c60] sm:$0xff]
    %v1397 = vld [vmem:[#allocation8 + $0x1c68] sm:$0xff]
    %v1398 = vld [vmem:[#allocation8 + $0x1c70] sm:$0xff]
    %v1399 = vld [vmem:[#allocation8 + $0x1c78] sm:$0xff]
    %v1400 = vld [vmem:[#allocation8 + $0x1c80] sm:$0xff]
    %v1401 = vld [vmem:[#allocation8 + $0x1c88] sm:$0xff]
    %v1402 = vld [vmem:[#allocation8 + $0x1c90] sm:$0xff]
    %v1403 = vld [vmem:[#allocation8 + $0x1c98] sm:$0xff]
    %v1404 = vld [vmem:[#allocation8 + $0x1ca0] sm:$0xff]
    %v1405 = vld [vmem:[#allocation8 + $0x1ca8] sm:$0xff]
    %v1406 = vld [vmem:[#allocation8 + $0x1cb0] sm:$0xff]
    %v1407 = vld [vmem:[#allocation8 + $0x1cb8] sm:$0xff]
    %v1408 = vld [vmem:[#allocation8 + $0x1cc0] sm:$0xff]
    %v1409 = vld [vmem:[#allocation8 + $0x1cc8] sm:$0xff]
    %v1410 = vld [vmem:[#allocation8 + $0x1cd0] sm:$0xff]
    %v1411 = vld [vmem:[#allocation8 + $0x1cd8] sm:$0xff]
    %v1412 = vld [vmem:[#allocation8 + $0x1ce0] sm:$0xff]
    %v1413 = vld [vmem:[#allocation8 + $0x1ce8] sm:$0xff]
    %v1414 = vld [vmem:[#allocation8 + $0x1cf0] sm:$0xff]
    %v1415 = vld [vmem:[#allocation8 + $0x1cf8] sm:$0xff]
    %v1416 = vld [vmem:[#allocation8 + $0x1d00] sm:$0xff]
    %v1417 = vld [vmem:[#allocation8 + $0x1d08] sm:$0xff]
    %v1418 = vld [vmem:[#allocation8 + $0x1d10] sm:$0xff]
    %v1419 = vld [vmem:[#allocation8 + $0x1d18] sm:$0xff]
    %v1420 = vld [vmem:[#allocation8 + $0x1d20] sm:$0xff]
    %v1421 = vld [vmem:[#allocation8 + $0x1d28] sm:$0xff]
    %v1422 = vld [vmem:[#allocation8 + $0x1d30] sm:$0xff]
    %v1423 = vld [vmem:[#allocation8 + $0x1d38] sm:$0xff]
    %v1424 = vld [vmem:[#allocation8 + $0x1d40] sm:$0xff]
    %v1425 = vld [vmem:[#allocation8 + $0x1d48] sm:$0xff]
    %v1426 = vld [vmem:[#allocation8 + $0x1d50] sm:$0xff]
    %v1427 = vld [vmem:[#allocation8 + $0x1d58] sm:$0xff]
    %v1428 = vld [vmem:[#allocation8 + $0x1d60] sm:$0xff]
    %v1429 = vld [vmem:[#allocation8 + $0x1d68] sm:$0xff]
    %v1430 = vld [vmem:[#allocation8 + $0x1d70] sm:$0xff]
    %v1431 = vld [vmem:[#allocation8 + $0x1d78] sm:$0xff]
    %v1432 = vld [vmem:[#allocation8 + $0x1d80] sm:$0xff]
    %v1433 = vld [vmem:[#allocation8 + $0x1d88] sm:$0xff]
    %v1434 = vld [vmem:[#allocation8 + $0x1d90] sm:$0xff]
    %v1435 = vld [vmem:[#allocation8 + $0x1d98] sm:$0xff]
    %v1436 = vld [vmem:[#allocation8 + $0x1da0] sm:$0xff]
    %v1437 = vld [vmem:[#allocation8 + $0x1da8] sm:$0xff]
    %v1438 = vld [vmem:[#allocation8 + $0x1db0] sm:$0xff]
    %v1439 = vld [vmem:[#allocation8 + $0x1db8] sm:$0xff]
    %v1440 = vld [vmem:[#allocation8 + $0x1dc0] sm:$0xff]
    %v1441 = vld [vmem:[#allocation8 + $0x1dc8] sm:$0xff]
    %v1442 = vld [vmem:[#allocation8 + $0x1dd0] sm:$0xff]
    %v1443 = vld [vmem:[#allocation8 + $0x1dd8] sm:$0xff]
    %v1444 = vld [vmem:[#allocation8 + $0x1de0] sm:$0xff]
    %v1445 = vld [vmem:[#allocation8 + $0x1de8] sm:$0xff]
    %v1446 = vld [vmem:[#allocation8 + $0x1df0] sm:$0xff]
    %v1447 = vld [vmem:[#allocation8 + $0x1df8] sm:$0xff]
    %v1448 = vld [vmem:[#allocation8 + $0x1e00] sm:$0xff]
    %v1449 = vld [vmem:[#allocation8 + $0x1e08] sm:$0xff]
    %v1450 = vld [vmem:[#allocation8 + $0x1e10] sm:$0xff]
    %v1451 = vld [vmem:[#allocation8 + $0x1e18] sm:$0xff]
    %v1452 = vld [vmem:[#allocation8 + $0x1e20] sm:$0xff]
    %v1453 = vld [vmem:[#allocation8 + $0x1e28] sm:$0xff]
    %v1454 = vld [vmem:[#allocation8 + $0x1e30] sm:$0xff]
    %v1455 = vld [vmem:[#allocation8 + $0x1e38] sm:$0xff]
    %v1456 = vld [vmem:[#allocation8 + $0x1e40] sm:$0xff]
    %v1457 = vld [vmem:[#allocation8 + $0x1e48] sm:$0xff]
    %v1458 = vld [vmem:[#allocation8 + $0x1e50] sm:$0xff]
    %v1459 = vld [vmem:[#allocation8 + $0x1e58] sm:$0xff]
    %v1460 = vld [vmem:[#allocation8 + $0x1e60] sm:$0xff]
    %v1461 = vld [vmem:[#allocation8 + $0x1e68] sm:$0xff]
    %v1462 = vld [vmem:[#allocation8 + $0x1e70] sm:$0xff]
    %v1463 = vld [vmem:[#allocation8 + $0x1e78] sm:$0xff]
    %v1464 = vld [vmem:[#allocation8 + $0x1e80] sm:$0xff]
    %v1465 = vld [vmem:[#allocation8 + $0x1e88] sm:$0xff]
    %v1466 = vld [vmem:[#allocation8 + $0x1e90] sm:$0xff]
    %v1467 = vld [vmem:[#allocation8 + $0x1e98] sm:$0xff]
    %v1468 = vld [vmem:[#allocation8 + $0x1ea0] sm:$0xff]
    %v1469 = vld [vmem:[#allocation8 + $0x1ea8] sm:$0xff]
    %v1470 = vld [vmem:[#allocation8 + $0x1eb0] sm:$0xff]
    %v1471 = vld [vmem:[#allocation8 + $0x1eb8] sm:$0xff]
    %v1472 = vld [vmem:[#allocation8 + $0x1ec0] sm:$0xff]
    %v1473 = vld [vmem:[#allocation8 + $0x1ec8] sm:$0xff]
    %v1474 = vld [vmem:[#allocation8 + $0x1ed0] sm:$0xff]
    %v1475 = vld [vmem:[#allocation8 + $0x1ed8] sm:$0xff]
    %v1476 = vld [vmem:[#allocation8 + $0x1ee0] sm:$0xff]
    %v1477 = vld [vmem:[#allocation8 + $0x1ee8] sm:$0xff]
    %v1478 = vld [vmem:[#allocation8 + $0x1ef0] sm:$0xff]
    %v1479 = vld [vmem:[#allocation8 + $0x1ef8] sm:$0xff]
    %v1480 = vld [vmem:[#allocation8 + $0x1f00] sm:$0xff]
    %v1481 = vld [vmem:[#allocation8 + $0x1f08] sm:$0xff]
    %v1482 = vld [vmem:[#allocation8 + $0x1f10] sm:$0xff]
    %v1483 = vld [vmem:[#allocation8 + $0x1f18] sm:$0xff]
    %v1484 = vld [vmem:[#allocation8 + $0x1f20] sm:$0xff]
    %v1485 = vld [vmem:[#allocation8 + $0x1f28] sm:$0xff]
    %v1486 = vld [vmem:[#allocation8 + $0x1f30] sm:$0xff]
    %v1487 = vld [vmem:[#allocation8 + $0x1f38] sm:$0xff]
    %v1488 = vld [vmem:[#allocation8 + $0x1f40] sm:$0xff]
    %v1489 = vld [vmem:[#allocation8 + $0x1f48] sm:$0xff]
    %v1490 = vld [vmem:[#allocation8 + $0x1f50] sm:$0xff]
    %v1491 = vld [vmem:[#allocation8 + $0x1f58] sm:$0xff]
    %v1492 = vld [vmem:[#allocation8 + $0x1f60] sm:$0xff]
    %v1493 = vld [vmem:[#allocation8 + $0x1f68] sm:$0xff]
    %v1494 = vld [vmem:[#allocation8 + $0x1f70] sm:$0xff]
    %v1495 = vld [vmem:[#allocation8 + $0x1f78] sm:$0xff]
    %v1496 = vld [vmem:[#allocation8 + $0x1f80] sm:$0xff]
    %v1497 = vld [vmem:[#allocation8 + $0x1f88] sm:$0xff]
    %v1498 = vld [vmem:[#allocation8 + $0x1f90] sm:$0xff]
    %v1499 = vld [vmem:[#allocation8 + $0x1f98] sm:$0xff]
    %v1500 = vld [vmem:[#allocation8 + $0x1fa0] sm:$0xff]
    %v1501 = vld [vmem:[#allocation8 + $0x1fa8] sm:$0xff]
    %v1502 = vld [vmem:[#allocation8 + $0x1fb0] sm:$0xff]
    %v1503 = vld [vmem:[#allocation8 + $0x1fb8] sm:$0xff]
    %v1504 = vld [vmem:[#allocation8 + $0x1fc0] sm:$0xff]
    %v1505 = vld [vmem:[#allocation8 + $0x1fc8] sm:$0xff]
    %v1506 = vld [vmem:[#allocation8 + $0x1fd0] sm:$0xff]
    %v1507 = vld [vmem:[#allocation8 + $0x1fd8] sm:$0xff]
    %v1508 = vld [vmem:[#allocation8 + $0x1fe0] sm:$0xff]
    %v1509 = vld [vmem:[#allocation8 + $0x1fe8] sm:$0xff]
    %v1510 = vld [vmem:[#allocation8 + $0x1ff0] sm:$0xff]
    %v1511 = vld [vmem:[#allocation8 + $0x1ff8] sm:$0xff]
    %v1512 = vld [vmem:[#allocation10] sm:$0xff]
    %v1514 = vlaneseq
    %v1515 = vshrl.u32 %v1514, 7
    %v1516 = vsub.s32 0, %v1515
    %v1517 = vrot.slane %v1512, %v1516
    %v1518 = vlaneseq
    %v1519 = vshrl.u32 %v1518, 7
    %v1520 = vsub.s32 1, %v1519
    %v1521 = vrot.slane %v1512, %v1520
    %v1522 = vlaneseq
    %v1523 = vshrl.u32 %v1522, 7
    %v1524 = vsub.s32 2, %v1523
    %v1525 = vrot.slane %v1512, %v1524
    %v1526 = vlaneseq
    %v1527 = vshrl.u32 %v1526, 7
    %v1528 = vsub.s32 3, %v1527
    %v1529 = vrot.slane %v1512, %v1528
    %v1530 = vlaneseq
    %v1531 = vshrl.u32 %v1530, 7
    %v1532 = vsub.s32 4, %v1531
    %v1533 = vrot.slane %v1512, %v1532
    %v1534 = vlaneseq
    %v1535 = vshrl.u32 %v1534, 7
    %v1536 = vsub.s32 5, %v1535
    %v1537 = vrot.slane %v1512, %v1536
    %v1538 = vlaneseq
    %v1539 = vshrl.u32 %v1538, 7
    %v1540 = vsub.s32 6, %v1539
    %v1541 = vrot.slane %v1512, %v1540
    %v1542 = vlaneseq
    %v1543 = vshrl.u32 %v1542, 7
    %v1544 = vsub.s32 7, %v1543
    %v1545 = vrot.slane %v1512, %v1544
    %1554 = vmatprep.subr.mxu0 %v489
    %1555 = vmatpush1.msra.mxu0 %v488
    %1556 = vmatprep.subr.mxu0 %v497
    %1557 = vmatpush1.msra.mxu0 %v496
    %1558 = vmatprep.subr.mxu0 %v505
    %1559 = vmatpush1.msra.mxu0 %v504
    %1560 = vmatprep.subr.mxu0 %v513
    %1561 = vmatpush1.msra.mxu0 %v512
    %1562 = vmatprep.subr.mxu0 %v521
    %1563 = vmatpush1.msra.mxu0 %v520
    %1564 = vmatprep.subr.mxu0 %v529
    %1565 = vmatpush1.msra.mxu0 %v528
    %1566 = vmatprep.subr.mxu0 %v537
    %1567 = vmatpush1.msra.mxu0 %v536
    %1568 = vmatprep.subr.mxu0 %v545
    %1569 = vmatpush1.msra.mxu0 %v544
    %1570 = vmatprep.subr.mxu0 %v553
    %1571 = vmatpush1.msra.mxu0 %v552
    %1572 = vmatprep.subr.mxu0 %v561
    %1573 = vmatpush1.msra.mxu0 %v560
    %1574 = vmatprep.subr.mxu0 %v569
    %1575 = vmatpush1.msra.mxu0 %v568
    %1576 = vmatprep.subr.mxu0 %v577
    %1577 = vmatpush1.msra.mxu0 %v576
    %1578 = vmatprep.subr.mxu0 %v585
    %1579 = vmatpush1.msra.mxu0 %v584
    %1580 = vmatprep.subr.mxu0 %v593
    %1581 = vmatpush1.msra.mxu0 %v592
    %1582 = vmatprep.subr.mxu0 %v601
    %1583 = vmatpush1.msra.mxu0 %v600
    %1584 = vmatprep.subr.mxu0 %v609
    %1585 = vmatpush1.msra.mxu0 %v608
    %1586 = vmatprep.subr.mxu0 %v617
    %1587 = vmatpush1.msra.mxu0 %v616
    %1588 = vmatprep.subr.mxu0 %v625
    %1589 = vmatpush1.msra.mxu0 %v624
    %1590 = vmatprep.subr.mxu0 %v633
    %1591 = vmatpush1.msra.mxu0 %v632
    %1592 = vmatprep.subr.mxu0 %v641
    %1593 = vmatpush1.msra.mxu0 %v640
    %1594 = vmatprep.subr.mxu0 %v649
    %1595 = vmatpush1.msra.mxu0 %v648
    %1596 = vmatprep.subr.mxu0 %v657
    %1597 = vmatpush1.msra.mxu0 %v656
    %1598 = vmatprep.subr.mxu0 %v665
    %1599 = vmatpush1.msra.mxu0 %v664
    %1600 = vmatprep.subr.mxu0 %v673
    %1601 = vmatpush1.msra.mxu0 %v672
    %1602 = vmatprep.subr.mxu0 %v681
    %1603 = vmatpush1.msra.mxu0 %v680
    %1604 = vmatprep.subr.mxu0 %v689
    %1605 = vmatpush1.msra.mxu0 %v688
    %1606 = vmatprep.subr.mxu0 %v697
    %1607 = vmatpush1.msra.mxu0 %v696
    %1608 = vmatprep.subr.mxu0 %v705
    %1609 = vmatpush1.msra.mxu0 %v704
    %1610 = vmatprep.subr.mxu0 %v713
    %1611 = vmatpush1.msra.mxu0 %v712
    %1612 = vmatprep.subr.mxu0 %v721
    %1613 = vmatpush1.msra.mxu0 %v720
    %1614 = vmatprep.subr.mxu0 %v729
    %1615 = vmatpush1.msra.mxu0 %v728
    %1616 = vmatprep.subr.mxu0 %v737
    %1617 = vmatpush1.msra.mxu0 %v736
    %1618 = vmatprep.mubr.f32.mxu0 %v481
    %1619 = vmatmul.mubr.f32.gmra.mrb[0].mxu0 %v480
    %v1620 = vpop.f32.mrb[0].mxu0
    %v1621 = vadd.f32 %v1517, %v1620
    %v1622 = vpop.f32.mrb[0].mxu0
    %v1623 = vadd.f32 %v1521, %v1622
    %1624 = vdwg.mxu0
    %1625 = vmatprep.subr.mxu0 %v745
    %1626 = vmatpush1.msra.mxu0 %v744
    %1627 = vmatprep.subr.mxu0 %v753
    %1628 = vmatpush1.msra.mxu0 %v752
    %1629 = vmatprep.subr.mxu0 %v761
    %1630 = vmatpush1.msra.mxu0 %v760
    %1631 = vmatprep.subr.mxu0 %v769
    %1632 = vmatpush1.msra.mxu0 %v768
    %1633 = vmatprep.subr.mxu0 %v777
    %1634 = vmatpush1.msra.mxu0 %v776
    %1635 = vmatprep.subr.mxu0 %v785
    %1636 = vmatpush1.msra.mxu0 %v784
    %1637 = vmatprep.subr.mxu0 %v793
    %1638 = vmatpush1.msra.mxu0 %v792
    %1639 = vmatprep.subr.mxu0 %v801
    %1640 = vmatpush1.msra.mxu0 %v800
    %1641 = vmatprep.subr.mxu0 %v809
    %1642 = vmatpush1.msra.mxu0 %v808
    %1643 = vmatprep.subr.mxu0 %v817
    %1644 = vmatpush1.msra.mxu0 %v816
    %1645 = vmatprep.subr.mxu0 %v825
    %1646 = vmatpush1.msra.mxu0 %v824
    %1647 = vmatprep.subr.mxu0 %v833
    %1648 = vmatpush1.msra.mxu0 %v832
    %1649 = vmatprep.subr.mxu0 %v841
    %1650 = vmatpush1.msra.mxu0 %v840
    %1651 = vmatprep.subr.mxu0 %v849
    %1652 = vmatpush1.msra.mxu0 %v848
    %1653 = vmatprep.subr.mxu0 %v857
    %1654 = vmatpush1.msra.mxu0 %v856
    %1655 = vmatprep.subr.mxu0 %v865
    %1656 = vmatpush1.msra.mxu0 %v864
    %1657 = vmatprep.subr.mxu0 %v873
    %1658 = vmatpush1.msra.mxu0 %v872
    %1659 = vmatprep.subr.mxu0 %v881
    %1660 = vmatpush1.msra.mxu0 %v880
    %1661 = vmatprep.subr.mxu0 %v889
    %1662 = vmatpush1.msra.mxu0 %v888
    %1663 = vmatprep.subr.mxu0 %v897
    %1664 = vmatpush1.msra.mxu0 %v896
    %1665 = vmatprep.subr.mxu0 %v905
    %1666 = vmatpush1.msra.mxu0 %v904
    %1667 = vmatprep.subr.mxu0 %v913
    %1668 = vmatpush1.msra.mxu0 %v912
    %1669 = vmatprep.subr.mxu0 %v921
    %1670 = vmatpush1.msra.mxu0 %v920
    %1671 = vmatprep.subr.mxu0 %v929
    %1672 = vmatpush1.msra.mxu0 %v928
    %1673 = vmatprep.subr.mxu0 %v937
    %1674 = vmatpush1.msra.mxu0 %v936
    %1675 = vmatprep.subr.mxu0 %v945
    %1676 = vmatpush1.msra.mxu0 %v944
    %1677 = vmatprep.subr.mxu0 %v953
    %1678 = vmatpush1.msra.mxu0 %v952
    %1679 = vmatprep.subr.mxu0 %v961
    %1680 = vmatpush1.msra.mxu0 %v960
    %1681 = vmatprep.subr.mxu0 %v969
    %1682 = vmatpush1.msra.mxu0 %v968
    %1683 = vmatprep.subr.mxu0 %v977
    %1684 = vmatpush1.msra.mxu0 %v976
    %1685 = vmatprep.subr.mxu0 %v985
    %1686 = vmatpush1.msra.mxu0 %v984
    %1687 = vmatprep.subr.mxu0 %v993
    %1688 = vmatpush1.msra.mxu0 %v992
    %1689 = vmatprep.mubr.f32.mxu0 %v483
    %1690 = vmatmul.mubr.f32.gmra.mrb[0].mxu0 %v482
    %v1691 = vpop.f32.mrb[0].mxu0
    %v1692 = vadd.f32 %v1621, %v1691
    %v1693 = vpop.f32.mrb[0].mxu0
    %v1694 = vadd.f32 %v1623, %v1693
    %1695 = vdwg.mxu0
    %1696 = vmatprep.subr.mxu0 %v1001
    %1697 = vmatpush1.msra.mxu0 %v1000
    %1698 = vmatprep.subr.mxu0 %v1009
    %1699 = vmatpush1.msra.mxu0 %v1008
    %1700 = vmatprep.subr.mxu0 %v1017
    %1701 = vmatpush1.msra.mxu0 %v1016
    %1702 = vmatprep.subr.mxu0 %v1025
    %1703 = vmatpush1.msra.mxu0 %v1024
    %1704 = vmatprep.subr.mxu0 %v1033
    %1705 = vmatpush1.msra.mxu0 %v1032
    %1706 = vmatprep.subr.mxu0 %v1041
    %1707 = vmatpush1.msra.mxu0 %v1040
    %1708 = vmatprep.subr.mxu0 %v1049
    %1709 = vmatpush1.msra.mxu0 %v1048
    %1710 = vmatprep.subr.mxu0 %v1057
    %1711 = vmatpush1.msra.mxu0 %v1056
    %1712 = vmatprep.subr.mxu0 %v1065
    %1713 = vmatpush1.msra.mxu0 %v1064
    %1714 = vmatprep.subr.mxu0 %v1073
    %1715 = vmatpush1.msra.mxu0 %v1072
    %1716 = vmatprep.subr.mxu0 %v1081
    %1717 = vmatpush1.msra.mxu0 %v1080
    %1718 = vmatprep.subr.mxu0 %v1089
    %1719 = vmatpush1.msra.mxu0 %v1088
    %1720 = vmatprep.subr.mxu0 %v1097
    %1721 = vmatpush1.msra.mxu0 %v1096
    %1722 = vmatprep.subr.mxu0 %v1105
    %1723 = vmatpush1.msra.mxu0 %v1104
    %1724 = vmatprep.subr.mxu0 %v1113
    %1725 = vmatpush1.msra.mxu0 %v1112
    %1726 = vmatprep.subr.mxu0 %v1121
    %1727 = vmatpush1.msra.mxu0 %v1120
    %1728 = vmatprep.subr.mxu0 %v1129
    %1729 = vmatpush1.msra.mxu0 %v1128
    %1730 = vmatprep.subr.mxu0 %v1137
    %1731 = vmatpush1.msra.mxu0 %v1136
    %1732 = vmatprep.subr.mxu0 %v1145
    %1733 = vmatpush1.msra.mxu0 %v1144
    %1734 = vmatprep.subr.mxu0 %v1153
    %1735 = vmatpush1.msra.mxu0 %v1152
    %1736 = vmatprep.subr.mxu0 %v1161
    %1737 = vmatpush1.msra.mxu0 %v1160
    %1738 = vmatprep.subr.mxu0 %v1169
    %1739 = vmatpush1.msra.mxu0 %v1168
    %1740 = vmatprep.subr.mxu0 %v1177
    %1741 = vmatpush1.msra.mxu0 %v1176
    %1742 = vmatprep.subr.mxu0 %v1185
    %1743 = vmatpush1.msra.mxu0 %v1184
    %1744 = vmatprep.subr.mxu0 %v1193
    %1745 = vmatpush1.msra.mxu0 %v1192
    %1746 = vmatprep.subr.mxu0 %v1201
    %1747 = vmatpush1.msra.mxu0 %v1200
    %1748 = vmatprep.subr.mxu0 %v1209
    %1749 = vmatpush1.msra.mxu0 %v1208
    %1750 = vmatprep.subr.mxu0 %v1217
    %1751 = vmatpush1.msra.mxu0 %v1216
    %1752 = vmatprep.subr.mxu0 %v1225
    %1753 = vmatpush1.msra.mxu0 %v1224
    %1754 = vmatprep.subr.mxu0 %v1233
    %1755 = vmatpush1.msra.mxu0 %v1232
    %1756 = vmatprep.subr.mxu0 %v1241
    %1757 = vmatpush1.msra.mxu0 %v1240
    %1758 = vmatprep.subr.mxu0 %v1249
    %1759 = vmatpush1.msra.mxu0 %v1248
    %1760 = vmatprep.mubr.f32.mxu0 %v485
    %1761 = vmatmul.mubr.f32.gmra.mrb[0].mxu0 %v484
    %v1762 = vpop.f32.mrb[0].mxu0
    %v1763 = vadd.f32 %v1692, %v1762
    %v1764 = vpop.f32.mrb[0].mxu0
    %v1765 = vadd.f32 %v1694, %v1764
    %1766 = vdwg.mxu0
    %1767 = vmatprep.subr.mxu0 %v1257
    %1768 = vmatpush1.msra.mxu0 %v1256
    %1769 = vmatprep.subr.mxu0 %v1265
    %1770 = vmatpush1.msra.mxu0 %v1264
    %1771 = vmatprep.subr.mxu0 %v1273
    %1772 = vmatpush1.msra.mxu0 %v1272
    %1773 = vmatprep.subr.mxu0 %v1281
    %1774 = vmatpush1.msra.mxu0 %v1280
    %1775 = vmatprep.subr.mxu0 %v1289
    %1776 = vmatpush1.msra.mxu0 %v1288
    %1777 = vmatprep.subr.mxu0 %v1297
    %1778 = vmatpush1.msra.mxu0 %v1296
    %1779 = vmatprep.subr.mxu0 %v1305
    %1780 = vmatpush1.msra.mxu0 %v1304
    %1781 = vmatprep.subr.mxu0 %v1313
    %1782 = vmatpush1.msra.mxu0 %v1312
    %1783 = vmatprep.subr.mxu0 %v1321
    %1784 = vmatpush1.msra.mxu0 %v1320
    %1785 = vmatprep.subr.mxu0 %v1329
    %1786 = vmatpush1.msra.mxu0 %v1328
    %1787 = vmatprep.subr.mxu0 %v1337
    %1788 = vmatpush1.msra.mxu0 %v1336
    %1789 = vmatprep.subr.mxu0 %v1345
    %1790 = vmatpush1.msra.mxu0 %v1344
    %1791 = vmatprep.subr.mxu0 %v1353
    %1792 = vmatpush1.msra.mxu0 %v1352
    %1793 = vmatprep.subr.mxu0 %v1361
    %1794 = vmatpush1.msra.mxu0 %v1360
    %1795 = vmatprep.subr.mxu0 %v1369
    %1796 = vmatpush1.msra.mxu0 %v1368
    %1797 = vmatprep.subr.mxu0 %v1377
    %1798 = vmatpush1.msra.mxu0 %v1376
    %1799 = vmatprep.subr.mxu0 %v1385
    %1800 = vmatpush1.msra.mxu0 %v1384
    %1801 = vmatprep.subr.mxu0 %v1393
    %1802 = vmatpush1.msra.mxu0 %v1392
    %1803 = vmatprep.subr.mxu0 %v1401
    %1804 = vmatpush1.msra.mxu0 %v1400
    %1805 = vmatprep.subr.mxu0 %v1409
    %1806 = vmatpush1.msra.mxu0 %v1408
    %1807 = vmatprep.subr.mxu0 %v1417
    %1808 = vmatpush1.msra.mxu0 %v1416
    %1809 = vmatprep.subr.mxu0 %v1425
    %1810 = vmatpush1.msra.mxu0 %v1424
    %1811 = vmatprep.subr.mxu0 %v1433
    %1812 = vmatpush1.msra.mxu0 %v1432
    %1813 = vmatprep.subr.mxu0 %v1441
    %1814 = vmatpush1.msra.mxu0 %v1440
    %1815 = vmatprep.subr.mxu0 %v1449
    %1816 = vmatpush1.msra.mxu0 %v1448
    %1817 = vmatprep.subr.mxu0 %v1457
    %1818 = vmatpush1.msra.mxu0 %v1456
    %1819 = vmatprep.subr.mxu0 %v1465
    %1820 = vmatpush1.msra.mxu0 %v1464
    %1821 = vmatprep.subr.mxu0 %v1473
    %1822 = vmatpush1.msra.mxu0 %v1472
    %1823 = vmatprep.subr.mxu0 %v1481
    %1824 = vmatpush1.msra.mxu0 %v1480
    %1825 = vmatprep.subr.mxu0 %v1489
    %1826 = vmatpush1.msra.mxu0 %v1488
    %1827 = vmatprep.subr.mxu0 %v1497
    %1828 = vmatpush1.msra.mxu0 %v1496
    %1829 = vmatprep.subr.mxu0 %v1505
    %1830 = vmatpush1.msra.mxu0 %v1504
    %1831 = vmatprep.mubr.f32.mxu0 %v487
    %1832 = vmatmul.mubr.f32.gmra.mrb[0].mxu0 %v486
    %v1833 = vpop.f32.mrb[0].mxu0
    %v1834 = vadd.f32 %v1763, %v1833
    %v1835 = vpop.f32.mrb[0].mxu0
    %v1836 = vadd.f32 %v1765, %v1835
    %1837 = vdwg.mxu0
    %1838 = vmatprep.subr.mxu0 %v491
    %1839 = vmatpush1.msra.mxu0 %v490
    %1840 = vmatprep.subr.mxu0 %v499
    %1841 = vmatpush1.msra.mxu0 %v498
    %1842 = vmatprep.subr.mxu0 %v507
    %1843 = vmatpush1.msra.mxu0 %v506
    %1844 = vmatprep.subr.mxu0 %v515
    %1845 = vmatpush1.msra.mxu0 %v514
    %1846 = vmatprep.subr.mxu0 %v523
    %1847 = vmatpush1.msra.mxu0 %v522
    %1848 = vmatprep.subr.mxu0 %v531
    %1849 = vmatpush1.msra.mxu0 %v530
    %1850 = vmatprep.subr.mxu0 %v539
    %1851 = vmatpush1.msra.mxu0 %v538
    %1852 = vmatprep.subr.mxu0 %v547
    %1853 = vmatpush1.msra.mxu0 %v546
    %1854 = vmatprep.subr.mxu0 %v555
    %1855 = vmatpush1.msra.mxu0 %v554
    %1856 = vmatprep.subr.mxu0 %v563
    %1857 = vmatpush1.msra.mxu0 %v562
    %1858 = vmatprep.subr.mxu0 %v571
    %1859 = vmatpush1.msra.mxu0 %v570
    %1860 = vmatprep.subr.mxu0 %v579
    %1861 = vmatpush1.msra.mxu0 %v578
    %1862 = vmatprep.subr.mxu0 %v587
    %1863 = vmatpush1.msra.mxu0 %v586
    %1864 = vmatprep.subr.mxu0 %v595
    %1865 = vmatpush1.msra.mxu0 %v594
    %1866 = vmatprep.subr.mxu0 %v603
    %1867 = vmatpush1.msra.mxu0 %v602
    %1868 = vmatprep.subr.mxu0 %v611
    %1869 = vmatpush1.msra.mxu0 %v610
    %1870 = vmatprep.subr.mxu0 %v619
    %1871 = vmatpush1.msra.mxu0 %v618
    %1872 = vmatprep.subr.mxu0 %v627
    %1873 = vmatpush1.msra.mxu0 %v626
    %1874 = vmatprep.subr.mxu0 %v635
    %1875 = vmatpush1.msra.mxu0 %v634
    %1876 = vmatprep.subr.mxu0 %v643
    %1877 = vmatpush1.msra.mxu0 %v642
    %1878 = vmatprep.subr.mxu0 %v651
    %1879 = vmatpush1.msra.mxu0 %v650
    %1880 = vmatprep.subr.mxu0 %v659
    %1881 = vmatpush1.msra.mxu0 %v658
    %1882 = vmatprep.subr.mxu0 %v667
    %1883 = vmatpush1.msra.mxu0 %v666
    %1884 = vmatprep.subr.mxu0 %v675
    %1885 = vmatpush1.msra.mxu0 %v674
    %1886 = vmatprep.subr.mxu0 %v683
    %1887 = vmatpush1.msra.mxu0 %v682
    %1888 = vmatprep.subr.mxu0 %v691
    %1889 = vmatpush1.msra.mxu0 %v690
    %1890 = vmatprep.subr.mxu0 %v699
    %1891 = vmatpush1.msra.mxu0 %v698
    %1892 = vmatprep.subr.mxu0 %v707
    %1893 = vmatpush1.msra.mxu0 %v706
    %1894 = vmatprep.subr.mxu0 %v715
    %1895 = vmatpush1.msra.mxu0 %v714
    %1896 = vmatprep.subr.mxu0 %v723
    %1897 = vmatpush1.msra.mxu0 %v722
    %1898 = vmatprep.subr.mxu0 %v731
    %1899 = vmatpush1.msra.mxu0 %v730
    %1900 = vmatprep.subr.mxu0 %v739
    %1901 = vmatpush1.msra.mxu0 %v738
    %1902 = vmatprep.mubr.f32.mxu0 %v481
    %1903 = vmatmul.mubr.f32.gmra.mrb[0].mxu0 %v480
    %v1904 = vpop.f32.mrb[0].mxu0
    %v1905 = vadd.f32 %v1525, %v1904
    %v1906 = vpop.f32.mrb[0].mxu0
    %v1907 = vadd.f32 %v1529, %v1906
    %1908 = vdwg.mxu0
    %1909 = vmatprep.subr.mxu0 %v747
    %1910 = vmatpush1.msra.mxu0 %v746
    %1911 = vmatprep.subr.mxu0 %v755
    %1912 = vmatpush1.msra.mxu0 %v754
    %1913 = vmatprep.subr.mxu0 %v763
    %1914 = vmatpush1.msra.mxu0 %v762
    %1915 = vmatprep.subr.mxu0 %v771
    %1916 = vmatpush1.msra.mxu0 %v770
    %1917 = vmatprep.subr.mxu0 %v779
    %1918 = vmatpush1.msra.mxu0 %v778
    %1919 = vmatprep.subr.mxu0 %v787
    %1920 = vmatpush1.msra.mxu0 %v786
    %1921 = vmatprep.subr.mxu0 %v795
    %1922 = vmatpush1.msra.mxu0 %v794
    %1923 = vmatprep.subr.mxu0 %v803
    %1924 = vmatpush1.msra.mxu0 %v802
    %1925 = vmatprep.subr.mxu0 %v811
    %1926 = vmatpush1.msra.mxu0 %v810
    %1927 = vmatprep.subr.mxu0 %v819
    %1928 = vmatpush1.msra.mxu0 %v818
    %1929 = vmatprep.subr.mxu0 %v827
    %1930 = vmatpush1.msra.mxu0 %v826
    %1931 = vmatprep.subr.mxu0 %v835
    %1932 = vmatpush1.msra.mxu0 %v834
    %1933 = vmatprep.subr.mxu0 %v843
    %1934 = vmatpush1.msra.mxu0 %v842
    %1935 = vmatprep.subr.mxu0 %v851
    %1936 = vmatpush1.msra.mxu0 %v850
    %1937 = vmatprep.subr.mxu0 %v859
    %1938 = vmatpush1.msra.mxu0 %v858
    %1939 = vmatprep.subr.mxu0 %v867
    %1940 = vmatpush1.msra.mxu0 %v866
    %1941 = vmatprep.subr.mxu0 %v875
    %1942 = vmatpush1.msra.mxu0 %v874
    %1943 = vmatprep.subr.mxu0 %v883
    %1944 = vmatpush1.msra.mxu0 %v882
    %1945 = vmatprep.subr.mxu0 %v891
    %1946 = vmatpush1.msra.mxu0 %v890
    %1947 = vmatprep.subr.mxu0 %v899
    %1948 = vmatpush1.msra.mxu0 %v898
    %1949 = vmatprep.subr.mxu0 %v907
    %1950 = vmatpush1.msra.mxu0 %v906
    %1951 = vmatprep.subr.mxu0 %v915
    %1952 = vmatpush1.msra.mxu0 %v914
    %1953 = vmatprep.subr.mxu0 %v923
    %1954 = vmatpush1.msra.mxu0 %v922
    %1955 = vmatprep.subr.mxu0 %v931
    %1956 = vmatpush1.msra.mxu0 %v930
    %1957 = vmatprep.subr.mxu0 %v939
    %1958 = vmatpush1.msra.mxu0 %v938
    %1959 = vmatprep.subr.mxu0 %v947
    %1960 = vmatpush1.msra.mxu0 %v946
    %1961 = vmatprep.subr.mxu0 %v955
    %1962 = vmatpush1.msra.mxu0 %v954
    %1963 = vmatprep.subr.mxu0 %v963
    %1964 = vmatpush1.msra.mxu0 %v962
    %1965 = vmatprep.subr.mxu0 %v971
    %1966 = vmatpush1.msra.mxu0 %v970
    %1967 = vmatprep.subr.mxu0 %v979
    %1968 = vmatpush1.msra.mxu0 %v978
    %1969 = vmatprep.subr.mxu0 %v987
    %1970 = vmatpush1.msra.mxu0 %v986
    %1971 = vmatprep.subr.mxu0 %v995
    %1972 = vmatpush1.msra.mxu0 %v994
    %1973 = vmatprep.mubr.f32.mxu0 %v483
    %1974 = vmatmul.mubr.f32.gmra.mrb[0].mxu0 %v482
    %v1975 = vpop.f32.mrb[0].mxu0
    %v1976 = vadd.f32 %v1905, %v1975
    %v1977 = vpop.f32.mrb[0].mxu0
    %v1978 = vadd.f32 %v1907, %v1977
    %1979 = vdwg.mxu0
    %1980 = vmatprep.subr.mxu0 %v1003
    %1981 = vmatpush1.msra.mxu0 %v1002
    %1982 = vmatprep.subr.mxu0 %v1011
    %1983 = vmatpush1.msra.mxu0 %v1010
    %1984 = vmatprep.subr.mxu0 %v1019
    %1985 = vmatpush1.msra.mxu0 %v1018
    %1986 = vmatprep.subr.mxu0 %v1027
    %1987 = vmatpush1.msra.mxu0 %v1026
    %1988 = vmatprep.subr.mxu0 %v1035
    %1989 = vmatpush1.msra.mxu0 %v1034
    %1990 = vmatprep.subr.mxu0 %v1043
    %1991 = vmatpush1.msra.mxu0 %v1042
    %1992 = vmatprep.subr.mxu0 %v1051
    %1993 = vmatpush1.msra.mxu0 %v1050
    %1994 = vmatprep.subr.mxu0 %v1059
    %1995 = vmatpush1.msra.mxu0 %v1058
    %1996 = vmatprep.subr.mxu0 %v1067
    %1997 = vmatpush1.msra.mxu0 %v1066
    %1998 = vmatprep.subr.mxu0 %v1075
    %1999 = vmatpush1.msra.mxu0 %v1074
    %2000 = vmatprep.subr.mxu0 %v1083
    %2001 = vmatpush1.msra.mxu0 %v1082
    %2002 = vmatprep.subr.mxu0 %v1091
    %2003 = vmatpush1.msra.mxu0 %v1090
    %2004 = vmatprep.subr.mxu0 %v1099
    %2005 = vmatpush1.msra.mxu0 %v1098
    %2006 = vmatprep.subr.mxu0 %v1107
    %2007 = vmatpush1.msra.mxu0 %v1106
    %2008 = vmatprep.subr.mxu0 %v1115
    %2009 = vmatpush1.msra.mxu0 %v1114
    %2010 = vmatprep.subr.mxu0 %v1123
    %2011 = vmatpush1.msra.mxu0 %v1122
    %2012 = vmatprep.subr.mxu0 %v1131
    %2013 = vmatpush1.msra.mxu0 %v1130
    %2014 = vmatprep.subr.mxu0 %v1139
    %2015 = vmatpush1.msra.mxu0 %v1138
    %2016 = vmatprep.subr.mxu0 %v1147
    %2017 = vmatpush1.msra.mxu0 %v1146
    %2018 = vmatprep.subr.mxu0 %v1155
    %2019 = vmatpush1.msra.mxu0 %v1154
    %2020 = vmatprep.subr.mxu0 %v1163
    %2021 = vmatpush1.msra.mxu0 %v1162
    %2022 = vmatprep.subr.mxu0 %v1171
    %2023 = vmatpush1.msra.mxu0 %v1170
    %2024 = vmatprep.subr.mxu0 %v1179
    %2025 = vmatpush1.msra.mxu0 %v1178
    %2026 = vmatprep.subr.mxu0 %v1187
    %2027 = vmatpush1.msra.mxu0 %v1186
    %2028 = vmatprep.subr.mxu0 %v1195
    %2029 = vmatpush1.msra.mxu0 %v1194
    %2030 = vmatprep.subr.mxu0 %v1203
    %2031 = vmatpush1.msra.mxu0 %v1202
    %2032 = vmatprep.subr.mxu0 %v1211
    %2033 = vmatpush1.msra.mxu0 %v1210
    %2034 = vmatprep.subr.mxu0 %v1219
    %2035 = vmatpush1.msra.mxu0 %v1218
    %2036 = vmatprep.subr.mxu0 %v1227
    %2037 = vmatpush1.msra.mxu0 %v1226
    %2038 = vmatprep.subr.mxu0 %v1235
    %2039 = vmatpush1.msra.mxu0 %v1234
    %2040 = vmatprep.subr.mxu0 %v1243
    %2041 = vmatpush1.msra.mxu0 %v1242
    %2042 = vmatprep.subr.mxu0 %v1251
    %2043 = vmatpush1.msra.mxu0 %v1250
    %2044 = vmatprep.mubr.f32.mxu0 %v485
    %2045 = vmatmul.mubr.f32.gmra.mrb[0].mxu0 %v484
    %v2046 = vpop.f32.mrb[0].mxu0
    %v2047 = vadd.f32 %v1976, %v2046
    %v2048 = vpop.f32.mrb[0].mxu0
    %v2049 = vadd.f32 %v1978, %v2048
    %2050 = vdwg.mxu0
    %2051 = vmatprep.subr.mxu0 %v1259
    %2052 = vmatpush1.msra.mxu0 %v1258
    %2053 = vmatprep.subr.mxu0 %v1267
    %2054 = vmatpush1.msra.mxu0 %v1266
    %2055 = vmatprep.subr.mxu0 %v1275
    %2056 = vmatpush1.msra.mxu0 %v1274
    %2057 = vmatprep.subr.mxu0 %v1283
    %2058 = vmatpush1.msra.mxu0 %v1282
    %2059 = vmatprep.subr.mxu0 %v1291
    %2060 = vmatpush1.msra.mxu0 %v1290
    %2061 = vmatprep.subr.mxu0 %v1299
    %2062 = vmatpush1.msra.mxu0 %v1298
    %2063 = vmatprep.subr.mxu0 %v1307
    %2064 = vmatpush1.msra.mxu0 %v1306
    %2065 = vmatprep.subr.mxu0 %v1315
    %2066 = vmatpush1.msra.mxu0 %v1314
    %2067 = vmatprep.subr.mxu0 %v1323
    %2068 = vmatpush1.msra.mxu0 %v1322
    %2069 = vmatprep.subr.mxu0 %v1331
    %2070 = vmatpush1.msra.mxu0 %v1330
    %2071 = vmatprep.subr.mxu0 %v1339
    %2072 = vmatpush1.msra.mxu0 %v1338
    %2073 = vmatprep.subr.mxu0 %v1347
    %2074 = vmatpush1.msra.mxu0 %v1346
    %2075 = vmatprep.subr.mxu0 %v1355
    %2076 = vmatpush1.msra.mxu0 %v1354
    %2077 = vmatprep.subr.mxu0 %v1363
    %2078 = vmatpush1.msra.mxu0 %v1362
    %2079 = vmatprep.subr.mxu0 %v1371
    %2080 = vmatpush1.msra.mxu0 %v1370
    %2081 = vmatprep.subr.mxu0 %v1379
    %2082 = vmatpush1.msra.mxu0 %v1378
    %2083 = vmatprep.subr.mxu0 %v1387
    %2084 = vmatpush1.msra.mxu0 %v1386
    %2085 = vmatprep.subr.mxu0 %v1395
    %2086 = vmatpush1.msra.mxu0 %v1394
    %2087 = vmatprep.subr.mxu0 %v1403
    %2088 = vmatpush1.msra.mxu0 %v1402
    %2089 = vmatprep.subr.mxu0 %v1411
    %2090 = vmatpush1.msra.mxu0 %v1410
    %2091 = vmatprep.subr.mxu0 %v1419
    %2092 = vmatpush1.msra.mxu0 %v1418
    %2093 = vmatprep.subr.mxu0 %v1427
    %2094 = vmatpush1.msra.mxu0 %v1426
    %2095 = vmatprep.subr.mxu0 %v1435
    %2096 = vmatpush1.msra.mxu0 %v1434
    %2097 = vmatprep.subr.mxu0 %v1443
    %2098 = vmatpush1.msra.mxu0 %v1442
    %2099 = vmatprep.subr.mxu0 %v1451
    %2100 = vmatpush1.msra.mxu0 %v1450
    %2101 = vmatprep.subr.mxu0 %v1459
    %2102 = vmatpush1.msra.mxu0 %v1458
    %2103 = vmatprep.subr.mxu0 %v1467
    %2104 = vmatpush1.msra.mxu0 %v1466
    %2105 = vmatprep.subr.mxu0 %v1475
    %2106 = vmatpush1.msra.mxu0 %v1474
    %2107 = vmatprep.subr.mxu0 %v1483
    %2108 = vmatpush1.msra.mxu0 %v1482
    %2109 = vmatprep.subr.mxu0 %v1491
    %2110 = vmatpush1.msra.mxu0 %v1490
    %2111 = vmatprep.subr.mxu0 %v1499
    %2112 = vmatpush1.msra.mxu0 %v1498
    %2113 = vmatprep.subr.mxu0 %v1507
    %2114 = vmatpush1.msra.mxu0 %v1506
    %2115 = vmatprep.mubr.f32.mxu0 %v487
    %2116 = vmatmul.mubr.f32.gmra.mrb[0].mxu0 %v486
    %v2117 = vpop.f32.mrb[0].mxu0
    %v2118 = vadd.f32 %v2047, %v2117
    %v2119 = vpop.f32.mrb[0].mxu0
    %v2120 = vadd.f32 %v2049, %v2119
    %2121 = vdwg.mxu0
    %2122 = vmatprep.subr.mxu0 %v493
    %2123 = vmatpush1.msra.mxu0 %v492
    %2124 = vmatprep.subr.mxu0 %v501
    %2125 = vmatpush1.msra.mxu0 %v500
    %2126 = vmatprep.subr.mxu0 %v509
    %2127 = vmatpush1.msra.mxu0 %v508
    %2128 = vmatprep.subr.mxu0 %v517
    %2129 = vmatpush1.msra.mxu0 %v516
    %2130 = vmatprep.subr.mxu0 %v525
    %2131 = vmatpush1.msra.mxu0 %v524
    %2132 = vmatprep.subr.mxu0 %v533
    %2133 = vmatpush1.msra.mxu0 %v532
    %2134 = vmatprep.subr.mxu0 %v541
    %2135 = vmatpush1.msra.mxu0 %v540
    %2136 = vmatprep.subr.mxu0 %v549
    %2137 = vmatpush1.msra.mxu0 %v548
    %2138 = vmatprep.subr.mxu0 %v557
    %2139 = vmatpush1.msra.mxu0 %v556
    %2140 = vmatprep.subr.mxu0 %v565
    %2141 = vmatpush1.msra.mxu0 %v564
    %2142 = vmatprep.subr.mxu0 %v573
    %2143 = vmatpush1.msra.mxu0 %v572
    %2144 = vmatprep.subr.mxu0 %v581
    %2145 = vmatpush1.msra.mxu0 %v580
    %2146 = vmatprep.subr.mxu0 %v589
    %2147 = vmatpush1.msra.mxu0 %v588
    %2148 = vmatprep.subr.mxu0 %v597
    %2149 = vmatpush1.msra.mxu0 %v596
    %2150 = vmatprep.subr.mxu0 %v605
    %2151 = vmatpush1.msra.mxu0 %v604
    %2152 = vmatprep.subr.mxu0 %v613
    %2153 = vmatpush1.msra.mxu0 %v612
    %2154 = vmatprep.subr.mxu0 %v621
    %2155 = vmatpush1.msra.mxu0 %v620
    %2156 = vmatprep.subr.mxu0 %v629
    %2157 = vmatpush1.msra.mxu0 %v628
    %2158 = vmatprep.subr.mxu0 %v637
    %2159 = vmatpush1.msra.mxu0 %v636
    %2160 = vmatprep.subr.mxu0 %v645
    %2161 = vmatpush1.msra.mxu0 %v644
    %2162 = vmatprep.subr.mxu0 %v653
    %2163 = vmatpush1.msra.mxu0 %v652
    %2164 = vmatprep.subr.mxu0 %v661
    %2165 = vmatpush1.msra.mxu0 %v660
    %2166 = vmatprep.subr.mxu0 %v669
    %2167 = vmatpush1.msra.mxu0 %v668
    %2168 = vmatprep.subr.mxu0 %v677
    %2169 = vmatpush1.msra.mxu0 %v676
    %2170 = vmatprep.subr.mxu0 %v685
    %2171 = vmatpush1.msra.mxu0 %v684
    %2172 = vmatprep.subr.mxu0 %v693
    %2173 = vmatpush1.msra.mxu0 %v692
    %2174 = vmatprep.subr.mxu0 %v701
    %2175 = vmatpush1.msra.mxu0 %v700
    %2176 = vmatprep.subr.mxu0 %v709
    %2177 = vmatpush1.msra.mxu0 %v708
    %2178 = vmatprep.subr.mxu0 %v717
    %2179 = vmatpush1.msra.mxu0 %v716
    %2180 = vmatprep.subr.mxu0 %v725
    %2181 = vmatpush1.msra.mxu0 %v724
    %2182 = vmatprep.subr.mxu0 %v733
    %2183 = vmatpush1.msra.mxu0 %v732
    %2184 = vmatprep.subr.mxu0 %v741
    %2185 = vmatpush1.msra.mxu0 %v740
    %2186 = vmatprep.mubr.f32.mxu0 %v481
    %2187 = vmatmul.mubr.f32.gmra.mrb[0].mxu0 %v480
    %v2188 = vpop.f32.mrb[0].mxu0
    %v2189 = vadd.f32 %v1533, %v2188
    %v2190 = vpop.f32.mrb[0].mxu0
    %v2191 = vadd.f32 %v1537, %v2190
    %2192 = vdwg.mxu0
    %2193 = vmatprep.subr.mxu0 %v749
    %2194 = vmatpush1.msra.mxu0 %v748
    %2195 = vmatprep.subr.mxu0 %v757
    %2196 = vmatpush1.msra.mxu0 %v756
    %2197 = vmatprep.subr.mxu0 %v765
    %2198 = vmatpush1.msra.mxu0 %v764
    %2199 = vmatprep.subr.mxu0 %v773
    %2200 = vmatpush1.msra.mxu0 %v772
    %2201 = vmatprep.subr.mxu0 %v781
    %2202 = vmatpush1.msra.mxu0 %v780
    %2203 = vmatprep.subr.mxu0 %v789
    %2204 = vmatpush1.msra.mxu0 %v788
    %2205 = vmatprep.subr.mxu0 %v797
    %2206 = vmatpush1.msra.mxu0 %v796
    %2207 = vmatprep.subr.mxu0 %v805
    %2208 = vmatpush1.msra.mxu0 %v804
    %2209 = vmatprep.subr.mxu0 %v813
    %2210 = vmatpush1.msra.mxu0 %v812
    %2211 = vmatprep.subr.mxu0 %v821
    %2212 = vmatpush1.msra.mxu0 %v820
    %2213 = vmatprep.subr.mxu0 %v829
    %2214 = vmatpush1.msra.mxu0 %v828
    %2215 = vmatprep.subr.mxu0 %v837
    %2216 = vmatpush1.msra.mxu0 %v836
    %2217 = vmatprep.subr.mxu0 %v845
    %2218 = vmatpush1.msra.mxu0 %v844
    %2219 = vmatprep.subr.mxu0 %v853
    %2220 = vmatpush1.msra.mxu0 %v852
    %2221 = vmatprep.subr.mxu0 %v861
    %2222 = vmatpush1.msra.mxu0 %v860
    %2223 = vmatprep.subr.mxu0 %v869
    %2224 = vmatpush1.msra.mxu0 %v868
    %2225 = vmatprep.subr.mxu0 %v877
    %2226 = vmatpush1.msra.mxu0 %v876
    %2227 = vmatprep.subr.mxu0 %v885
    %2228 = vmatpush1.msra.mxu0 %v884
    %2229 = vmatprep.subr.mxu0 %v893
    %2230 = vmatpush1.msra.mxu0 %v892
    %2231 = vmatprep.subr.mxu0 %v901
    %2232 = vmatpush1.msra.mxu0 %v900
    %2233 = vmatprep.subr.mxu0 %v909
    %2234 = vmatpush1.msra.mxu0 %v908
    %2235 = vmatprep.subr.mxu0 %v917
    %2236 = vmatpush1.msra.mxu0 %v916
    %2237 = vmatprep.subr.mxu0 %v925
    %2238 = vmatpush1.msra.mxu0 %v924
    %2239 = vmatprep.subr.mxu0 %v933
    %2240 = vmatpush1.msra.mxu0 %v932
    %2241 = vmatprep.subr.mxu0 %v941
    %2242 = vmatpush1.msra.mxu0 %v940
    %2243 = vmatprep.subr.mxu0 %v949
    %2244 = vmatpush1.msra.mxu0 %v948
    %2245 = vmatprep.subr.mxu0 %v957
    %2246 = vmatpush1.msra.mxu0 %v956
    %2247 = vmatprep.subr.mxu0 %v965
    %2248 = vmatpush1.msra.mxu0 %v964
    %2249 = vmatprep.subr.mxu0 %v973
    %2250 = vmatpush1.msra.mxu0 %v972
    %2251 = vmatprep.subr.mxu0 %v981
    %2252 = vmatpush1.msra.mxu0 %v980
    %2253 = vmatprep.subr.mxu0 %v989
    %2254 = vmatpush1.msra.mxu0 %v988
    %2255 = vmatprep.subr.mxu0 %v997
    %2256 = vmatpush1.msra.mxu0 %v996
    %2257 = vmatprep.mubr.f32.mxu0 %v483
    %2258 = vmatmul.mubr.f32.gmra.mrb[0].mxu0 %v482
    %v2259 = vpop.f32.mrb[0].mxu0
    %v2260 = vadd.f32 %v2189, %v2259
    %v2261 = vpop.f32.mrb[0].mxu0
    %v2262 = vadd.f32 %v2191, %v2261
    %2263 = vdwg.mxu0
    %2264 = vmatprep.subr.mxu0 %v1005
    %2265 = vmatpush1.msra.mxu0 %v1004
    %2266 = vmatprep.subr.mxu0 %v1013
    %2267 = vmatpush1.msra.mxu0 %v1012
    %2268 = vmatprep.subr.mxu0 %v1021
    %2269 = vmatpush1.msra.mxu0 %v1020
    %2270 = vmatprep.subr.mxu0 %v1029
    %2271 = vmatpush1.msra.mxu0 %v1028
    %2272 = vmatprep.subr.mxu0 %v1037
    %2273 = vmatpush1.msra.mxu0 %v1036
    %2274 = vmatprep.subr.mxu0 %v1045
    %2275 = vmatpush1.msra.mxu0 %v1044
    %2276 = vmatprep.subr.mxu0 %v1053
    %2277 = vmatpush1.msra.mxu0 %v1052
    %2278 = vmatprep.subr.mxu0 %v1061
    %2279 = vmatpush1.msra.mxu0 %v1060
    %2280 = vmatprep.subr.mxu0 %v1069
    %2281 = vmatpush1.msra.mxu0 %v1068
    %2282 = vmatprep.subr.mxu0 %v1077
    %2283 = vmatpush1.msra.mxu0 %v1076
    %2284 = vmatprep.subr.mxu0 %v1085
    %2285 = vmatpush1.msra.mxu0 %v1084
    %2286 = vmatprep.subr.mxu0 %v1093
    %2287 = vmatpush1.msra.mxu0 %v1092
    %2288 = vmatprep.subr.mxu0 %v1101
    %2289 = vmatpush1.msra.mxu0 %v1100
    %2290 = vmatprep.subr.mxu0 %v1109
    %2291 = vmatpush1.msra.mxu0 %v1108
    %2292 = vmatprep.subr.mxu0 %v1117
    %2293 = vmatpush1.msra.mxu0 %v1116
    %2294 = vmatprep.subr.mxu0 %v1125
    %2295 = vmatpush1.msra.mxu0 %v1124
    %2296 = vmatprep.subr.mxu0 %v1133
    %2297 = vmatpush1.msra.mxu0 %v1132
    %2298 = vmatprep.subr.mxu0 %v1141
    %2299 = vmatpush1.msra.mxu0 %v1140
    %2300 = vmatprep.subr.mxu0 %v1149
    %2301 = vmatpush1.msra.mxu0 %v1148
    %2302 = vmatprep.subr.mxu0 %v1157
    %2303 = vmatpush1.msra.mxu0 %v1156
    %2304 = vmatprep.subr.mxu0 %v1165
    %2305 = vmatpush1.msra.mxu0 %v1164
    %2306 = vmatprep.subr.mxu0 %v1173
    %2307 = vmatpush1.msra.mxu0 %v1172
    %2308 = vmatprep.subr.mxu0 %v1181
    %2309 = vmatpush1.msra.mxu0 %v1180
    %2310 = vmatprep.subr.mxu0 %v1189
    %2311 = vmatpush1.msra.mxu0 %v1188
    %2312 = vmatprep.subr.mxu0 %v1197
    %2313 = vmatpush1.msra.mxu0 %v1196
    %2314 = vmatprep.subr.mxu0 %v1205
    %2315 = vmatpush1.msra.mxu0 %v1204
    %2316 = vmatprep.subr.mxu0 %v1213
    %2317 = vmatpush1.msra.mxu0 %v1212
    %2318 = vmatprep.subr.mxu0 %v1221
    %2319 = vmatpush1.msra.mxu0 %v1220
    %2320 = vmatprep.subr.mxu0 %v1229
    %2321 = vmatpush1.msra.mxu0 %v1228
    %2322 = vmatprep.subr.mxu0 %v1237
    %2323 = vmatpush1.msra.mxu0 %v1236
    %2324 = vmatprep.subr.mxu0 %v1245
    %2325 = vmatpush1.msra.mxu0 %v1244
    %2326 = vmatprep.subr.mxu0 %v1253
    %2327 = vmatpush1.msra.mxu0 %v1252
    %2328 = vmatprep.mubr.f32.mxu0 %v485
    %2329 = vmatmul.mubr.f32.gmra.mrb[0].mxu0 %v484
    %v2330 = vpop.f32.mrb[0].mxu0
    %v2331 = vadd.f32 %v2260, %v2330
    %v2332 = vpop.f32.mrb[0].mxu0
    %v2333 = vadd.f32 %v2262, %v2332
    %2334 = vdwg.mxu0
    %2335 = vmatprep.subr.mxu0 %v1261
    %2336 = vmatpush1.msra.mxu0 %v1260
    %2337 = vmatprep.subr.mxu0 %v1269
    %2338 = vmatpush1.msra.mxu0 %v1268
    %2339 = vmatprep.subr.mxu0 %v1277
    %2340 = vmatpush1.msra.mxu0 %v1276
    %2341 = vmatprep.subr.mxu0 %v1285
    %2342 = vmatpush1.msra.mxu0 %v1284
    %2343 = vmatprep.subr.mxu0 %v1293
    %2344 = vmatpush1.msra.mxu0 %v1292
    %2345 = vmatprep.subr.mxu0 %v1301
    %2346 = vmatpush1.msra.mxu0 %v1300
    %2347 = vmatprep.subr.mxu0 %v1309
    %2348 = vmatpush1.msra.mxu0 %v1308
    %2349 = vmatprep.subr.mxu0 %v1317
    %2350 = vmatpush1.msra.mxu0 %v1316
    %2351 = vmatprep.subr.mxu0 %v1325
    %2352 = vmatpush1.msra.mxu0 %v1324
    %2353 = vmatprep.subr.mxu0 %v1333
    %2354 = vmatpush1.msra.mxu0 %v1332
    %2355 = vmatprep.subr.mxu0 %v1341
    %2356 = vmatpush1.msra.mxu0 %v1340
    %2357 = vmatprep.subr.mxu0 %v1349
    %2358 = vmatpush1.msra.mxu0 %v1348
    %2359 = vmatprep.subr.mxu0 %v1357
    %2360 = vmatpush1.msra.mxu0 %v1356
    %2361 = vmatprep.subr.mxu0 %v1365
    %2362 = vmatpush1.msra.mxu0 %v1364
    %2363 = vmatprep.subr.mxu0 %v1373
    %2364 = vmatpush1.msra.mxu0 %v1372
    %2365 = vmatprep.subr.mxu0 %v1381
    %2366 = vmatpush1.msra.mxu0 %v1380
    %2367 = vmatprep.subr.mxu0 %v1389
    %2368 = vmatpush1.msra.mxu0 %v1388
    %2369 = vmatprep.subr.mxu0 %v1397
    %2370 = vmatpush1.msra.mxu0 %v1396
    %2371 = vmatprep.subr.mxu0 %v1405
    %2372 = vmatpush1.msra.mxu0 %v1404
    %2373 = vmatprep.subr.mxu0 %v1413
    %2374 = vmatpush1.msra.mxu0 %v1412
    %2375 = vmatprep.subr.mxu0 %v1421
    %2376 = vmatpush1.msra.mxu0 %v1420
    %2377 = vmatprep.subr.mxu0 %v1429
    %2378 = vmatpush1.msra.mxu0 %v1428
    %2379 = vmatprep.subr.mxu0 %v1437
    %2380 = vmatpush1.msra.mxu0 %v1436
    %2381 = vmatprep.subr.mxu0 %v1445
    %2382 = vmatpush1.msra.mxu0 %v1444
    %2383 = vmatprep.subr.mxu0 %v1453
    %2384 = vmatpush1.msra.mxu0 %v1452
    %2385 = vmatprep.subr.mxu0 %v1461
    %2386 = vmatpush1.msra.mxu0 %v1460
    %2387 = vmatprep.subr.mxu0 %v1469
    %2388 = vmatpush1.msra.mxu0 %v1468
    %2389 = vmatprep.subr.mxu0 %v1477
    %2390 = vmatpush1.msra.mxu0 %v1476
    %2391 = vmatprep.subr.mxu0 %v1485
    %2392 = vmatpush1.msra.mxu0 %v1484
    %2393 = vmatprep.subr.mxu0 %v1493
    %2394 = vmatpush1.msra.mxu0 %v1492
    %2395 = vmatprep.subr.mxu0 %v1501
    %2396 = vmatpush1.msra.mxu0 %v1500
    %2397 = vmatprep.subr.mxu0 %v1509
    %2398 = vmatpush1.msra.mxu0 %v1508
    %2399 = vmatprep.mubr.f32.mxu0 %v487
    %2400 = vmatmul.mubr.f32.gmra.mrb[0].mxu0 %v486
    %v2401 = vpop.f32.mrb[0].mxu0
    %v2402 = vadd.f32 %v2331, %v2401
    %v2403 = vpop.f32.mrb[0].mxu0
    %v2404 = vadd.f32 %v2333, %v2403
    %2405 = vdwg.mxu0
    %2406 = vmatprep.subr.mxu0 %v495
    %2407 = vmatpush1.msra.mxu0 %v494
    %2408 = vmatprep.subr.mxu0 %v503
    %2409 = vmatpush1.msra.mxu0 %v502
    %2410 = vmatprep.subr.mxu0 %v511
    %2411 = vmatpush1.msra.mxu0 %v510
    %2412 = vmatprep.subr.mxu0 %v519
    %2413 = vmatpush1.msra.mxu0 %v518
    %2414 = vmatprep.subr.mxu0 %v527
    %2415 = vmatpush1.msra.mxu0 %v526
    %2416 = vmatprep.subr.mxu0 %v535
    %2417 = vmatpush1.msra.mxu0 %v534
    %2418 = vmatprep.subr.mxu0 %v543
    %2419 = vmatpush1.msra.mxu0 %v542
    %2420 = vmatprep.subr.mxu0 %v551
    %2421 = vmatpush1.msra.mxu0 %v550
    %2422 = vmatprep.subr.mxu0 %v559
    %2423 = vmatpush1.msra.mxu0 %v558
    %2424 = vmatprep.subr.mxu0 %v567
    %2425 = vmatpush1.msra.mxu0 %v566
    %2426 = vmatprep.subr.mxu0 %v575
    %2427 = vmatpush1.msra.mxu0 %v574
    %2428 = vmatprep.subr.mxu0 %v583
    %2429 = vmatpush1.msra.mxu0 %v582
    %2430 = vmatprep.subr.mxu0 %v591
    %2431 = vmatpush1.msra.mxu0 %v590
    %2432 = vmatprep.subr.mxu0 %v599
    %2433 = vmatpush1.msra.mxu0 %v598
    %2434 = vmatprep.subr.mxu0 %v607
    %2435 = vmatpush1.msra.mxu0 %v606
    %2436 = vmatprep.subr.mxu0 %v615
    %2437 = vmatpush1.msra.mxu0 %v614
    %2438 = vmatprep.subr.mxu0 %v623
    %2439 = vmatpush1.msra.mxu0 %v622
    %2440 = vmatprep.subr.mxu0 %v631
    %2441 = vmatpush1.msra.mxu0 %v630
    %2442 = vmatprep.subr.mxu0 %v639
    %2443 = vmatpush1.msra.mxu0 %v638
    %2444 = vmatprep.subr.mxu0 %v647
    %2445 = vmatpush1.msra.mxu0 %v646
    %2446 = vmatprep.subr.mxu0 %v655
    %2447 = vmatpush1.msra.mxu0 %v654
    %2448 = vmatprep.subr.mxu0 %v663
    %2449 = vmatpush1.msra.mxu0 %v662
    %2450 = vmatprep.subr.mxu0 %v671
    %2451 = vmatpush1.msra.mxu0 %v670
    %2452 = vmatprep.subr.mxu0 %v679
    %2453 = vmatpush1.msra.mxu0 %v678
    %2454 = vmatprep.subr.mxu0 %v687
    %2455 = vmatpush1.msra.mxu0 %v686
    %2456 = vmatprep.subr.mxu0 %v695
    %2457 = vmatpush1.msra.mxu0 %v694
    %2458 = vmatprep.subr.mxu0 %v703
    %2459 = vmatpush1.msra.mxu0 %v702
    %2460 = vmatprep.subr.mxu0 %v711
    %2461 = vmatpush1.msra.mxu0 %v710
    %2462 = vmatprep.subr.mxu0 %v719
    %2463 = vmatpush1.msra.mxu0 %v718
    %2464 = vmatprep.subr.mxu0 %v727
    %2465 = vmatpush1.msra.mxu0 %v726
    %2466 = vmatprep.subr.mxu0 %v735
    %2467 = vmatpush1.msra.mxu0 %v734
    %2468 = vmatprep.subr.mxu0 %v743
    %2469 = vmatpush1.msra.mxu0 %v742
    %2470 = vmatprep.mubr.f32.mxu0 %v481
    %2471 = vmatmul.mubr.f32.gmra.mrb[0].mxu0 %v480
    %v2472 = vpop.f32.mrb[0].mxu0
    %v2473 = vadd.f32 %v1541, %v2472
    %v2474 = vpop.f32.mrb[0].mxu0
    %v2475 = vadd.f32 %v1545, %v2474
    %2476 = vdwg.mxu0
    %2477 = vmatprep.subr.mxu0 %v751
    %2478 = vmatpush1.msra.mxu0 %v750
    %2479 = vmatprep.subr.mxu0 %v759
    %2480 = vmatpush1.msra.mxu0 %v758
    %2481 = vmatprep.subr.mxu0 %v767
    %2482 = vmatpush1.msra.mxu0 %v766
    %2483 = vmatprep.subr.mxu0 %v775
    %2484 = vmatpush1.msra.mxu0 %v774
    %2485 = vmatprep.subr.mxu0 %v783
    %2486 = vmatpush1.msra.mxu0 %v782
    %2487 = vmatprep.subr.mxu0 %v791
    %2488 = vmatpush1.msra.mxu0 %v790
    %2489 = vmatprep.subr.mxu0 %v799
    %2490 = vmatpush1.msra.mxu0 %v798
    %2491 = vmatprep.subr.mxu0 %v807
    %2492 = vmatpush1.msra.mxu0 %v806
    %2493 = vmatprep.subr.mxu0 %v815
    %2494 = vmatpush1.msra.mxu0 %v814
    %2495 = vmatprep.subr.mxu0 %v823
    %2496 = vmatpush1.msra.mxu0 %v822
    %2497 = vmatprep.subr.mxu0 %v831
    %2498 = vmatpush1.msra.mxu0 %v830
    %2499 = vmatprep.subr.mxu0 %v839
    %2500 = vmatpush1.msra.mxu0 %v838
    %2501 = vmatprep.subr.mxu0 %v847
    %2502 = vmatpush1.msra.mxu0 %v846
    %2503 = vmatprep.subr.mxu0 %v855
    %2504 = vmatpush1.msra.mxu0 %v854
    %2505 = vmatprep.subr.mxu0 %v863
    %2506 = vmatpush1.msra.mxu0 %v862
    %2507 = vmatprep.subr.mxu0 %v871
    %2508 = vmatpush1.msra.mxu0 %v870
    %2509 = vmatprep.subr.mxu0 %v879
    %2510 = vmatpush1.msra.mxu0 %v878
    %2511 = vmatprep.subr.mxu0 %v887
    %2512 = vmatpush1.msra.mxu0 %v886
    %2513 = vmatprep.subr.mxu0 %v895
    %2514 = vmatpush1.msra.mxu0 %v894
    %2515 = vmatprep.subr.mxu0 %v903
    %2516 = vmatpush1.msra.mxu0 %v902
    %2517 = vmatprep.subr.mxu0 %v911
    %2518 = vmatpush1.msra.mxu0 %v910
    %2519 = vmatprep.subr.mxu0 %v919
    %2520 = vmatpush1.msra.mxu0 %v918
    %2521 = vmatprep.subr.mxu0 %v927
    %2522 = vmatpush1.msra.mxu0 %v926
    %2523 = vmatprep.subr.mxu0 %v935
    %2524 = vmatpush1.msra.mxu0 %v934
    %2525 = vmatprep.subr.mxu0 %v943
    %2526 = vmatpush1.msra.mxu0 %v942
    %2527 = vmatprep.subr.mxu0 %v951
    %2528 = vmatpush1.msra.mxu0 %v950
    %2529 = vmatprep.subr.mxu0 %v959
    %2530 = vmatpush1.msra.mxu0 %v958
    %2531 = vmatprep.subr.mxu0 %v967
    %2532 = vmatpush1.msra.mxu0 %v966
    %2533 = vmatprep.subr.mxu0 %v975
    %2534 = vmatpush1.msra.mxu0 %v974
    %2535 = vmatprep.subr.mxu0 %v983
    %2536 = vmatpush1.msra.mxu0 %v982
    %2537 = vmatprep.subr.mxu0 %v991
    %2538 = vmatpush1.msra.mxu0 %v990
    %2539 = vmatprep.subr.mxu0 %v999
    %2540 = vmatpush1.msra.mxu0 %v998
    %2541 = vmatprep.mubr.f32.mxu0 %v483
    %2542 = vmatmul.mubr.f32.gmra.mrb[0].mxu0 %v482
    %v2543 = vpop.f32.mrb[0].mxu0
    %v2544 = vadd.f32 %v2473, %v2543
    %v2545 = vpop.f32.mrb[0].mxu0
    %v2546 = vadd.f32 %v2475, %v2545
    %2547 = vdwg.mxu0
    %2548 = vmatprep.subr.mxu0 %v1007
    %2549 = vmatpush1.msra.mxu0 %v1006
    %2550 = vmatprep.subr.mxu0 %v1015
    %2551 = vmatpush1.msra.mxu0 %v1014
    %2552 = vmatprep.subr.mxu0 %v1023
    %2553 = vmatpush1.msra.mxu0 %v1022
    %2554 = vmatprep.subr.mxu0 %v1031
    %2555 = vmatpush1.msra.mxu0 %v1030
    %2556 = vmatprep.subr.mxu0 %v1039
    %2557 = vmatpush1.msra.mxu0 %v1038
    %2558 = vmatprep.subr.mxu0 %v1047
    %2559 = vmatpush1.msra.mxu0 %v1046
    %2560 = vmatprep.subr.mxu0 %v1055
    %2561 = vmatpush1.msra.mxu0 %v1054
    %2562 = vmatprep.subr.mxu0 %v1063
    %2563 = vmatpush1.msra.mxu0 %v1062
    %2564 = vmatprep.subr.mxu0 %v1071
    %2565 = vmatpush1.msra.mxu0 %v1070
    %2566 = vmatprep.subr.mxu0 %v1079
    %2567 = vmatpush1.msra.mxu0 %v1078
    %2568 = vmatprep.subr.mxu0 %v1087
    %2569 = vmatpush1.msra.mxu0 %v1086
    %2570 = vmatprep.subr.mxu0 %v1095
    %2571 = vmatpush1.msra.mxu0 %v1094
    %2572 = vmatprep.subr.mxu0 %v1103
    %2573 = vmatpush1.msra.mxu0 %v1102
    %2574 = vmatprep.subr.mxu0 %v1111
    %2575 = vmatpush1.msra.mxu0 %v1110
    %2576 = vmatprep.subr.mxu0 %v1119
    %2577 = vmatpush1.msra.mxu0 %v1118
    %2578 = vmatprep.subr.mxu0 %v1127
    %2579 = vmatpush1.msra.mxu0 %v1126
    %2580 = vmatprep.subr.mxu0 %v1135
    %2581 = vmatpush1.msra.mxu0 %v1134
    %2582 = vmatprep.subr.mxu0 %v1143
    %2583 = vmatpush1.msra.mxu0 %v1142
    %2584 = vmatprep.subr.mxu0 %v1151
    %2585 = vmatpush1.msra.mxu0 %v1150
    %2586 = vmatprep.subr.mxu0 %v1159
    %2587 = vmatpush1.msra.mxu0 %v1158
    %2588 = vmatprep.subr.mxu0 %v1167
    %2589 = vmatpush1.msra.mxu0 %v1166
    %2590 = vmatprep.subr.mxu0 %v1175
    %2591 = vmatpush1.msra.mxu0 %v1174
    %2592 = vmatprep.subr.mxu0 %v1183
    %2593 = vmatpush1.msra.mxu0 %v1182
    %2594 = vmatprep.subr.mxu0 %v1191
    %2595 = vmatpush1.msra.mxu0 %v1190
    %2596 = vmatprep.subr.mxu0 %v1199
    %2597 = vmatpush1.msra.mxu0 %v1198
    %2598 = vmatprep.subr.mxu0 %v1207
    %2599 = vmatpush1.msra.mxu0 %v1206
    %2600 = vmatprep.subr.mxu0 %v1215
    %2601 = vmatpush1.msra.mxu0 %v1214
    %2602 = vmatprep.subr.mxu0 %v1223
    %2603 = vmatpush1.msra.mxu0 %v1222
    %2604 = vmatprep.subr.mxu0 %v1231
    %2605 = vmatpush1.msra.mxu0 %v1230
    %2606 = vmatprep.subr.mxu0 %v1239
    %2607 = vmatpush1.msra.mxu0 %v1238
    %2608 = vmatprep.subr.mxu0 %v1247
    %2609 = vmatpush1.msra.mxu0 %v1246
    %2610 = vmatprep.subr.mxu0 %v1255
    %2611 = vmatpush1.msra.mxu0 %v1254
    %2612 = vmatprep.mubr.f32.mxu0 %v485
    %2613 = vmatmul.mubr.f32.gmra.mrb[0].mxu0 %v484
    %v2614 = vpop.f32.mrb[0].mxu0
    %v2615 = vadd.f32 %v2544, %v2614
    %v2616 = vpop.f32.mrb[0].mxu0
    %v2617 = vadd.f32 %v2546, %v2616
    %2618 = vdwg.mxu0
    %2619 = vmatprep.subr.mxu0 %v1263
    %2620 = vmatpush1.msra.mxu0 %v1262
    %2621 = vmatprep.subr.mxu0 %v1271
    %2622 = vmatpush1.msra.mxu0 %v1270
    %2623 = vmatprep.subr.mxu0 %v1279
    %2624 = vmatpush1.msra.mxu0 %v1278
    %2625 = vmatprep.subr.mxu0 %v1287
    %2626 = vmatpush1.msra.mxu0 %v1286
    %2627 = vmatprep.subr.mxu0 %v1295
    %2628 = vmatpush1.msra.mxu0 %v1294
    %2629 = vmatprep.subr.mxu0 %v1303
    %2630 = vmatpush1.msra.mxu0 %v1302
    %2631 = vmatprep.subr.mxu0 %v1311
    %2632 = vmatpush1.msra.mxu0 %v1310
    %2633 = vmatprep.subr.mxu0 %v1319
    %2634 = vmatpush1.msra.mxu0 %v1318
    %2635 = vmatprep.subr.mxu0 %v1327
    %2636 = vmatpush1.msra.mxu0 %v1326
    %2637 = vmatprep.subr.mxu0 %v1335
    %2638 = vmatpush1.msra.mxu0 %v1334
    %2639 = vmatprep.subr.mxu0 %v1343
    %2640 = vmatpush1.msra.mxu0 %v1342
    %2641 = vmatprep.subr.mxu0 %v1351
    %2642 = vmatpush1.msra.mxu0 %v1350
    %2643 = vmatprep.subr.mxu0 %v1359
    %2644 = vmatpush1.msra.mxu0 %v1358
    %2645 = vmatprep.subr.mxu0 %v1367
    %2646 = vmatpush1.msra.mxu0 %v1366
    %2647 = vmatprep.subr.mxu0 %v1375
    %2648 = vmatpush1.msra.mxu0 %v1374
    %2649 = vmatprep.subr.mxu0 %v1383
    %2650 = vmatpush1.msra.mxu0 %v1382
    %2651 = vmatprep.subr.mxu0 %v1391
    %2652 = vmatpush1.msra.mxu0 %v1390
    %2653 = vmatprep.subr.mxu0 %v1399
    %2654 = vmatpush1.msra.mxu0 %v1398
    %2655 = vmatprep.subr.mxu0 %v1407
    %2656 = vmatpush1.msra.mxu0 %v1406
    %2657 = vmatprep.subr.mxu0 %v1415
    %2658 = vmatpush1.msra.mxu0 %v1414
    %2659 = vmatprep.subr.mxu0 %v1423
    %2660 = vmatpush1.msra.mxu0 %v1422
    %2661 = vmatprep.subr.mxu0 %v1431
    %2662 = vmatpush1.msra.mxu0 %v1430
    %2663 = vmatprep.subr.mxu0 %v1439
    %2664 = vmatpush1.msra.mxu0 %v1438
    %2665 = vmatprep.subr.mxu0 %v1447
    %2666 = vmatpush1.msra.mxu0 %v1446
    %2667 = vmatprep.subr.mxu0 %v1455
    %2668 = vmatpush1.msra.mxu0 %v1454
    %2669 = vmatprep.subr.mxu0 %v1463
    %2670 = vmatpush1.msra.mxu0 %v1462
    %2671 = vmatprep.subr.mxu0 %v1471
    %2672 = vmatpush1.msra.mxu0 %v1470
    %2673 = vmatprep.subr.mxu0 %v1479
    %2674 = vmatpush1.msra.mxu0 %v1478
    %2675 = vmatprep.subr.mxu0 %v1487
    %2676 = vmatpush1.msra.mxu0 %v1486
    %2677 = vmatprep.subr.mxu0 %v1495
    %2678 = vmatpush1.msra.mxu0 %v1494
    %2679 = vmatprep.subr.mxu0 %v1503
    %2680 = vmatpush1.msra.mxu0 %v1502
    %2681 = vmatprep.subr.mxu0 %v1511
    %2682 = vmatpush1.msra.mxu0 %v1510
    %2683 = vmatprep.mubr.f32.mxu0 %v487
    %2684 = vmatmul.mubr.f32.gmra.mrb[0].mxu0 %v486
    %v2685 = vpop.f32.mrb[0].mxu0
    %v2686 = vadd.f32 %v2615, %v2685
    %v2687 = vpop.f32.mrb[0].mxu0
    %v2688 = vadd.f32 %v2617, %v2687
    %2689 = vdwg.mxu0
    %vm2690 = vcmp.gt.f32.partialorder %v1834, 0.0
    %vm2691 = vcmp.gt.f32.partialorder %v1836, 0.0
    %vm2692 = vcmp.gt.f32.partialorder %v2118, 0.0
    %vm2693 = vcmp.gt.f32.partialorder %v2120, 0.0
    %vm2694 = vcmp.gt.f32.partialorder %v2402, 0.0
    %vm2695 = vcmp.gt.f32.partialorder %v2404, 0.0
    %vm2696 = vcmp.gt.f32.partialorder %v2686, 0.0
    %vm2697 = vcmp.gt.f32.partialorder %v2688, 0.0
    %v2698 = vmul.f32 %v1834, 0.01
    %v2699 = vmul.f32 %v1836, 0.01
    %v2700 = vmul.f32 %v2118, 0.01
    %v2701 = vmul.f32 %v2120, 0.01
    %v2702 = vmul.f32 %v2402, 0.01
    %v2703 = vmul.f32 %v2404, 0.01
    %v2704 = vmul.f32 %v2686, 0.01
    %v2705 = vmul.f32 %v2688, 0.01
    %v2706 = vsel %vm2690, %v1834, %v2698
    %v2707 = vsel %vm2691, %v1836, %v2699
    %v2708 = vsel %vm2692, %v2118, %v2700
    %v2709 = vsel %vm2693, %v2120, %v2701
    %v2710 = vsel %vm2694, %v2402, %v2702
    %v2711 = vsel %vm2695, %v2404, %v2703
    %v2712 = vsel %vm2696, %v2686, %v2704
    %v2713 = vsel %vm2697, %v2688, %v2705
    %v2714 = vld [vmem:[%s5] sm:$0xff]
    %v2715 = vld [vmem:[%s5 + $0x8] sm:$0xff]
    %v2716 = vld [vmem:[%s5 + $0x10] sm:$0xff]
    %v2717 = vld [vmem:[%s5 + $0x18] sm:$0xff]
    %v2718 = vld [vmem:[%s5 + $0x20] sm:$0xff]
    %v2719 = vld [vmem:[%s5 + $0x28] sm:$0xff]
    %v2720 = vld [vmem:[%s5 + $0x30] sm:$0xff]
    %v2721 = vld [vmem:[%s5 + $0x38] sm:$0xff]
    %v2722 = vld [vmem:[%s5 + $0x40] sm:$0xff]
    %v2723 = vld [vmem:[%s5 + $0x48] sm:$0xff]
    %v2724 = vld [vmem:[%s5 + $0x50] sm:$0xff]
    %v2725 = vld [vmem:[%s5 + $0x58] sm:$0xff]
    %v2726 = vld [vmem:[%s5 + $0x60] sm:$0xff]
    %v2727 = vld [vmem:[%s5 + $0x68] sm:$0xff]
    %v2728 = vld [vmem:[%s5 + $0x70] sm:$0xff]
    %v2729 = vld [vmem:[%s5 + $0x78] sm:$0xff]
    %v2730 = vld [vmem:[%s5 + $0x80] sm:$0xff]
    %v2731 = vld [vmem:[%s5 + $0x88] sm:$0xff]
    %v2732 = vld [vmem:[%s5 + $0x90] sm:$0xff]
    %v2733 = vld [vmem:[%s5 + $0x98] sm:$0xff]
    %v2734 = vld [vmem:[%s5 + $0xa0] sm:$0xff]
    %v2735 = vld [vmem:[%s5 + $0xa8] sm:$0xff]
    %v2736 = vld [vmem:[%s5 + $0xb0] sm:$0xff]
    %v2737 = vld [vmem:[%s5 + $0xb8] sm:$0xff]
    %v2738 = vld [vmem:[%s5 + $0xc0] sm:$0xff]
    %v2739 = vld [vmem:[%s5 + $0xc8] sm:$0xff]
    %v2740 = vld [vmem:[%s5 + $0xd0] sm:$0xff]
    %v2741 = vld [vmem:[%s5 + $0xd8] sm:$0xff]
    %v2742 = vld [vmem:[%s5 + $0xe0] sm:$0xff]
    %v2743 = vld [vmem:[%s5 + $0xe8] sm:$0xff]
    %v2744 = vld [vmem:[%s5 + $0xf0] sm:$0xff]
    %v2745 = vld [vmem:[%s5 + $0xf8] sm:$0xff]
    %v2746 = vld [vmem:[%s5 + $0x100] sm:$0xff]
    %v2747 = vld [vmem:[%s5 + $0x108] sm:$0xff]
    %v2748 = vld [vmem:[%s5 + $0x110] sm:$0xff]
    %v2749 = vld [vmem:[%s5 + $0x118] sm:$0xff]
    %v2750 = vld [vmem:[%s5 + $0x120] sm:$0xff]
    %v2751 = vld [vmem:[%s5 + $0x128] sm:$0xff]
    %v2752 = vld [vmem:[%s5 + $0x130] sm:$0xff]
    %v2753 = vld [vmem:[%s5 + $0x138] sm:$0xff]
    %v2754 = vld [vmem:[%s5 + $0x140] sm:$0xff]
    %v2755 = vld [vmem:[%s5 + $0x148] sm:$0xff]
    %v2756 = vld [vmem:[%s5 + $0x150] sm:$0xff]
    %v2757 = vld [vmem:[%s5 + $0x158] sm:$0xff]
    %v2758 = vld [vmem:[%s5 + $0x160] sm:$0xff]
    %v2759 = vld [vmem:[%s5 + $0x168] sm:$0xff]
    %v2760 = vld [vmem:[%s5 + $0x170] sm:$0xff]
    %v2761 = vld [vmem:[%s5 + $0x178] sm:$0xff]
    %v2762 = vld [vmem:[%s5 + $0x180] sm:$0xff]
    %v2763 = vld [vmem:[%s5 + $0x188] sm:$0xff]
    %v2764 = vld [vmem:[%s5 + $0x190] sm:$0xff]
    %v2765 = vld [vmem:[%s5 + $0x198] sm:$0xff]
    %v2766 = vld [vmem:[%s5 + $0x1a0] sm:$0xff]
    %v2767 = vld [vmem:[%s5 + $0x1a8] sm:$0xff]
    %v2768 = vld [vmem:[%s5 + $0x1b0] sm:$0xff]
    %v2769 = vld [vmem:[%s5 + $0x1b8] sm:$0xff]
    %v2770 = vld [vmem:[%s5 + $0x1c0] sm:$0xff]
    %v2771 = vld [vmem:[%s5 + $0x1c8] sm:$0xff]
    %v2772 = vld [vmem:[%s5 + $0x1d0] sm:$0xff]
    %v2773 = vld [vmem:[%s5 + $0x1d8] sm:$0xff]
    %v2774 = vld [vmem:[%s5 + $0x1e0] sm:$0xff]
    %v2775 = vld [vmem:[%s5 + $0x1e8] sm:$0xff]
    %v2776 = vld [vmem:[%s5 + $0x1f0] sm:$0xff]
    %v2777 = vld [vmem:[%s5 + $0x1f8] sm:$0xff]
    %v2778 = vld [vmem:[%s5 + $0x200] sm:$0xff]
    %v2779 = vld [vmem:[%s5 + $0x208] sm:$0xff]
    %v2780 = vld [vmem:[%s5 + $0x210] sm:$0xff]
    %v2781 = vld [vmem:[%s5 + $0x218] sm:$0xff]
    %v2782 = vld [vmem:[%s5 + $0x220] sm:$0xff]
    %v2783 = vld [vmem:[%s5 + $0x228] sm:$0xff]
    %v2784 = vld [vmem:[%s5 + $0x230] sm:$0xff]
    %v2785 = vld [vmem:[%s5 + $0x238] sm:$0xff]
    %v2786 = vld [vmem:[%s5 + $0x240] sm:$0xff]
    %v2787 = vld [vmem:[%s5 + $0x248] sm:$0xff]
    %v2788 = vld [vmem:[%s5 + $0x250] sm:$0xff]
    %v2789 = vld [vmem:[%s5 + $0x258] sm:$0xff]
    %v2790 = vld [vmem:[%s5 + $0x260] sm:$0xff]
    %v2791 = vld [vmem:[%s5 + $0x268] sm:$0xff]
    %v2792 = vld [vmem:[%s5 + $0x270] sm:$0xff]
    %v2793 = vld [vmem:[%s5 + $0x278] sm:$0xff]
    %v2794 = vld [vmem:[%s5 + $0x280] sm:$0xff]
    %v2795 = vld [vmem:[%s5 + $0x288] sm:$0xff]
    %v2796 = vld [vmem:[%s5 + $0x290] sm:$0xff]
    %v2797 = vld [vmem:[%s5 + $0x298] sm:$0xff]
    %v2798 = vld [vmem:[%s5 + $0x2a0] sm:$0xff]
    %v2799 = vld [vmem:[%s5 + $0x2a8] sm:$0xff]
    %v2800 = vld [vmem:[%s5 + $0x2b0] sm:$0xff]
    %v2801 = vld [vmem:[%s5 + $0x2b8] sm:$0xff]
    %v2802 = vld [vmem:[%s5 + $0x2c0] sm:$0xff]
    %v2803 = vld [vmem:[%s5 + $0x2c8] sm:$0xff]
    %v2804 = vld [vmem:[%s5 + $0x2d0] sm:$0xff]
    %v2805 = vld [vmem:[%s5 + $0x2d8] sm:$0xff]
    %v2806 = vld [vmem:[%s5 + $0x2e0] sm:$0xff]
    %v2807 = vld [vmem:[%s5 + $0x2e8] sm:$0xff]
    %v2808 = vld [vmem:[%s5 + $0x2f0] sm:$0xff]
    %v2809 = vld [vmem:[%s5 + $0x2f8] sm:$0xff]
    %v2810 = vld [vmem:[%s5 + $0x300] sm:$0xff]
    %v2811 = vld [vmem:[%s5 + $0x308] sm:$0xff]
    %v2812 = vld [vmem:[%s5 + $0x310] sm:$0xff]
    %v2813 = vld [vmem:[%s5 + $0x318] sm:$0xff]
    %v2814 = vld [vmem:[%s5 + $0x320] sm:$0xff]
    %v2815 = vld [vmem:[%s5 + $0x328] sm:$0xff]
    %v2816 = vld [vmem:[%s5 + $0x330] sm:$0xff]
    %v2817 = vld [vmem:[%s5 + $0x338] sm:$0xff]
    %v2818 = vld [vmem:[%s5 + $0x340] sm:$0xff]
    %v2819 = vld [vmem:[%s5 + $0x348] sm:$0xff]
    %v2820 = vld [vmem:[%s5 + $0x350] sm:$0xff]
    %v2821 = vld [vmem:[%s5 + $0x358] sm:$0xff]
    %v2822 = vld [vmem:[%s5 + $0x360] sm:$0xff]
    %v2823 = vld [vmem:[%s5 + $0x368] sm:$0xff]
    %v2824 = vld [vmem:[%s5 + $0x370] sm:$0xff]
    %v2825 = vld [vmem:[%s5 + $0x378] sm:$0xff]
    %v2826 = vld [vmem:[%s5 + $0x380] sm:$0xff]
    %v2827 = vld [vmem:[%s5 + $0x388] sm:$0xff]
    %v2828 = vld [vmem:[%s5 + $0x390] sm:$0xff]
    %v2829 = vld [vmem:[%s5 + $0x398] sm:$0xff]
    %v2830 = vld [vmem:[%s5 + $0x3a0] sm:$0xff]
    %v2831 = vld [vmem:[%s5 + $0x3a8] sm:$0xff]
    %v2832 = vld [vmem:[%s5 + $0x3b0] sm:$0xff]
    %v2833 = vld [vmem:[%s5 + $0x3b8] sm:$0xff]
    %v2834 = vld [vmem:[%s5 + $0x3c0] sm:$0xff]
    %v2835 = vld [vmem:[%s5 + $0x3c8] sm:$0xff]
    %v2836 = vld [vmem:[%s5 + $0x3d0] sm:$0xff]
    %v2837 = vld [vmem:[%s5 + $0x3d8] sm:$0xff]
    %v2838 = vld [vmem:[%s5 + $0x3e0] sm:$0xff]
    %v2839 = vld [vmem:[%s5 + $0x3e8] sm:$0xff]
    %v2840 = vld [vmem:[%s5 + $0x3f0] sm:$0xff]
    %v2841 = vld [vmem:[%s5 + $0x3f8] sm:$0xff]
    %v2842 = vld [vmem:[#allocation11] sm:$0x1]
    %v2844 = vlaneseq
    %v2845 = vshrl.u32 %v2844, 7
    %v2846 = vsub.s32 0, %v2845
    %v2847 = vrot.slane %v2842, %v2846
    %2849 = vmatprep.subr.mxu0 0.0
    %2850 = vmatpush1.msra.mxu0 %v2714
    %2851 = vmatprep.subr.mxu0 0.0
    %2852 = vmatpush1.msra.mxu0 %v2715
    %2853 = vmatprep.subr.mxu0 0.0
    %2854 = vmatpush1.msra.mxu0 %v2716
    %2855 = vmatprep.subr.mxu0 0.0
    %2856 = vmatpush1.msra.mxu0 %v2717
    %2857 = vmatprep.subr.mxu0 0.0
    %2858 = vmatpush1.msra.mxu0 %v2718
    %2859 = vmatprep.subr.mxu0 0.0
    %2860 = vmatpush1.msra.mxu0 %v2719
    %2861 = vmatprep.subr.mxu0 0.0
    %2862 = vmatpush1.msra.mxu0 %v2720
    %2863 = vmatprep.subr.mxu0 0.0
    %2864 = vmatpush1.msra.mxu0 %v2721
    %2865 = vmatprep.subr.mxu0 0.0
    %2866 = vmatpush1.msra.mxu0 %v2722
    %2867 = vmatprep.subr.mxu0 0.0
    %2868 = vmatpush1.msra.mxu0 %v2723
    %2869 = vmatprep.subr.mxu0 0.0
    %2870 = vmatpush1.msra.mxu0 %v2724
    %2871 = vmatprep.subr.mxu0 0.0
    %2872 = vmatpush1.msra.mxu0 %v2725
    %2873 = vmatprep.subr.mxu0 0.0
    %2874 = vmatpush1.msra.mxu0 %v2726
    %2875 = vmatprep.subr.mxu0 0.0
    %2876 = vmatpush1.msra.mxu0 %v2727
    %2877 = vmatprep.subr.mxu0 0.0
    %2878 = vmatpush1.msra.mxu0 %v2728
    %2879 = vmatprep.subr.mxu0 0.0
    %2880 = vmatpush1.msra.mxu0 %v2729
    %2881 = vmatprep.subr.mxu0 0.0
    %2882 = vmatpush1.msra.mxu0 %v2730
    %2883 = vmatprep.subr.mxu0 0.0
    %2884 = vmatpush1.msra.mxu0 %v2731
    %2885 = vmatprep.subr.mxu0 0.0
    %2886 = vmatpush1.msra.mxu0 %v2732
    %2887 = vmatprep.subr.mxu0 0.0
    %2888 = vmatpush1.msra.mxu0 %v2733
    %2889 = vmatprep.subr.mxu0 0.0
    %2890 = vmatpush1.msra.mxu0 %v2734
    %2891 = vmatprep.subr.mxu0 0.0
    %2892 = vmatpush1.msra.mxu0 %v2735
    %2893 = vmatprep.subr.mxu0 0.0
    %2894 = vmatpush1.msra.mxu0 %v2736
    %2895 = vmatprep.subr.mxu0 0.0
    %2896 = vmatpush1.msra.mxu0 %v2737
    %2897 = vmatprep.subr.mxu0 0.0
    %2898 = vmatpush1.msra.mxu0 %v2738
    %2899 = vmatprep.subr.mxu0 0.0
    %2900 = vmatpush1.msra.mxu0 %v2739
    %2901 = vmatprep.subr.mxu0 0.0
    %2902 = vmatpush1.msra.mxu0 %v2740
    %2903 = vmatprep.subr.mxu0 0.0
    %2904 = vmatpush1.msra.mxu0 %v2741
    %2905 = vmatprep.subr.mxu0 0.0
    %2906 = vmatpush1.msra.mxu0 %v2742
    %2907 = vmatprep.subr.mxu0 0.0
    %2908 = vmatpush1.msra.mxu0 %v2743
    %2909 = vmatprep.subr.mxu0 0.0
    %2910 = vmatpush1.msra.mxu0 %v2744
    %2911 = vmatprep.subr.mxu0 0.0
    %2912 = vmatpush1.msra.mxu0 %v2745
    %2913 = vmatprep.mubr.f32.mxu0 %v2707
    %2914 = vmatmul.mubr.f32.gmra.mrb[0].mxu0 %v2706
    %v2915 = vpop.f32.mrb[0].mxu0
    %v2916 = vadd.f32 %v2847, %v2915
    %v2917 = vpop.f32.mrb[0].mxu0
    %2918 = vdwg.mxu0
    %2919 = vmatprep.subr.mxu0 0.0
    %2920 = vmatpush1.msra.mxu0 %v2746
    %2921 = vmatprep.subr.mxu0 0.0
    %2922 = vmatpush1.msra.mxu0 %v2747
    %2923 = vmatprep.subr.mxu0 0.0
    %2924 = vmatpush1.msra.mxu0 %v2748
    %2925 = vmatprep.subr.mxu0 0.0
    %2926 = vmatpush1.msra.mxu0 %v2749
    %2927 = vmatprep.subr.mxu0 0.0
    %2928 = vmatpush1.msra.mxu0 %v2750
    %2929 = vmatprep.subr.mxu0 0.0
    %2930 = vmatpush1.msra.mxu0 %v2751
    %2931 = vmatprep.subr.mxu0 0.0
    %2932 = vmatpush1.msra.mxu0 %v2752
    %2933 = vmatprep.subr.mxu0 0.0
    %2934 = vmatpush1.msra.mxu0 %v2753
    %2935 = vmatprep.subr.mxu0 0.0
    %2936 = vmatpush1.msra.mxu0 %v2754
    %2937 = vmatprep.subr.mxu0 0.0
    %2938 = vmatpush1.msra.mxu0 %v2755
    %2939 = vmatprep.subr.mxu0 0.0
    %2940 = vmatpush1.msra.mxu0 %v2756
    %2941 = vmatprep.subr.mxu0 0.0
    %2942 = vmatpush1.msra.mxu0 %v2757
    %2943 = vmatprep.subr.mxu0 0.0
    %2944 = vmatpush1.msra.mxu0 %v2758
    %2945 = vmatprep.subr.mxu0 0.0
    %2946 = vmatpush1.msra.mxu0 %v2759
    %2947 = vmatprep.subr.mxu0 0.0
    %2948 = vmatpush1.msra.mxu0 %v2760
    %2949 = vmatprep.subr.mxu0 0.0
    %2950 = vmatpush1.msra.mxu0 %v2761
    %2951 = vmatprep.subr.mxu0 0.0
    %2952 = vmatpush1.msra.mxu0 %v2762
    %2953 = vmatprep.subr.mxu0 0.0
    %2954 = vmatpush1.msra.mxu0 %v2763
    %2955 = vmatprep.subr.mxu0 0.0
    %2956 = vmatpush1.msra.mxu0 %v2764
    %2957 = vmatprep.subr.mxu0 0.0
    %2958 = vmatpush1.msra.mxu0 %v2765
    %2959 = vmatprep.subr.mxu0 0.0
    %2960 = vmatpush1.msra.mxu0 %v2766
    %2961 = vmatprep.subr.mxu0 0.0
    %2962 = vmatpush1.msra.mxu0 %v2767
    %2963 = vmatprep.subr.mxu0 0.0
    %2964 = vmatpush1.msra.mxu0 %v2768
    %2965 = vmatprep.subr.mxu0 0.0
    %2966 = vmatpush1.msra.mxu0 %v2769
    %2967 = vmatprep.subr.mxu0 0.0
    %2968 = vmatpush1.msra.mxu0 %v2770
    %2969 = vmatprep.subr.mxu0 0.0
    %2970 = vmatpush1.msra.mxu0 %v2771
    %2971 = vmatprep.subr.mxu0 0.0
    %2972 = vmatpush1.msra.mxu0 %v2772
    %2973 = vmatprep.subr.mxu0 0.0
    %2974 = vmatpush1.msra.mxu0 %v2773
    %2975 = vmatprep.subr.mxu0 0.0
    %2976 = vmatpush1.msra.mxu0 %v2774
    %2977 = vmatprep.subr.mxu0 0.0
    %2978 = vmatpush1.msra.mxu0 %v2775
    %2979 = vmatprep.subr.mxu0 0.0
    %2980 = vmatpush1.msra.mxu0 %v2776
    %2981 = vmatprep.subr.mxu0 0.0
    %2982 = vmatpush1.msra.mxu0 %v2777
    %2983 = vmatprep.mubr.f32.mxu0 %v2709
    %2984 = vmatmul.mubr.f32.gmra.mrb[0].mxu0 %v2708
    %v2985 = vpop.f32.mrb[0].mxu0
    %v2986 = vadd.f32 %v2916, %v2985
    %v2987 = vpop.f32.mrb[0].mxu0
    %2988 = vdwg.mxu0
    %2989 = vmatprep.subr.mxu0 0.0
    %2990 = vmatpush1.msra.mxu0 %v2778
    %2991 = vmatprep.subr.mxu0 0.0
    %2992 = vmatpush1.msra.mxu0 %v2779
    %2993 = vmatprep.subr.mxu0 0.0
    %2994 = vmatpush1.msra.mxu0 %v2780
    %2995 = vmatprep.subr.mxu0 0.0
    %2996 = vmatpush1.msra.mxu0 %v2781
    %2997 = vmatprep.subr.mxu0 0.0
    %2998 = vmatpush1.msra.mxu0 %v2782
    %2999 = vmatprep.subr.mxu0 0.0
    %3000 = vmatpush1.msra.mxu0 %v2783
    %3001 = vmatprep.subr.mxu0 0.0
    %3002 = vmatpush1.msra.mxu0 %v2784
    %3003 = vmatprep.subr.mxu0 0.0
    %3004 = vmatpush1.msra.mxu0 %v2785
    %3005 = vmatprep.subr.mxu0 0.0
    %3006 = vmatpush1.msra.mxu0 %v2786
    %3007 = vmatprep.subr.mxu0 0.0
    %3008 = vmatpush1.msra.mxu0 %v2787
    %3009 = vmatprep.subr.mxu0 0.0
    %3010 = vmatpush1.msra.mxu0 %v2788
    %3011 = vmatprep.subr.mxu0 0.0
    %3012 = vmatpush1.msra.mxu0 %v2789
    %3013 = vmatprep.subr.mxu0 0.0
    %3014 = vmatpush1.msra.mxu0 %v2790
    %3015 = vmatprep.subr.mxu0 0.0
    %3016 = vmatpush1.msra.mxu0 %v2791
    %3017 = vmatprep.subr.mxu0 0.0
    %3018 = vmatpush1.msra.mxu0 %v2792
    %3019 = vmatprep.subr.mxu0 0.0
    %3020 = vmatpush1.msra.mxu0 %v2793
    %3021 = vmatprep.subr.mxu0 0.0
    %3022 = vmatpush1.msra.mxu0 %v2794
    %3023 = vmatprep.subr.mxu0 0.0
    %3024 = vmatpush1.msra.mxu0 %v2795
    %3025 = vmatprep.subr.mxu0 0.0
    %3026 = vmatpush1.msra.mxu0 %v2796
    %3027 = vmatprep.subr.mxu0 0.0
    %3028 = vmatpush1.msra.mxu0 %v2797
    %3029 = vmatprep.subr.mxu0 0.0
    %3030 = vmatpush1.msra.mxu0 %v2798
    %3031 = vmatprep.subr.mxu0 0.0
    %3032 = vmatpush1.msra.mxu0 %v2799
    %3033 = vmatprep.subr.mxu0 0.0
    %3034 = vmatpush1.msra.mxu0 %v2800
    %3035 = vmatprep.subr.mxu0 0.0
    %3036 = vmatpush1.msra.mxu0 %v2801
    %3037 = vmatprep.subr.mxu0 0.0
    %3038 = vmatpush1.msra.mxu0 %v2802
    %3039 = vmatprep.subr.mxu0 0.0
    %3040 = vmatpush1.msra.mxu0 %v2803
    %3041 = vmatprep.subr.mxu0 0.0
    %3042 = vmatpush1.msra.mxu0 %v2804
    %3043 = vmatprep.subr.mxu0 0.0
    %3044 = vmatpush1.msra.mxu0 %v2805
    %3045 = vmatprep.subr.mxu0 0.0
    %3046 = vmatpush1.msra.mxu0 %v2806
    %3047 = vmatprep.subr.mxu0 0.0
    %3048 = vmatpush1.msra.mxu0 %v2807
    %3049 = vmatprep.subr.mxu0 0.0
    %3050 = vmatpush1.msra.mxu0 %v2808
    %3051 = vmatprep.subr.mxu0 0.0
    %3052 = vmatpush1.msra.mxu0 %v2809
    %3053 = vmatprep.mubr.f32.mxu0 %v2711
    %3054 = vmatmul.mubr.f32.gmra.mrb[0].mxu0 %v2710
    %v3055 = vpop.f32.mrb[0].mxu0
    %v3056 = vadd.f32 %v2986, %v3055
    %v3057 = vpop.f32.mrb[0].mxu0
    %3058 = vdwg.mxu0
    %3059 = vmatprep.subr.mxu0 0.0
    %3060 = vmatpush1.msra.mxu0 %v2810
    %3061 = vmatprep.subr.mxu0 0.0
    %3062 = vmatpush1.msra.mxu0 %v2811
    %3063 = vmatprep.subr.mxu0 0.0
    %3064 = vmatpush1.msra.mxu0 %v2812
    %3065 = vmatprep.subr.mxu0 0.0
    %3066 = vmatpush1.msra.mxu0 %v2813
    %3067 = vmatprep.subr.mxu0 0.0
    %3068 = vmatpush1.msra.mxu0 %v2814
    %3069 = vmatprep.subr.mxu0 0.0
    %3070 = vmatpush1.msra.mxu0 %v2815
    %3071 = vmatprep.subr.mxu0 0.0
    %3072 = vmatpush1.msra.mxu0 %v2816
    %3073 = vmatprep.subr.mxu0 0.0
    %3074 = vmatpush1.msra.mxu0 %v2817
    %3075 = vmatprep.subr.mxu0 0.0
    %3076 = vmatpush1.msra.mxu0 %v2818
    %3077 = vmatprep.subr.mxu0 0.0
    %3078 = vmatpush1.msra.mxu0 %v2819
    %3079 = vmatprep.subr.mxu0 0.0
    %3080 = vmatpush1.msra.mxu0 %v2820
    %3081 = vmatprep.subr.mxu0 0.0
    %3082 = vmatpush1.msra.mxu0 %v2821
    %3083 = vmatprep.subr.mxu0 0.0
    %3084 = vmatpush1.msra.mxu0 %v2822
    %3085 = vmatprep.subr.mxu0 0.0
    %3086 = vmatpush1.msra.mxu0 %v2823
    %3087 = vmatprep.subr.mxu0 0.0
    %3088 = vmatpush1.msra.mxu0 %v2824
    %3089 = vmatprep.subr.mxu0 0.0
    %3090 = vmatpush1.msra.mxu0 %v2825
    %3091 = vmatprep.subr.mxu0 0.0
    %3092 = vmatpush1.msra.mxu0 %v2826
    %3093 = vmatprep.subr.mxu0 0.0
    %3094 = vmatpush1.msra.mxu0 %v2827
    %3095 = vmatprep.subr.mxu0 0.0
    %3096 = vmatpush1.msra.mxu0 %v2828
    %3097 = vmatprep.subr.mxu0 0.0
    %3098 = vmatpush1.msra.mxu0 %v2829
    %3099 = vmatprep.subr.mxu0 0.0
    %3100 = vmatpush1.msra.mxu0 %v2830
    %3101 = vmatprep.subr.mxu0 0.0
    %3102 = vmatpush1.msra.mxu0 %v2831
    %3103 = vmatprep.subr.mxu0 0.0
    %3104 = vmatpush1.msra.mxu0 %v2832
    %3105 = vmatprep.subr.mxu0 0.0
    %3106 = vmatpush1.msra.mxu0 %v2833
    %3107 = vmatprep.subr.mxu0 0.0
    %3108 = vmatpush1.msra.mxu0 %v2834
    %3109 = vmatprep.subr.mxu0 0.0
    %3110 = vmatpush1.msra.mxu0 %v2835
    %3111 = vmatprep.subr.mxu0 0.0
    %3112 = vmatpush1.msra.mxu0 %v2836
    %3113 = vmatprep.subr.mxu0 0.0
    %3114 = vmatpush1.msra.mxu0 %v2837
    %3115 = vmatprep.subr.mxu0 0.0
    %3116 = vmatpush1.msra.mxu0 %v2838
    %3117 = vmatprep.subr.mxu0 0.0
    %3118 = vmatpush1.msra.mxu0 %v2839
    %3119 = vmatprep.subr.mxu0 0.0
    %3120 = vmatpush1.msra.mxu0 %v2840
    %3121 = vmatprep.subr.mxu0 0.0
    %3122 = vmatpush1.msra.mxu0 %v2841
    %3123 = vmatprep.mubr.f32.mxu0 %v2713
    %3124 = vmatmul.mubr.f32.gmra.mrb[0].mxu0 %v2712
    %v3125 = vpop.f32.mrb[0].mxu0
    %v3126 = vadd.f32 %v3056, %v3125
    %v3127 = vpop.f32.mrb[0].mxu0
    %3128 = vdwg.mxu0
    %vm3129 = vcmask 130048
    %3130 = vst.msk [vmem:[#allocation13] sm:$0xff] %vm3129, %v3126
    // Predicated region
    $region54: #{tpu_custom_call.1} parent=1 // pred_check
      _
    $region55: #{tpu_custom_call.1} parent=1 // pred_check_branch
      %3132 = sbr.rel (0) target = $region57
    $region56: #{tpu_custom_call.1} parent=1 // pred_region
      %s3134 = ssub.s32 128, 128
      %3135 = vsyncadd [#allocation4], %s3134
      %s3137 = sshll.u32 [#allocation13], 4
      %s3138 = int_to_ptr.vmem [resolvable:$true] %s3137
      %3140 = dma.vmem_to_hbm [thread:$0]  %s3138, 128, %s7, [#allocation4]
    $region57: #{tpu_custom_call.1} parent=1 // pred_fallthru
      _
    // Predicated region
    $region58: #{tpu_custom_call.1} parent=1 // pred_check
      _
    $region59: #{tpu_custom_call.1} parent=1 // pred_check_branch
      %3142 = sbr.rel (0) target = $region61
    $region60: #{tpu_custom_call.1} parent=1 // pred_region
      %3143 = dma.done [#allocation4], 128
    $region61: #{tpu_custom_call.1} parent=1 // pred_fallthru
      _
    %3144 = vsyncpa [#allocation3], 1
    %3145 = vsyncpa [#allocation6], 1
    %3146 = vsyncpa [#allocation9], 1
    %3147 = vsyncpa [#allocation12], 1
    %3148 = vsyncpa [#allocation4], 1

</llo_original>
